<compile_context>
chip_gen: v5e
topology: v5e:2x2
jax: 0.10.0
libtpu: 0.0.40
codegen_flags: <defaults>
</compile_context>

<pallas_src>
import jax
import jax.numpy as jnp
from jax.experimental import pallas as pl
from jax.experimental.pallas import tpu as pltpu


# ----------------------------- Pallas kernel ------------------------------- #

_K_CHUNK = 16           # candidates per in-kernel chunk (bounds the f32 temp)
_MIN_GRID_STEPS = 4     # so v7x's two TensorCores each get pipelined steps


def _vmem_budget():
    """Generation-aware (vmem_limit_bytes, block_budget_bytes)."""
    cap = 64 * 1024 * 1024                      # conservative: v7x = 64 MiB / TC
    try:
        cap = int(pltpu.get_tpu_info().vmem_capacity_bytes)
    except Exception:
        pass
    cap = max(cap, 32 * 1024 * 1024)
    limit = max(32 * 1024 * 1024,
                min((cap * 3) // 4, 96 * 1024 * 1024))   # 128MiB->96MiB, 64MiB->48MiB
    return limit, limit - 8 * 1024 * 1024                # headroom for Mosaic scratch


def _padded_block_bytes(shape, dtype):
    """VMEM bytes of a block after (sublane, lane) padding of the minor 2 dims."""
    item = jnp.dtype(dtype).itemsize
    dims = list(shape)
    dims[-1] = -(-dims[-1] // 128) * 128                 # lanes -> 128
    if len(dims) >= 2:
        sub = 8 * (4 // item)                            # f32: 8, bf16: 16 sublanes
        dims[-2] = -(-dims[-2] // sub) * sub
    n = 1
    for d in dims:
        n *= d
    return n * item


def _pick_tile_q(n_bh, q, k_cand, d):
    """Queries per grid step.

    Uses padded VMEM block sizes (qp + kp + out, x2 double-buffer, + in-kernel
    f32 temporaries) against a generation-aware budget, keeps the output lane
    dim a multiple of 128 (or the full padded extent when Q < 128), and keeps
    >= _MIN_GRID_STEPS total grid steps when the problem is large enough.
    """
    limit, budget = _vmem_budget()
    if q < 128:
        return -(-q // 8) * 8, limit                     # one step along queries
    cap = -(-q // 128) * 128
    tile = 128
    for t in (1024, 512, 256, 128):
        if t > cap:
            continue
        kc = min(k_cand, _K_CHUNK)
        qp_b = _padded_block_bytes((t, d), jnp.bfloat16)
        kp_b = _padded_block_bytes((k_cand, t, d), jnp.bfloat16)
        out_b = _padded_block_bytes((k_cand, t), jnp.float32)
        tmp_b = 3 * _padded_block_bytes((kc, t, d), jnp.float32)
        if 2 * (qp_b + kp_b + out_b) + tmp_b <= budget:
            tile = t
            break
    while tile > 128 and n_bh * pl.cdiv(q, tile) < _MIN_GRID_STEPS:
        tile //= 2
    return tile, limit


def _patch_prod_kernel(qp_ref, kp_ref, o_ref):
    """qp_ref: (TQ, D) bf16; kp_ref: (K, TQ, D) bf16; o_ref: (K, TQ) f32.

    o[k, q] = sum_d qp[q, d] * kp[k, q, d].
    VPU multiply + XLU lane-reduce over D (the MXU would run at M=1 per row
    here; the kernel is HBM-bound either way).  Chunked over K so the f32
    temporary stays a few MB.
    """
    q = qp_ref[...].astype(jnp.float32)                  # (TQ, D)
    k_tot = kp_ref.shape[0]
    for c0 in range(0, k_tot, _K_CHUNK):
        kc = min(_K_CHUNK, k_tot - c0)
        kv = kp_ref[c0:c0 + kc, :, :].astype(jnp.float32)          # (kc, TQ, D)
        o_ref[c0:c0 + kc, :] = jnp.sum(kv * q[None, :, :], axis=-1)


def patch_prod(qp, kp, tile_q, vmem_limit):
    """qp: (BH, Qp, D), kp: (BH, K, Qp, D) -> (BH, K, Qp) f32 patch products."""
    qp = qp.astype(jnp.bfloat16)
    kp = kp.astype(jnp.bfloat16)
    bh, qp_len, d = qp.shape
    k_cand = kp.shape[1]
    assert qp_len % tile_q == 0, (qp_len, tile_q)
    flops = int(2 * bh * k_cand * qp_len * d)
    bytes_accessed = int(qp.size * 2 + kp.size * 2 + bh * k_cand * qp_len * 4)
    return pl.pallas_call(
        _patch_prod_kernel,
        out_shape=jax.ShapeDtypeStruct((bh, k_cand, qp_len), jnp.float32),
        grid_spec=pltpu.PrefetchScalarGridSpec(
            num_scalar_prefetch=0,
            grid=(bh, qp_len // tile_q),
            in_specs=[
                pl.BlockSpec((None, tile_q, d), lambda b, i: (b, i, 0)),
                pl.BlockSpec((None, k_cand, tile_q, d), lambda b, i: (b, 0, i, 0)),
            ],
            out_specs=pl.BlockSpec((None, k_cand, tile_q), lambda b, i: (b, 0, i)),
        ),
        compiler_params=pltpu.CompilerParams(
            dimension_semantics=("parallel", "parallel"),
            vmem_limit_bytes=int(vmem_limit),
        ),
        cost_estimate=pl.CostEstimate(
            flops=flops, transcendentals=0, bytes_accessed=bytes_accessed),
    )(qp, kp)


# ------------------------------- JAX glue ----------------------------------- #

def _reflect(i, n):
    """Reflect-bounds index (single reflection is enough for our ranges)."""
    i = jnp.abs(i)
    return jnp.where(i >= n, 2 * (n - 1) - i, i)


def _gather_patches(vid_pad, tt, hh, ww, ps, pad, per_batch=False):
    """vid_pad: (NB, T, C, Hp, Wp) reflect-padded video.
    tt/hh/ww: integer arrays of identical shape S (frame index, UNpadded h/w
    patch centers).  Returns patches of shape (NB, *S, ps, ps, C)."""
    off = jnp.arange(ps) - ps // 2
    hh_p = hh[..., None, None] + off[:, None] + pad
    ww_p = ww[..., None, None] + off[None, :] + pad
    hh_p, ww_p = jnp.broadcast_arrays(hh_p, ww_p)          # (*S, ps, ps)
    tt_b = jnp.broadcast_to(tt[..., None, None], hh_p.shape)

    def one(v, t_, h_, w_):                                # v: (T, C, Hp, Wp)
        return v[t_, :, h_, w_]                            # -> (*S, ps, ps, C)

    if per_batch:
        return jax.vmap(one)(vid_pad, tt_b, hh_p, ww_p)
    return jax.vmap(one, in_axes=(0, None, None, None))(vid_pad, tt_b, hh_p, ww_p)


def _head_split_video(vid_pad, nheads):
    """(B, T, C, Hp, Wp) -> (B*nheads, T, C//nheads, Hp, Wp), heads split from C."""
    B, T, C, Hp, Wp = vid_pad.shape
    v = vid_pad.reshape(B, T, nheads, C // nheads, Hp, Wp)
    v = jnp.moveaxis(v, 2, 1)
    return v.reshape(B * nheads, T, C // nheads, Hp, Wp)


class NLSApproxSpace:
    """JAX/Pallas re-implementation of lib/nlnet/search/nlas.py::NLSApproxSpace.
    The stnls searches are parameter-free, so there are no weights to init."""

    def __init__(self, k=7, ps=7, ws_r=1, ws=8, wt=1, nheads=1,
                 stride0_a=8, stride0=4, stride1=1):
        assert stride0_a % stride0 == 0, "Must be an integer multiple."
        self.k, self.ps, self.ws, self.ws_r, self.wt = k, ps, ws, ws_r, wt
        self.nheads = nheads
        self.stride0_a, self.stride0, self.stride1 = stride0_a, stride0, stride1
        self.scale = stride0_a // stride0

    # ---- exact 'prod_with_heads' search on the coarse (stride0_a) grid ---- #
    def _exact_search(self, vid0, vid1):
        B, T, C, H, W = vid0.shape
        nheads, ps, ws, wt, k = self.nheads, self.ps, self.ws, self.wt, self.k
        st0 = self.stride0_a
        assert C % nheads == 0
        cph = C // nheads
        pad = ws // 2 + ps // 2 + 1
        # Single-bounce reflection in _reflect is only valid while the window +
        # patch stay within one mirror period; this assert ties them together.
        assert pad <= H - 1 and pad <= W - 1, "video too small for reflect pad"
        pw = ((0, 0), (0, 0), (0, 0), (pad, pad), (pad, pad))
        v0p = jnp.pad(vid0.astype(jnp.bfloat16), pw, mode="reflect")
        v1p = jnp.pad(vid1.astype(jnp.bfloat16), pw, mode="reflect")
        v0h = _head_split_video(v0p, nheads)          # (B*nheads, T, cph, Hp, Wp)
        v1h = _head_split_video(v1p, nheads)

        nH = (H - 1) // st0 + 1
        nW = (W - 1) // st0 + 1
        Q = T * nH * nW
        tq = jnp.broadcast_to(jnp.arange(T)[:, None, None], (T, nH, nW)).reshape(-1)
        qh = jnp.broadcast_to((jnp.arange(nH) * st0)[None, :, None],
                              (T, nH, nW)).reshape(-1)
        qw = jnp.broadcast_to((jnp.arange(nW) * st0)[None, None, :],
                              (T, nH, nW)).reshape(-1)

        # candidate set: (2*wt+1) temporal frames (zero flow, frames clamped to
        # the clip) x ws*ws spatial window (reflect-bounds).
        # TODO(synk): stnls shifts the window at image borders and uses optical
        # flow for the temporal offsets; zero-flow + reflection approximates it.
        stt = 2 * wt + 1
        s_off = jnp.arange(ws) - ws // 2
        t_off = jnp.arange(stt) - wt
        ncand = stt * ws * ws
        dt = jnp.repeat(t_off, ws * ws)
        dh = jnp.tile(jnp.repeat(s_off, ws), stt)
        dw = jnp.tile(s_off, stt * ws)

        tc = jnp.clip(tq[:, None] + dt, 0, T - 1)              # (Q, ncand)
        hc = _reflect(qh[:, None] + dh, H)
        wc = _reflect(qw[:, None] + dw, W)

        # Pad the query *index lists* (not the gathered kp tensor) so the query
        # count divides the Pallas tile -> no extra HBM pass over kp.
        D = ps * ps * cph
        BH = B * nheads
        tile_q, vmem_limit = _pick_tile_q(BH, Q, ncand, D)
        padq = (-Q) % tile_q

        def _rep(a):
            return jnp.concatenate(
                [a, jnp.broadcast_to(a[:1], (padq,) + a.shape[1:])], axis=0)

        if padq:
            tq_g, qh_g, qw_g = _rep(tq), _rep(qh), _rep(qw)
            tc_g, hc_g, wc_g = _rep(tc), _rep(hc), _rep(wc)
        else:
            tq_g, qh_g, qw_g, tc_g, hc_g, wc_g = tq, qh, qw, tc, hc, wc
        Qp = Q + padq

        # Candidate index tables in (ncand, Qp) order so the gather lands kp
        # directly in the kernel's (BH, ncand, Qp, D) layout (queries lane-dense).
        tc_g, hc_g, wc_g = [jnp.swapaxes(a, 0, 1) for a in (tc_g, hc_g, wc_g)]

        qpat = _gather_patches(v0h, tq_g, qh_g, qw_g, ps, pad)  # (BH,Qp,ps,ps,cph)
        kpat = _gather_patches(v1h, tc_g, hc_g, wc_g, ps, pad)  # (BH,ncand,Qp,ps,ps,cph)

        dists_all = patch_prod(qpat.reshape(BH, Qp, D),
                               kpat.reshape(BH, ncand, Qp, D),
                               tile_q, vmem_limit)              # (BH, ncand, Qp)
        dists_all = dists_all[:, :, :Q].reshape(B, nheads, ncand, Q)
        dists_all = jnp.swapaxes(dists_all, -1, -2)             # (B,nheads,Q,ncand)

        # top-k (largest products) -- glue in plain JAX
        dists, top_idx = jax.lax.top_k(dists_all, k)            # (B,nheads,Q,k)
        coords = jnp.stack([tc, hc, wc], axis=-1)               # (Q,ncand,3)
        q_ar = jnp.arange(Q)[None, None, :, None]
        inds = coords[q_ar, top_idx]                            # (B,nheads,Q,k,3)
        return dists, inds.astype(jnp.int32)

    # ---- 'interpolate_inds': coarse -> fine query grid --------------------- #
    def _interp_inds(self, inds_a, T, H, W):
        B, nheads = inds_a.shape[:2]
        k = inds_a.shape[3]
        scale, st0, st0a = self.scale, self.stride0, self.stride0_a
        nH_a = (H - 1) // st0a + 1
        nW_a = (W - 1) // st0a + 1
        nH_f = (H - 1) // st0 + 1
        nW_f = (W - 1) // st0 + 1
        inds_a = inds_a.reshape(B, nheads, T, nH_a, nW_a, k, 3)

        hf = jnp.arange(nH_f)
        wf = jnp.arange(nW_f)
        hc_idx = jnp.minimum(hf // scale, nH_a - 1)
        wc_idx = jnp.minimum(wf // scale, nW_a - 1)
        dH = hf * st0 - hc_idx * st0a
        dW = wf * st0 - wc_idx * st0a

        inds_f = inds_a[:, :, :, hc_idx[:, None], wc_idx[None, :], :, :]
        delta = jnp.stack(
            [jnp.zeros((nH_f, nW_f), jnp.int32),
             jnp.broadcast_to(dH[:, None], (nH_f, nW_f)),
             jnp.broadcast_to(dW[None, :], (nH_f, nW_f))], axis=-1)
        inds_f = inds_f + delta[None, None, None, :, :, None, :]
        inds_f = jnp.stack([inds_f[..., 0],
                            _reflect(inds_f[..., 1], H),
                            _reflect(inds_f[..., 2], W)], axis=-1)
        return inds_f.reshape(B, nheads, T * nH_f * nW_f, k, 3).astype(jnp.int32)

    # ---- 'prod_refine' with ws_r=1: evaluate dists at given indices -------- #
    def _refine_dists(self, vid0, vid1, inds_f):
        B, T, C, H, W = vid0.shape
        nheads, ps, k = self.nheads, self.ps, self.k
        st0 = self.stride0
        cph = C // nheads
        pad = ps // 2 + 1
        pw = ((0, 0), (0, 0), (0, 0), (pad, pad), (pad, pad))
        v0p = jnp.pad(vid0.astype(jnp.bfloat16), pw, mode="reflect")
        v1p = jnp.pad(vid1.astype(jnp.bfloat16), pw, mode="reflect")
        v0h = _head_split_video(v0p, nheads)
        v1h = _head_split_video(v1p, nheads)

        nH = (H - 1) // st0 + 1
        nW = (W - 1) // st0 + 1
        Qf = T * nH * nW
        tq = jnp.broadcast_to(jnp.arange(T)[:, None, None], (T, nH, nW)).reshape(-1)
        qh = jnp.broadcast_to((jnp.arange(nH) * st0)[None, :, None],
                              (T, nH, nW)).reshape(-1)
        qw = jnp.broadcast_to((jnp.arange(nW) * st0)[None, None, :],
                              (T, nH, nW)).reshape(-1)

        D = ps * ps * cph
        BH = B * nheads
        tile_q, vmem_limit = _pick_tile_q(BH, Qf, k, D)
        padq = (-Qf) % tile_q
        inds_q = inds_f.reshape(B, nheads, Qf, k, 3)
        if padq:
            tq = jnp.concatenate([tq, jnp.broadcast_to(tq[:1], (padq,))])
            qh = jnp.concatenate([qh, jnp.broadcast_to(qh[:1], (padq,))])
            qw = jnp.concatenate([qw, jnp.broadcast_to(qw[:1], (padq,))])
            inds_q = jnp.concatenate(
                [inds_q, jnp.broadcast_to(inds_q[:, :, :1],
                                          (B, nheads, padq, k, 3))], axis=2)
        Qp = Qf + padq

        # Query patches: indices are shared across heads (one fused gather).
        qpat = _gather_patches(v0h, tq, qh, qw, ps, pad)        # (BH,Qp,ps,ps,cph)
        # Key patches: per-head indices in (k, Qp) order so the single batched
        # gather emits kp already in the kernel's (BH, k, Qp, D) layout.
        tt = jnp.swapaxes(inds_q[..., 0].reshape(BH, Qp, k), 1, 2)
        hh = jnp.swapaxes(inds_q[..., 1].reshape(BH, Qp, k), 1, 2)
        ww = jnp.swapaxes(inds_q[..., 2].reshape(BH, Qp, k), 1, 2)
        kpat = _gather_patches(v1h, tt, hh, ww, ps, pad, per_batch=True)

        # TODO(synk): anchor_self=True self-index pinning of stnls is omitted.
        dists = patch_prod(qpat.reshape(BH, Qp, D),
                           kpat.reshape(BH, k, Qp, D),
                           tile_q, vmem_limit)                  # (BH, k, Qp)
        dists = dists[:, :, :Qf].reshape(B, nheads, k, Qf)
        return jnp.swapaxes(dists, -1, -2)                      # (B,nheads,Qf,k)

    # ---- forward ----------------------------------------------------------- #
    def __call__(self, vid0, vid1, flows=None):
        # flows unused: the reference builds the search with fflow=bflow=None.
        B, T, C, H, W = vid0.shape
        dists_a, inds_a = self._exact_search(vid0, vid1)
        inds_f = self._interp_inds(inds_a, T, H, W)
        # TODO(synk): the reference's fill_dists/new_inds are broken stubs
        # (string "inds", 2-arg recursive call); we implement the evident
        # intent: evaluate the interpolated indices with the refine search.
        dists_f = self._refine_dists(vid0, vid1, inds_f)
        return dists_f, inds_f


# --------------------------------- main ------------------------------------- #

if __name__ == "__main__":
    key = jax.random.PRNGKey(0)
    B, T, C, H, W = 2, 2, 4, 16, 16
    k0, k1 = jax.random.split(key)
    vid0 = jax.random.normal(k0, (B, T, C, H, W), dtype=jnp.float32)
    vid1 = jax.random.normal(k1, (B, T, C, H, W), dtype=jnp.float32)

    model = NLSApproxSpace(k=7, ps=7, ws_r=1, ws=8, wt=1, nheads=1,
                           stride0_a=8, stride0=4, stride1=1)
    fwd = jax.jit(lambda a, b: model(a, b, None))
    dists, inds = jax.block_until_ready(fwd(vid0, vid1))

    Qf = T * (H // 4) * (W // 4)
    assert dists.shape == (B, 1, Qf, 7), dists.shape
    assert inds.shape == (B, 1, Qf, 7, 3), inds.shape
    assert dists.dtype == jnp.float32 and inds.dtype == jnp.int32
    assert bool(jnp.isfinite(dists).all())
    print("KERNEL_OK")
</pallas_src>

<mosaic_0001>
module attributes {stable_mosaic.version = 11 : i64} {
  func.func @_patch_prod_kernel(%arg0: i32, %arg1: i32, %arg2: memref<1x8x196xbf16, #tpu.memory_space<vmem>>, %arg3: memref<1x192x8x196xbf16, #tpu.memory_space<vmem>>, %arg4: memref<1x192x8xf32, #tpu.memory_space<vmem>>) attributes {dimension_semantics = [#tpu.dimension_semantics<parallel>, #tpu.dimension_semantics<parallel>], iteration_bounds = array<i64: 2, 1>, scalar_prefetch = 0 : i64, scratch_operands = 0 : i64, tpu.core_type = #tpu.core_type<tc>, window_params = [{transform_indices = @transform_0, window_bounds = array<i64: 1, 8, 196>}, {transform_indices = @transform_1, window_bounds = array<i64: 1, 192, 8, 196>}, {transform_indices = @transform_2, window_bounds = array<i64: 1, 192, 8>}]} {
    %c0 = arith.constant 0 : index
    %c0_0 = arith.constant 0 : index
    %c0_1 = arith.constant 0 : index
    %0 = vector.load %arg2[%c0, %c0_0, %c0_1] : memref<1x8x196xbf16, #tpu.memory_space<vmem>>, vector<1x8x196xbf16>
    %1 = vector.shape_cast %0 : vector<1x8x196xbf16> to vector<8x196xbf16>
    %2 = arith.extf %1 : vector<8x196xbf16> to vector<8x196xf32>
    %c0_2 = arith.constant 0 : index
    %c0_3 = arith.constant 0 : index
    %c0_4 = arith.constant 0 : index
    %c0_5 = arith.constant 0 : index
    %3 = vector.load %arg3[%c0_2, %c0_3, %c0_4, %c0_5] : memref<1x192x8x196xbf16, #tpu.memory_space<vmem>>, vector<1x16x8x196xbf16>
    %4 = vector.shape_cast %3 : vector<1x16x8x196xbf16> to vector<16x8x196xbf16>
    %5 = arith.extf %4 : vector<16x8x196xbf16> to vector<16x8x196xf32>
    %6 = vector.shape_cast %2 : vector<8x196xf32> to vector<1x8x196xf32>
    %7 = vector.broadcast %6 : vector<1x8x196xf32> to vector<16x8x196xf32>
    %8 = arith.mulf %5, %7 : vector<16x8x196xf32>
    %cst = arith.constant dense<0.000000e+00> : vector<16x8xf32>
    %9 = vector.multi_reduction <add>, %8, %cst [2] : vector<16x8x196xf32> to vector<16x8xf32>
    %c0_6 = arith.constant 0 : index
    %c0_7 = arith.constant 0 : index
    %c0_8 = arith.constant 0 : index
    %10 = vector.load %arg4[%c0_6, %c0_7, %c0_8] : memref<1x192x8xf32, #tpu.memory_space<vmem>>, vector<1x16x8xf32>
    %11 = vector.shape_cast %10 : vector<1x16x8xf32> to vector<16x8xf32>
    %12 = vector.shape_cast %9 : vector<16x8xf32> to vector<1x16x8xf32>
    tpu.vector_store %arg4[%c0_6, %c0_7, %c0_8], %12 {strides = array<i32>} : memref<1x192x8xf32, #tpu.memory_space<vmem>>, vector<1x16x8xf32>,
    %c0_9 = arith.constant 0 : index
    %c16 = arith.constant 16 : index
    %c0_10 = arith.constant 0 : index
    %c0_11 = arith.constant 0 : index
    %13 = vector.load %arg3[%c0_9, %c16, %c0_10, %c0_11] : memref<1x192x8x196xbf16, #tpu.memory_space<vmem>>, vector<1x16x8x196xbf16>
    %14 = vector.shape_cast %13 : vector<1x16x8x196xbf16> to vector<16x8x196xbf16>
    %15 = arith.extf %14 : vector<16x8x196xbf16> to vector<16x8x196xf32>
    %16 = vector.shape_cast %2 : vector<8x196xf32> to vector<1x8x196xf32>
    %17 = vector.broadcast %16 : vector<1x8x196xf32> to vector<16x8x196xf32>
    %18 = arith.mulf %15, %17 : vector<16x8x196xf32>
    %cst_12 = arith.constant dense<0.000000e+00> : vector<16x8xf32>
    %19 = vector.multi_reduction <add>, %18, %cst_12 [2] : vector<16x8x196xf32> to vector<16x8xf32>
    %c0_13 = arith.constant 0 : index
    %c16_14 = arith.constant 16 : index
    %c0_15 = arith.constant 0 : index
    %20 = vector.load %arg4[%c0_13, %c16_14, %c0_15] : memref<1x192x8xf32, #tpu.memory_space<vmem>>, vector<1x16x8xf32>
    %21 = vector.shape_cast %20 : vector<1x16x8xf32> to vector<16x8xf32>
    %22 = vector.shape_cast %19 : vector<16x8xf32> to vector<1x16x8xf32>
    tpu.vector_store %arg4[%c0_13, %c16_14, %c0_15], %22 {strides = array<i32>} : memref<1x192x8xf32, #tpu.memory_space<vmem>>, vector<1x16x8xf32>,
    %c0_16 = arith.constant 0 : index
    %c32 = arith.constant 32 : index
    %c0_17 = arith.constant 0 : index
    %c0_18 = arith.constant 0 : index
    %23 = vector.load %arg3[%c0_16, %c32, %c0_17, %c0_18] : memref<1x192x8x196xbf16, #tpu.memory_space<vmem>>, vector<1x16x8x196xbf16>
    %24 = vector.shape_cast %23 : vector<1x16x8x196xbf16> to vector<16x8x196xbf16>
    %25 = arith.extf %24 : vector<16x8x196xbf16> to vector<16x8x196xf32>
    %26 = vector.shape_cast %2 : vector<8x196xf32> to vector<1x8x196xf32>
    %27 = vector.broadcast %26 : vector<1x8x196xf32> to vector<16x8x196xf32>
    %28 = arith.mulf %25, %27 : vector<16x8x196xf32>
    %cst_19 = arith.constant dense<0.000000e+00> : vector<16x8xf32>
    %29 = vector.multi_reduction <add>, %28, %cst_19 [2] : vector<16x8x196xf32> to vector<16x8xf32>
    %c0_20 = arith.constant 0 : index
    %c32_21 = arith.constant 32 : index
    %c0_22 = arith.constant 0 : index
    %30 = vector.load %arg4[%c0_20, %c32_21, %c0_22] : memref<1x192x8xf32, #tpu.memory_space<vmem>>, vector<1x16x8xf32>
    %31 = vector.shape_cast %30 : vector<1x16x8xf32> to vector<16x8xf32>
    %32 = vector.shape_cast %29 : vector<16x8xf32> to vector<1x16x8xf32>
    tpu.vector_store %arg4[%c0_20, %c32_21, %c0_22], %32 {strides = array<i32>} : memref<1x192x8xf32, #tpu.memory_space<vmem>>, vector<1x16x8xf32>,
    %c0_23 = arith.constant 0 : index
    %c48 = arith.constant 48 : index
    %c0_24 = arith.constant 0 : index
    %c0_25 = arith.constant 0 : index
    %33 = vector.load %arg3[%c0_23, %c48, %c0_24, %c0_25] : memref<1x192x8x196xbf16, #tpu.memory_space<vmem>>, vector<1x16x8x196xbf16>
    %34 = vector.shape_cast %33 : vector<1x16x8x196xbf16> to vector<16x8x196xbf16>
    %35 = arith.extf %34 : vector<16x8x196xbf16> to vector<16x8x196xf32>
    %36 = vector.shape_cast %2 : vector<8x196xf32> to vector<1x8x196xf32>
    %37 = vector.broadcast %36 : vector<1x8x196xf32> to vector<16x8x196xf32>
    %38 = arith.mulf %35, %37 : vector<16x8x196xf32>
    %cst_26 = arith.constant dense<0.000000e+00> : vector<16x8xf32>
    %39 = vector.multi_reduction <add>, %38, %cst_26 [2] : vector<16x8x196xf32> to vector<16x8xf32>
    %c0_27 = arith.constant 0 : index
    %c48_28 = arith.constant 48 : index
    %c0_29 = arith.constant 0 : index
    %40 = vector.load %arg4[%c0_27, %c48_28, %c0_29] : memref<1x192x8xf32, #tpu.memory_space<vmem>>, vector<1x16x8xf32>
    %41 = vector.shape_cast %40 : vector<1x16x8xf32> to vector<16x8xf32>
    %42 = vector.shape_cast %39 : vector<16x8xf32> to vector<1x16x8xf32>
    tpu.vector_store %arg4[%c0_27, %c48_28, %c0_29], %42 {strides = array<i32>} : memref<1x192x8xf32, #tpu.memory_space<vmem>>, vector<1x16x8xf32>,
    %c0_30 = arith.constant 0 : index
    %c64 = arith.constant 64 : index
    %c0_31 = arith.constant 0 : index
    %c0_32 = arith.constant 0 : index
    %43 = vector.load %arg3[%c0_30, %c64, %c0_31, %c0_32] : memref<1x192x8x196xbf16, #tpu.memory_space<vmem>>, vector<1x16x8x196xbf16>
    %44 = vector.shape_cast %43 : vector<1x16x8x196xbf16> to vector<16x8x196xbf16>
    %45 = arith.extf %44 : vector<16x8x196xbf16> to vector<16x8x196xf32>
    %46 = vector.shape_cast %2 : vector<8x196xf32> to vector<1x8x196xf32>
    %47 = vector.broadcast %46 : vector<1x8x196xf32> to vector<16x8x196xf32>
    %48 = arith.mulf %45, %47 : vector<16x8x196xf32>
    %cst_33 = arith.constant dense<0.000000e+00> : vector<16x8xf32>
    %49 = vector.multi_reduction <add>, %48, %cst_33 [2] : vector<16x8x196xf32> to vector<16x8xf32>
    %c0_34 = arith.constant 0 : index
    %c64_35 = arith.constant 64 : index
    %c0_36 = arith.constant 0 : index
    %50 = vector.load %arg4[%c0_34, %c64_35, %c0_36] : memref<1x192x8xf32, #tpu.memory_space<vmem>>, vector<1x16x8xf32>
    %51 = vector.shape_cast %50 : vector<1x16x8xf32> to vector<16x8xf32>
    %52 = vector.shape_cast %49 : vector<16x8xf32> to vector<1x16x8xf32>
    tpu.vector_store %arg4[%c0_34, %c64_35, %c0_36], %52 {strides = array<i32>} : memref<1x192x8xf32, #tpu.memory_space<vmem>>, vector<1x16x8xf32>,
    %c0_37 = arith.constant 0 : index
    %c80 = arith.constant 80 : index
    %c0_38 = arith.constant 0 : index
    %c0_39 = arith.constant 0 : index
    %53 = vector.load %arg3[%c0_37, %c80, %c0_38, %c0_39] : memref<1x192x8x196xbf16, #tpu.memory_space<vmem>>, vector<1x16x8x196xbf16>
    %54 = vector.shape_cast %53 : vector<1x16x8x196xbf16> to vector<16x8x196xbf16>
    %55 = arith.extf %54 : vector<16x8x196xbf16> to vector<16x8x196xf32>
    %56 = vector.shape_cast %2 : vector<8x196xf32> to vector<1x8x196xf32>
    %57 = vector.broadcast %56 : vector<1x8x196xf32> to vector<16x8x196xf32>
    %58 = arith.mulf %55, %57 : vector<16x8x196xf32>
    %cst_40 = arith.constant dense<0.000000e+00> : vector<16x8xf32>
    %59 = vector.multi_reduction <add>, %58, %cst_40 [2] : vector<16x8x196xf32> to vector<16x8xf32>
    %c0_41 = arith.constant 0 : index
    %c80_42 = arith.constant 80 : index
    %c0_43 = arith.constant 0 : index
    %60 = vector.load %arg4[%c0_41, %c80_42, %c0_43] : memref<1x192x8xf32, #tpu.memory_space<vmem>>, vector<1x16x8xf32>
    %61 = vector.shape_cast %60 : vector<1x16x8xf32> to vector<16x8xf32>
    %62 = vector.shape_cast %59 : vector<16x8xf32> to vector<1x16x8xf32>
    tpu.vector_store %arg4[%c0_41, %c80_42, %c0_43], %62 {strides = array<i32>} : memref<1x192x8xf32, #tpu.memory_space<vmem>>, vector<1x16x8xf32>,
    %c0_44 = arith.constant 0 : index
    %c96 = arith.constant 96 : index
    %c0_45 = arith.constant 0 : index
    %c0_46 = arith.constant 0 : index
    %63 = vector.load %arg3[%c0_44, %c96, %c0_45, %c0_46] : memref<1x192x8x196xbf16, #tpu.memory_space<vmem>>, vector<1x16x8x196xbf16>
    %64 = vector.shape_cast %63 : vector<1x16x8x196xbf16> to vector<16x8x196xbf16>
    %65 = arith.extf %64 : vector<16x8x196xbf16> to vector<16x8x196xf32>
    %66 = vector.shape_cast %2 : vector<8x196xf32> to vector<1x8x196xf32>
    %67 = vector.broadcast %66 : vector<1x8x196xf32> to vector<16x8x196xf32>
    %68 = arith.mulf %65, %67 : vector<16x8x196xf32>
    %cst_47 = arith.constant dense<0.000000e+00> : vector<16x8xf32>
    %69 = vector.multi_reduction <add>, %68, %cst_47 [2] : vector<16x8x196xf32> to vector<16x8xf32>
    %c0_48 = arith.constant 0 : index
    %c96_49 = arith.constant 96 : index
    %c0_50 = arith.constant 0 : index
    %70 = vector.load %arg4[%c0_48, %c96_49, %c0_50] : memref<1x192x8xf32, #tpu.memory_space<vmem>>, vector<1x16x8xf32>
    %71 = vector.shape_cast %70 : vector<1x16x8xf32> to vector<16x8xf32>
    %72 = vector.shape_cast %69 : vector<16x8xf32> to vector<1x16x8xf32>
    tpu.vector_store %arg4[%c0_48, %c96_49, %c0_50], %72 {strides = array<i32>} : memref<1x192x8xf32, #tpu.memory_space<vmem>>, vector<1x16x8xf32>,
    %c0_51 = arith.constant 0 : index
    %c112 = arith.constant 112 : index
    %c0_52 = arith.constant 0 : index
    %c0_53 = arith.constant 0 : index
    %73 = vector.load %arg3[%c0_51, %c112, %c0_52, %c0_53] : memref<1x192x8x196xbf16, #tpu.memory_space<vmem>>, vector<1x16x8x196xbf16>
    %74 = vector.shape_cast %73 : vector<1x16x8x196xbf16> to vector<16x8x196xbf16>
    %75 = arith.extf %74 : vector<16x8x196xbf16> to vector<16x8x196xf32>
    %76 = vector.shape_cast %2 : vector<8x196xf32> to vector<1x8x196xf32>
    %77 = vector.broadcast %76 : vector<1x8x196xf32> to vector<16x8x196xf32>
    %78 = arith.mulf %75, %77 : vector<16x8x196xf32>
    %cst_54 = arith.constant dense<0.000000e+00> : vector<16x8xf32>
    %79 = vector.multi_reduction <add>, %78, %cst_54 [2] : vector<16x8x196xf32> to vector<16x8xf32>
    %c0_55 = arith.constant 0 : index
    %c112_56 = arith.constant 112 : index
    %c0_57 = arith.constant 0 : index
    %80 = vector.load %arg4[%c0_55, %c112_56, %c0_57] : memref<1x192x8xf32, #tpu.memory_space<vmem>>, vector<1x16x8xf32>
    %81 = vector.shape_cast %80 : vector<1x16x8xf32> to vector<16x8xf32>
    %82 = vector.shape_cast %79 : vector<16x8xf32> to vector<1x16x8xf32>
    tpu.vector_store %arg4[%c0_55, %c112_56, %c0_57], %82 {strides = array<i32>} : memref<1x192x8xf32, #tpu.memory_space<vmem>>, vector<1x16x8xf32>,
    %c0_58 = arith.constant 0 : index
    %c128 = arith.constant 128 : index
    %c0_59 = arith.constant 0 : index
    %c0_60 = arith.constant 0 : index
    %83 = vector.load %arg3[%c0_58, %c128, %c0_59, %c0_60] : memref<1x192x8x196xbf16, #tpu.memory_space<vmem>>, vector<1x16x8x196xbf16>
    %84 = vector.shape_cast %83 : vector<1x16x8x196xbf16> to vector<16x8x196xbf16>
    %85 = arith.extf %84 : vector<16x8x196xbf16> to vector<16x8x196xf32>
    %86 = vector.shape_cast %2 : vector<8x196xf32> to vector<1x8x196xf32>
    %87 = vector.broadcast %86 : vector<1x8x196xf32> to vector<16x8x196xf32>
    %88 = arith.mulf %85, %87 : vector<16x8x196xf32>
    %cst_61 = arith.constant dense<0.000000e+00> : vector<16x8xf32>
    %89 = vector.multi_reduction <add>, %88, %cst_61 [2] : vector<16x8x196xf32> to vector<16x8xf32>
    %c0_62 = arith.constant 0 : index
    %c128_63 = arith.constant 128 : index
    %c0_64 = arith.constant 0 : index
    %90 = vector.load %arg4[%c0_62, %c128_63, %c0_64] : memref<1x192x8xf32, #tpu.memory_space<vmem>>, vector<1x16x8xf32>
    %91 = vector.shape_cast %90 : vector<1x16x8xf32> to vector<16x8xf32>
    %92 = vector.shape_cast %89 : vector<16x8xf32> to vector<1x16x8xf32>
    tpu.vector_store %arg4[%c0_62, %c128_63, %c0_64], %92 {strides = array<i32>} : memref<1x192x8xf32, #tpu.memory_space<vmem>>, vector<1x16x8xf32>,
    %c0_65 = arith.constant 0 : index
    %c144 = arith.constant 144 : index
    %c0_66 = arith.constant 0 : index
    %c0_67 = arith.constant 0 : index
    %93 = vector.load %arg3[%c0_65, %c144, %c0_66, %c0_67] : memref<1x192x8x196xbf16, #tpu.memory_space<vmem>>, vector<1x16x8x196xbf16>
    %94 = vector.shape_cast %93 : vector<1x16x8x196xbf16> to vector<16x8x196xbf16>
    %95 = arith.extf %94 : vector<16x8x196xbf16> to vector<16x8x196xf32>
    %96 = vector.shape_cast %2 : vector<8x196xf32> to vector<1x8x196xf32>
    %97 = vector.broadcast %96 : vector<1x8x196xf32> to vector<16x8x196xf32>
    %98 = arith.mulf %95, %97 : vector<16x8x196xf32>
    %cst_68 = arith.constant dense<0.000000e+00> : vector<16x8xf32>
    %99 = vector.multi_reduction <add>, %98, %cst_68 [2] : vector<16x8x196xf32> to vector<16x8xf32>
    %c0_69 = arith.constant 0 : index
    %c144_70 = arith.constant 144 : index
    %c0_71 = arith.constant 0 : index
    %100 = vector.load %arg4[%c0_69, %c144_70, %c0_71] : memref<1x192x8xf32, #tpu.memory_space<vmem>>, vector<1x16x8xf32>
    %101 = vector.shape_cast %100 : vector<1x16x8xf32> to vector<16x8xf32>
    %102 = vector.shape_cast %99 : vector<16x8xf32> to vector<1x16x8xf32>
    tpu.vector_store %arg4[%c0_69, %c144_70, %c0_71], %102 {strides = array<i32>} : memref<1x192x8xf32, #tpu.memory_space<vmem>>, vector<1x16x8xf32>,
    %c0_72 = arith.constant 0 : index
    %c160 = arith.constant 160 : index
    %c0_73 = arith.constant 0 : index
    %c0_74 = arith.constant 0 : index
    %103 = vector.load %arg3[%c0_72, %c160, %c0_73, %c0_74] : memref<1x192x8x196xbf16, #tpu.memory_space<vmem>>, vector<1x16x8x196xbf16>
    %104 = vector.shape_cast %103 : vector<1x16x8x196xbf16> to vector<16x8x196xbf16>
    %105 = arith.extf %104 : vector<16x8x196xbf16> to vector<16x8x196xf32>
    %106 = vector.shape_cast %2 : vector<8x196xf32> to vector<1x8x196xf32>
    %107 = vector.broadcast %106 : vector<1x8x196xf32> to vector<16x8x196xf32>
    %108 = arith.mulf %105, %107 : vector<16x8x196xf32>
    %cst_75 = arith.constant dense<0.000000e+00> : vector<16x8xf32>
    %109 = vector.multi_reduction <add>, %108, %cst_75 [2] : vector<16x8x196xf32> to vector<16x8xf32>
    %c0_76 = arith.constant 0 : index
    %c160_77 = arith.constant 160 : index
    %c0_78 = arith.constant 0 : index
    %110 = vector.load %arg4[%c0_76, %c160_77, %c0_78] : memref<1x192x8xf32, #tpu.memory_space<vmem>>, vector<1x16x8xf32>
    %111 = vector.shape_cast %110 : vector<1x16x8xf32> to vector<16x8xf32>
    %112 = vector.shape_cast %109 : vector<16x8xf32> to vector<1x16x8xf32>
    tpu.vector_store %arg4[%c0_76, %c160_77, %c0_78], %112 {strides = array<i32>} : memref<1x192x8xf32, #tpu.memory_space<vmem>>, vector<1x16x8xf32>,
    %c0_79 = arith.constant 0 : index
    %c176 = arith.constant 176 : index
    %c0_80 = arith.constant 0 : index
    %c0_81 = arith.constant 0 : index
    %113 = vector.load %arg3[%c0_79, %c176, %c0_80, %c0_81] : memref<1x192x8x196xbf16, #tpu.memory_space<vmem>>, vector<1x16x8x196xbf16>
    %114 = vector.shape_cast %113 : vector<1x16x8x196xbf16> to vector<16x8x196xbf16>
    %115 = arith.extf %114 : vector<16x8x196xbf16> to vector<16x8x196xf32>
    %116 = vector.shape_cast %2 : vector<8x196xf32> to vector<1x8x196xf32>
    %117 = vector.broadcast %116 : vector<1x8x196xf32> to vector<16x8x196xf32>
    %118 = arith.mulf %115, %117 : vector<16x8x196xf32>
    %cst_82 = arith.constant dense<0.000000e+00> : vector<16x8xf32>
    %119 = vector.multi_reduction <add>, %118, %cst_82 [2] : vector<16x8x196xf32> to vector<16x8xf32>
    %c0_83 = arith.constant 0 : index
    %c176_84 = arith.constant 176 : index
    %c0_85 = arith.constant 0 : index
    %120 = vector.load %arg4[%c0_83, %c176_84, %c0_85] : memref<1x192x8xf32, #tpu.memory_space<vmem>>, vector<1x16x8xf32>
    %121 = vector.shape_cast %120 : vector<1x16x8xf32> to vector<16x8xf32>
    %122 = vector.shape_cast %119 : vector<16x8xf32> to vector<1x16x8xf32>
    tpu.vector_store %arg4[%c0_83, %c176_84, %c0_85], %122 {strides = array<i32>} : memref<1x192x8xf32, #tpu.memory_space<vmem>>, vector<1x16x8xf32>,
    return
  }
  func.func @transform_0(%arg0: i32, %arg1: i32) -> (i32, i32, i32) {
    %c0_i32 = arith.constant 0 : i32
    %c0_i32_0 = arith.constant 0 : i32
    return %arg0, %arg1, %c0_i32 : i32, i32, i32
  }
  func.func @transform_1(%arg0: i32, %arg1: i32) -> (i32, i32, i32, i32) {
    %c0_i32 = arith.constant 0 : i32
    %c0_i32_0 = arith.constant 0 : i32
    %c0_i32_1 = arith.constant 0 : i32
    return %arg0, %c0_i32, %arg1, %c0_i32_0 : i32, i32, i32, i32
  }
  func.func @transform_2(%arg0: i32, %arg1: i32) -> (i32, i32, i32) {
    %c0_i32 = arith.constant 0 : i32
    %c0_i32_0 = arith.constant 0 : i32
    return %arg0, %c0_i32, %arg1 : i32, i32, i32
  }
}

module attributes {stable_mosaic.version = 11 : i64} {
  func.func @_patch_prod_kernel(%arg0: i32, %arg1: i32, %arg2: memref<1x32x196xbf16, #tpu.memory_space<vmem>>, %arg3: memref<1x7x32x196xbf16, #tpu.memory_space<vmem>>, %arg4: memref<1x7x32xf32, #tpu.memory_space<vmem>>) attributes {dimension_semantics = [#tpu.dimension_semantics<parallel>, #tpu.dimension_semantics<parallel>], iteration_bounds = array<i64: 2, 1>, scalar_prefetch = 0 : i64, scratch_operands = 0 : i64, tpu.core_type = #tpu.core_type<tc>, window_params = [{transform_indices = @transform_0, window_bounds = array<i64: 1, 32, 196>}, {transform_indices = @transform_1, window_bounds = array<i64: 1, 7, 32, 196>}, {transform_indices = @transform_2, window_bounds = array<i64: 1, 7, 32>}]} {
    %c0 = arith.constant 0 : index
    %c0_0 = arith.constant 0 : index
    %c0_1 = arith.constant 0 : index
    %0 = vector.load %arg2[%c0, %c0_0, %c0_1] : memref<1x32x196xbf16, #tpu.memory_space<vmem>>, vector<1x32x196xbf16>
    %1 = vector.shape_cast %0 : vector<1x32x196xbf16> to vector<32x196xbf16>
    %2 = arith.extf %1 : vector<32x196xbf16> to vector<32x196xf32>
    %c0_2 = arith.constant 0 : index
    %c0_3 = arith.constant 0 : index
    %c0_4 = arith.constant 0 : index
    %c0_5 = arith.constant 0 : index
    %3 = vector.load %arg3[%c0_2, %c0_3, %c0_4, %c0_5] : memref<1x7x32x196xbf16, #tpu.memory_space<vmem>>, vector<1x7x32x196xbf16>
    %4 = vector.shape_cast %3 : vector<1x7x32x196xbf16> to vector<7x32x196xbf16>
    %5 = arith.extf %4 : vector<7x32x196xbf16> to vector<7x32x196xf32>
    %6 = vector.shape_cast %2 : vector<32x196xf32> to vector<1x32x196xf32>
    %7 = vector.broadcast %6 : vector<1x32x196xf32> to vector<7x32x196xf32>
    %8 = arith.mulf %5, %7 : vector<7x32x196xf32>
    %cst = arith.constant dense<0.000000e+00> : vector<7x32xf32>
    %9 = vector.multi_reduction <add>, %8, %cst [2] : vector<7x32x196xf32> to vector<7x32xf32>
    %c0_6 = arith.constant 0 : index
    %c0_7 = arith.constant 0 : index
    %c0_8 = arith.constant 0 : index
    %10 = vector.load %arg4[%c0_6, %c0_7, %c0_8] : memref<1x7x32xf32, #tpu.memory_space<vmem>>, vector<1x7x32xf32>
    %11 = vector.shape_cast %10 : vector<1x7x32xf32> to vector<7x32xf32>
    %12 = vector.shape_cast %9 : vector<7x32xf32> to vector<1x7x32xf32>
    tpu.vector_store %arg4[%c0_6, %c0_7, %c0_8], %12 {strides = array<i32>} : memref<1x7x32xf32, #tpu.memory_space<vmem>>, vector<1x7x32xf32>,
    return
  }
  func.func @transform_0(%arg0: i32, %arg1: i32) -> (i32, i32, i32) {
    %c0_i32 = arith.constant 0 : i32
    %c0_i32_0 = arith.constant 0 : i32
    return %arg0, %arg1, %c0_i32 : i32, i32, i32
  }
  func.func @transform_1(%arg0: i32, %arg1: i32) -> (i32, i32, i32, i32) {
    %c0_i32 = arith.constant 0 : i32
    %c0_i32_0 = arith.constant 0 : i32
    %c0_i32_1 = arith.constant 0 : i32
    return %arg0, %c0_i32, %arg1, %c0_i32_0 : i32, i32, i32, i32
  }
  func.func @transform_2(%arg0: i32, %arg1: i32) -> (i32, i32, i32) {
    %c0_i32 = arith.constant 0 : i32
    %c0_i32_0 = arith.constant 0 : i32
    return %arg0, %c0_i32, %arg1 : i32, i32, i32
  }
}

</mosaic_0001>

<llo_original>
// kernel: tile.15
$region0: #{tile.15}
  #allocation0 [shape = 's32[1]{0}', space=sflag, size = 0x4, scoped, tag = 'scoped memory for tile.15']
  %s0 = inlined_call_operand.vmem [shape: s32[8], index: 0, kind: input, shape index: {}]
  %s1 = inlined_call_operand.vmem [shape: s32[24,8], index: 1, kind: output, shape index: {}]
  // Predicated region
  $region2: #{tile.15} parent=0 // pred_check
    _
  $region3: #{tile.15} parent=0 // pred_check_branch
    %3 = sbr.rel (0) target = $region5
  $region4: #{tile.15} parent=0 // pred_region
    _
  $region5: #{tile.15} parent=0 // pred_fallthru
    _
  %v4 = vld [vmem:[%s0] ss:$0 sm:$0xff]
  %5 = vst [vmem:[%s1] sm:$0xff] %v4
  %s6 = scalar_lea.vmem %s1, 8
  %7 = vst [vmem:[%s6] sm:$0xff] %v4
  %s8 = scalar_lea.vmem %s1, 16
  %9 = vst [vmem:[%s8] sm:$0xff] %v4

// kernel: tile.10
$region0: #{tile.10}
  %s0 = inlined_call_operand.vmem [shape: s32[8,8], index: 0, kind: input, shape index: {}]
  %s1 = inlined_call_operand.vmem [shape: s32[64], index: 1, kind: output, shape index: {}]
  $region1: #{tile.10} parent=0
    #allocation0 [shape = 'u8[4096]{0}', space=vmem, size = 0x1000, scoped, tag = 'scoped mem for output reshape']
    %v2 = vld [vmem:[%s0] sm:$0x1]
    %vm3 = vcmask 64512
    %4 = vst.msk [vmem:[#allocation0] sm:$0x1] %vm3, %v2
    %s5 = scalar_lea.vmem %s0, 7
    %v6 = vld [vmem:[%s5] sm:$0x1]
    %7 = vrot.lane.b32.xlu0 %v6, 56
    %v8 = vpop.permute.xlu0 %7
    %vm9 = vcmask 523712
    %10 = vst.msk [vmem:[#allocation0] sm:$0x1] %vm9, %v8
    %s11 = scalar_lea.vmem %s0, 6
    %v12 = vld [vmem:[%s11] sm:$0x1]
    %13 = vrot.lane.b32.xlu0 %v12, 48
    %v14 = vpop.permute.xlu0 %13
    %vm15 = vcmask 458112
    %16 = vst.msk [vmem:[#allocation0] sm:$0x1] %vm15, %v14
    %s17 = scalar_lea.vmem %s0, 5
    %v18 = vld [vmem:[%s17] sm:$0x1]
    %19 = vrot.lane.b32.xlu0 %v18, 40
    %v20 = vpop.permute.xlu0 %19
    %vm21 = vcmask 392512
    %22 = vst.msk [vmem:[#allocation0] sm:$0x1] %vm21, %v20
    %s23 = scalar_lea.vmem %s0, 4
    %v24 = vld [vmem:[%s23] sm:$0x1]
    %25 = vrot.lane.b32.xlu0 %v24, 32
    %v26 = vpop.permute.xlu0 %25
    %vm27 = vcmask 326912
    %28 = vst.msk [vmem:[#allocation0] sm:$0x1] %vm27, %v26
    %s29 = scalar_lea.vmem %s0, 3
    %v30 = vld [vmem:[%s29] sm:$0x1]
    %31 = vrot.lane.b32.xlu0 %v30, 24
    %v32 = vpop.permute.xlu0 %31
    %vm33 = vcmask 261312
    %34 = vst.msk [vmem:[#allocation0] sm:$0x1] %vm33, %v32
    %s35 = scalar_lea.vmem %s0, 2
    %v36 = vld [vmem:[%s35] sm:$0x1]
    %37 = vrot.lane.b32.xlu0 %v36, 16
    %v38 = vpop.permute.xlu0 %37
    %vm39 = vcmask 195712
    %40 = vst.msk [vmem:[#allocation0] sm:$0x1] %vm39, %v38
    %s41 = scalar_lea.vmem %s0, 1
    %v42 = vld [vmem:[%s41] sm:$0x1]
    %43 = vrot.lane.b32.xlu0 %v42, 8
    %v44 = vpop.permute.xlu0 %43
    %vm45 = vcmask 130112
    %46 = vst.msk [vmem:[#allocation0] sm:$0x1] %vm45, %v44
    %s48 = ssub.s32 2, 1
    %v49 = vld [vmem:[#allocation0] sm:%s48]
    %s51 = ssub.s32 2, 1
    %52 = vst [vmem:[%s1] sm:%s51] %v49

// kernel: tile.11
$region0: #{tile.11}
  #allocation0 [shape = 's32[1]{0}', space=sflag, size = 0x4, scoped, tag = 'scoped memory for tile.11']
  %s0 = inlined_call_operand.vmem [shape: s32[64], index: 0, kind: input, shape index: {}]
  %s1 = inlined_call_operand.vmem [shape: s32[3,64], index: 1, kind: output, shape index: {}]
  // Predicated region
  $region2: #{tile.11} parent=0 // pred_check
    _
  $region3: #{tile.11} parent=0 // pred_check_branch
    %3 = sbr.rel (0) target = $region5
  $region4: #{tile.11} parent=0 // pred_region
    _
  $region5: #{tile.11} parent=0 // pred_fallthru
    _
  %v4 = vld [vmem:[%s0] ss:$0 sm:$0xff]
  %5 = vst [vmem:[%s1] sm:$0xf] %v4

// kernel: _lambda_.2
$region0: #{_lambda_.2}
  #allocation0 [shape = 'u32[]', space=smem, size = 0x4, offset = 0x4, fixed_abs, tag = 'smem constant byte address 0x4 - core index']
  #allocation1 [shape = 'u32[72,128]{1,0:T(1,128)}', space=vmem, size = 0x9000, scoped, tag = 'internal scratch']
  %s0 = inlined_call_operand.vmem [shape: bf16[2,8,196], index: 0, kind: input, shape index: {}]
  %s1 = inlined_call_operand.vmem [shape: bf16[2,192,8,196], index: 1, kind: input, shape index: {}]
  %s2 = inlined_call_operand.vmem [shape: f32[2,192,8], index: 2, kind: output, shape index: {}]
  %s3 = sld [smem:[#allocation0]]
  $region41: #{_lambda_.2} parent=0
    _
  %s5 = ssub.s32 1, %s3
  %s6 = scalar_select 0, %s5, %s3
  loop: start=0, step=1, limit=4
  $region2: #{_lambda_.2} parent=0 // loop_pre_header
    _
  $region3: #{_lambda_.2} parent=0 // loop_header
    %s8 = sphi 0, %s12
    %p9 = scmp.ge.s32.totalorder %s8, 4
    %s15 = sphi 0, %s27
    %s16 = sphi 0, %s23
    %s17 = sphi 0, %s15
    %s18 = sphi 0, %s16
    %s19 = sphi 0, %s17
    %s20 = sphi 0, %s18
    %s32 = sphi 0, %s34
    %s35 = sphi 0, %s32
    %s36 = sphi 0, %s35
    %s52 = sphi 0, %s36
    %s60 = sphi 0, %s62
    %s63 = sphi 0, %s60
    %s64 = sphi 0, %s63
    %s80 = sphi 0, %s64
    %s88 = sphi 0, %s90
    %s91 = sphi 0, %s88
    %s92 = sphi 0, %s91
    %s108 = sphi 0, %s92
  $region4: #{_lambda_.2} parent=0 // loop_header_branch
    %11 = sbr.rel (%p9) target = $region8
  $region5: #{_lambda_.2} parent=0 // loop_body
    %s13 = ssub.s32 %s8, 1
    %s14 = ssub.s32 %s8, 2
    %s21 = sadd.s32 1, %s16
    %p22 = scmp.ge.s32.totalorder %s21, 1
    %s23 = scalar_select %p22, 0, %s21
    %s24 = sadd.s32 1, %s15
    %s25 = scalar_select %p22, %s24, %s15
    %p26 = scmp.ge.s32.totalorder %s25, 2
    %s27 = scalar_select %p26, 0, %s25
    %s28 = ssub.s32 %s15, %s27
    %s29 = ssub.s32 %s16, %s23
    %s30 = sor.u32 %s28, %s29
    %p31 = scmp.eq.s32.totalorder %s30, 0
    %s33 = sadd.s32 %s32, 1
    %s34 = scalar_select %p31, %s32, %s33
    %p37 = pneg %p31
    %p38 = scmp.eq.s32.totalorder %s8, 1
    %p39 = por %p37, %p38
    %p40 = scmp.ne.s32.totalorder %s32, %s35
    %p41 = scmp.eq.s32.totalorder %s8, 0
    %p42 = por %p40, %p41
    %p43 = scmp.ne.s32.totalorder %s32, %s35
    %p44 = scmp.eq.s32.totalorder %s13, 1
    %p45 = por %p43, %p44
    %p46 = scmp.ne.s32.totalorder %s35, %s36
    %p47 = scmp.eq.s32.totalorder %s13, 0
    %p48 = por %p46, %p47
    %p49 = scmp.ne.s32.totalorder %s35, %s36
    %p50 = scmp.eq.s32.totalorder %s14, 1
    %p51 = por %p49, %p50
    %p53 = scmp.ne.s32.totalorder %s36, %s52
    %p54 = scmp.eq.s32.totalorder %s14, 0
    %p55 = por %p53, %p54
    %s56 = ssub.s32 %s15, %s27
    %s57 = ssub.s32 %s16, %s23
    %s58 = sor.u32 %s56, %s57
    %p59 = scmp.eq.s32.totalorder %s58, 0
    %s61 = sadd.s32 %s60, 1
    %s62 = scalar_select %p59, %s60, %s61
    %p65 = pneg %p59
    %p66 = scmp.eq.s32.totalorder %s8, 1
    %p67 = por %p65, %p66
    %p68 = scmp.ne.s32.totalorder %s60, %s63
    %p69 = scmp.eq.s32.totalorder %s8, 0
    %p70 = por %p68, %p69
    %p71 = scmp.ne.s32.totalorder %s60, %s63
    %p72 = scmp.eq.s32.totalorder %s13, 1
    %p73 = por %p71, %p72
    %p74 = scmp.ne.s32.totalorder %s63, %s64
    %p75 = scmp.eq.s32.totalorder %s13, 0
    %p76 = por %p74, %p75
    %p77 = scmp.ne.s32.totalorder %s63, %s64
    %p78 = scmp.eq.s32.totalorder %s14, 1
    %p79 = por %p77, %p78
    %p81 = scmp.ne.s32.totalorder %s64, %s80
    %p82 = scmp.eq.s32.totalorder %s14, 0
    %p83 = por %p81, %p82
    %s84 = ssub.s32 %s15, %s27
    %s85 = ssub.s32 %s16, %s23
    %s86 = sor.u32 %s84, %s85
    %p87 = scmp.eq.s32.totalorder %s86, 0
    %s89 = sadd.s32 %s88, 1
    %s90 = scalar_select %p87, %s88, %s89
    %p93 = pneg %p87
    %p94 = scmp.eq.s32.totalorder %s8, 1
    %p95 = por %p93, %p94
    %p96 = scmp.ne.s32.totalorder %s88, %s91
    %p97 = scmp.eq.s32.totalorder %s8, 0
    %p98 = por %p96, %p97
    %p99 = scmp.ne.s32.totalorder %s88, %s91
    %p100 = scmp.eq.s32.totalorder %s13, 1
    %p101 = por %p99, %p100
    %p102 = scmp.ne.s32.totalorder %s91, %s92
    %p103 = scmp.eq.s32.totalorder %s13, 0
    %p104 = por %p102, %p103
    %p105 = scmp.ne.s32.totalorder %s91, %s92
    %p106 = scmp.eq.s32.totalorder %s14, 1
    %p107 = por %p105, %p106
    %p109 = scmp.ne.s32.totalorder %s92, %s108
    %p110 = scmp.eq.s32.totalorder %s14, 0
    %p111 = por %p109, %p110
    %p112 = scmp.le.s32.totalorder 1, %s8
    %p113 = scmp.lt.s32.totalorder %s8, 3
    %p114 = pnand %p112, %p113
    %p115 = pneg %p114
    // Predicated region
    $region9: #{_lambda_.2} parent=5 // pred_check
      _
    $region10: #{_lambda_.2} parent=5 // pred_check_branch
      %117 = sbr.rel (%p114) target = $region12
    $region11: #{_lambda_.2} parent=5 // pred_region
      %s118 = ssub.s32 %s8, 1
    $region12: #{_lambda_.2} parent=5 // pred_fallthru
      _
    %p119 = scmp.lt.s32.totalorder %s8, 2
    // Predicated region
    $region13: #{_lambda_.2} parent=5 // pred_check
      %p120 = pneg %p119
    $region14: #{_lambda_.2} parent=5 // pred_check_branch
      %122 = sbr.rel (%p120) target = $region16
    $region15: #{_lambda_.2} parent=5 // pred_region
      // Predicated region
      $region17: #{_lambda_.2} parent=15 // pred_check
        %p123 = pneg %p42
      $region18: #{_lambda_.2} parent=15 // pred_check_branch
        %125 = sbr.rel (%p123) target = $region20
      $region19: #{_lambda_.2} parent=15 // pred_region
        %p126 = scmp.lt.s32.totalorder %s15, 1
        %s127 = scalar_select %p126, %s15, 1
        %p128 = scmp.lt.s32.totalorder %s16, 0
        %s129 = scalar_select %p128, %s16, 0
        %s130 = smul.addr %s129, 2
        %s131 = smul.addr %s127, 2
        %s132 = sadd.s32 %s130, %s131
        %s133 = smul.addr %s132, 4
        %s134 = scalar_lea.vmem %s0, %s133
      $region20: #{_lambda_.2} parent=15 // pred_fallthru
        _
      // Predicated region
      $region21: #{_lambda_.2} parent=15 // pred_check
        %p135 = pneg %p70
      $region22: #{_lambda_.2} parent=15 // pred_check_branch
        %137 = sbr.rel (%p135) target = $region24
      $region23: #{_lambda_.2} parent=15 // pred_region
        %p138 = scmp.lt.s32.totalorder %s15, 1
        %s139 = scalar_select %p138, %s15, 1
        %p140 = scmp.lt.s32.totalorder %s16, 0
        %s141 = scalar_select %p140, %s16, 0
        %s142 = smul.addr %s141, 2
        %s143 = smul.addr %s139, 384
        %s144 = sadd.s32 %s142, %s143
        %s145 = smul.addr %s144, 4
        %s146 = scalar_lea.vmem %s1, %s145
      $region24: #{_lambda_.2} parent=15 // pred_fallthru
        _
    $region16: #{_lambda_.2} parent=5 // pred_fallthru
      _
    %p147 = scmp.le.s32.totalorder 1, %s8
    %p148 = scmp.lt.s32.totalorder %s8, 3
    %p149 = pnand %p147, %p148
    %p150 = pneg %p149
    // Predicated region
    $region25: #{_lambda_.2} parent=5 // pred_check
      _
    $region26: #{_lambda_.2} parent=5 // pred_check_branch
      %152 = sbr.rel (%p149) target = $region28
    $region27: #{_lambda_.2} parent=5 // pred_region
      %s153 = ssub.s32 %s8, 1
      %p154 = scmp.lt.s32.totalorder %s17, 1
      %s155 = scalar_select %p154, %s17, 1
      %p156 = scmp.lt.s32.totalorder %s18, 0
      %s157 = scalar_select %p156, %s18, 0
      %s158 = smul.addr %s157, 2
      %s159 = smul.addr %s155, 2
      %s160 = sadd.s32 %s158, %s159
      %s161 = smul.addr %s160, 4
      %s162 = scalar_lea.vmem %s0, %s161
      %p163 = pneg %p48
      %p164 = pneg %p45
      %p165 = scmp.lt.s32.totalorder %s17, 1
      %s166 = scalar_select %p165, %s17, 1
      %p167 = scmp.lt.s32.totalorder %s18, 0
      %s168 = scalar_select %p167, %s18, 0
      %s169 = smul.addr %s168, 2
      %s170 = smul.addr %s166, 384
      %s171 = sadd.s32 %s169, %s170
      %s172 = smul.addr %s171, 4
      %s173 = scalar_lea.vmem %s1, %s172
      %p174 = pneg %p76
      %p175 = pneg %p73
      %p176 = pneg %p104
      %p177 = pneg %p101
      %p178 = scmp.lt.s32.totalorder %s17, 1
      %s179 = scalar_select %p178, %s17, 1
      %p180 = scmp.lt.s32.totalorder %s18, 0
      %s181 = scalar_select %p180, %s18, 0
      %s182 = smul.addr %s179, 24
      %s183 = sadd.s32 %s181, %s182
      %s184 = smul.addr %s183, 8
      %s185 = scalar_lea.vmem %s2, %s184
      %p186 = scmp.lt.s32.totalorder %s17, 1
      %s187 = scalar_select %p186, %s17, 1
      %p188 = scmp.lt.s32.totalorder %s18, 0
      %s189 = scalar_select %p188, %s18, 0
      %s190 = smul.addr %s189, 2
      %s191 = smul.addr %s187, 2
      %s192 = sadd.s32 %s190, %s191
      %s193 = smul.addr %s192, 4
      %s194 = scalar_lea.vmem %s0, %s193
      %p195 = scmp.lt.s32.totalorder %s17, 1
      %s196 = scalar_select %p195, %s17, 1
      %p197 = scmp.lt.s32.totalorder %s18, 0
      %s198 = scalar_select %p197, %s18, 0
      %s199 = smul.addr %s198, 2
      %s200 = smul.addr %s196, 384
      %s201 = sadd.s32 %s199, %s200
      %s202 = smul.addr %s201, 4
      %s203 = scalar_lea.vmem %s1, %s202
      %p204 = scmp.lt.s32.totalorder %s17, 1
      %s205 = scalar_select %p204, %s17, 1
      %p206 = scmp.lt.s32.totalorder %s18, 0
      %s207 = scalar_select %p206, %s18, 0
      %s208 = smul.addr %s205, 24
      %s209 = sadd.s32 %s207, %s208
      %s210 = smul.addr %s209, 8
      %s211 = scalar_lea.vmem %s2, %s210
      %v212 = vld [vmem:[%s194] sm:$0xff]
      %v213 = vunpack.c.l.bf16 %v212
      %v214 = vunpack.c.h.bf16 %v212
      %v215 = vld [vmem:[%s203] sm:$0xff]
      %v216 = vld [vmem:[%s203 + $0x8] sm:$0xff]
      %v217 = vld [vmem:[%s203 + $0x10] sm:$0xff]
      %v218 = vld [vmem:[%s203 + $0x18] sm:$0xff]
      %v219 = vld [vmem:[%s203 + $0x20] sm:$0xff]
      %v220 = vld [vmem:[%s203 + $0x28] sm:$0xff]
      %v221 = vld [vmem:[%s203 + $0x30] sm:$0xff]
      %v222 = vld [vmem:[%s203 + $0x38] sm:$0xff]
      %v223 = vld [vmem:[%s203 + $0x40] sm:$0xff]
      %v224 = vld [vmem:[%s203 + $0x48] sm:$0xff]
      %v225 = vld [vmem:[%s203 + $0x50] sm:$0xff]
      %v226 = vld [vmem:[%s203 + $0x58] sm:$0xff]
      %v227 = vld [vmem:[%s203 + $0x60] sm:$0xff]
      %v228 = vld [vmem:[%s203 + $0x68] sm:$0xff]
      %v229 = vld [vmem:[%s203 + $0x70] sm:$0xff]
      %v230 = vld [vmem:[%s203 + $0x78] sm:$0xff]
      %v231 = vunpack.c.l.bf16 %v215
      %v232 = vunpack.c.h.bf16 %v215
      %v233 = vunpack.c.l.bf16 %v216
      %v234 = vunpack.c.h.bf16 %v216
      %v235 = vunpack.c.l.bf16 %v217
      %v236 = vunpack.c.h.bf16 %v217
      %v237 = vunpack.c.l.bf16 %v218
      %v238 = vunpack.c.h.bf16 %v218
      %v239 = vunpack.c.l.bf16 %v219
      %v240 = vunpack.c.h.bf16 %v219
      %v241 = vunpack.c.l.bf16 %v220
      %v242 = vunpack.c.h.bf16 %v220
      %v243 = vunpack.c.l.bf16 %v221
      %v244 = vunpack.c.h.bf16 %v221
      %v245 = vunpack.c.l.bf16 %v222
      %v246 = vunpack.c.h.bf16 %v222
      %v247 = vunpack.c.l.bf16 %v223
      %v248 = vunpack.c.h.bf16 %v223
      %v249 = vunpack.c.l.bf16 %v224
      %v250 = vunpack.c.h.bf16 %v224
      %v251 = vunpack.c.l.bf16 %v225
      %v252 = vunpack.c.h.bf16 %v225
      %v253 = vunpack.c.l.bf16 %v226
      %v254 = vunpack.c.h.bf16 %v226
      %v255 = vunpack.c.l.bf16 %v227
      %v256 = vunpack.c.h.bf16 %v227
      %v257 = vunpack.c.l.bf16 %v228
      %v258 = vunpack.c.h.bf16 %v228
      %v259 = vunpack.c.l.bf16 %v229
      %v260 = vunpack.c.h.bf16 %v229
      %v261 = vunpack.c.l.bf16 %v230
      %v262 = vunpack.c.h.bf16 %v230
      %v263 = vmul.f32 %v231, %v213
      %v264 = vmul.f32 %v232, %v214
      %v265 = vmul.f32 %v233, %v213
      %v266 = vmul.f32 %v234, %v214
      %v267 = vmul.f32 %v235, %v213
      %v268 = vmul.f32 %v236, %v214
      %v269 = vmul.f32 %v237, %v213
      %v270 = vmul.f32 %v238, %v214
      %v271 = vmul.f32 %v239, %v213
      %v272 = vmul.f32 %v240, %v214
      %v273 = vmul.f32 %v241, %v213
      %v274 = vmul.f32 %v242, %v214
      %v275 = vmul.f32 %v243, %v213
      %v276 = vmul.f32 %v244, %v214
      %v277 = vmul.f32 %v245, %v213
      %v278 = vmul.f32 %v246, %v214
      %v279 = vmul.f32 %v247, %v213
      %v280 = vmul.f32 %v248, %v214
      %v281 = vmul.f32 %v249, %v213
      %v282 = vmul.f32 %v250, %v214
      %v283 = vmul.f32 %v251, %v213
      %v284 = vmul.f32 %v252, %v214
      %v285 = vmul.f32 %v253, %v213
      %v286 = vmul.f32 %v254, %v214
      %v287 = vmul.f32 %v255, %v213
      %v288 = vmul.f32 %v256, %v214
      %v289 = vmul.f32 %v257, %v213
      %v290 = vmul.f32 %v258, %v214
      %v291 = vmul.f32 %v259, %v213
      %v292 = vmul.f32 %v260, %v214
      %v293 = vmul.f32 %v261, %v213
      %v294 = vmul.f32 %v262, %v214
      %vm295 = vcmask 556032
      %v296 = vsel %vm295, %v264, 0.0
      %v297 = vadd.f32 %v263, %v296
      %298 = vadd.xlane.f32.xlu0 %v297
      %v299 = vpop.xlane.xlu0 %298
      %v300 = vsel %vm295, %v266, 0.0
      %v301 = vadd.f32 %v265, %v300
      %302 = vadd.xlane.f32.xlu0 %v301
      %v303 = vpop.xlane.xlu0 %302
      %v304 = vsel %vm295, %v268, 0.0
      %v305 = vadd.f32 %v267, %v304
      %306 = vadd.xlane.f32.xlu0 %v305
      %v307 = vpop.xlane.xlu0 %306
      %v308 = vsel %vm295, %v270, 0.0
      %v309 = vadd.f32 %v269, %v308
      %310 = vadd.xlane.f32.xlu0 %v309
      %v311 = vpop.xlane.xlu0 %310
      %v312 = vsel %vm295, %v272, 0.0
      %v313 = vadd.f32 %v271, %v312
      %314 = vadd.xlane.f32.xlu0 %v313
      %v315 = vpop.xlane.xlu0 %314
      %v316 = vsel %vm295, %v274, 0.0
      %v317 = vadd.f32 %v273, %v316
      %318 = vadd.xlane.f32.xlu0 %v317
      %v319 = vpop.xlane.xlu0 %318
      %v320 = vsel %vm295, %v276, 0.0
      %v321 = vadd.f32 %v275, %v320
      %322 = vadd.xlane.f32.xlu0 %v321
      %v323 = vpop.xlane.xlu0 %322
      %v324 = vsel %vm295, %v278, 0.0
      %v325 = vadd.f32 %v277, %v324
      %326 = vadd.xlane.f32.xlu0 %v325
      %v327 = vpop.xlane.xlu0 %326
      %v328 = vsel %vm295, %v280, 0.0
      %v329 = vadd.f32 %v279, %v328
      %330 = vadd.xlane.f32.xlu0 %v329
      %v331 = vpop.xlane.xlu0 %330
      %v332 = vsel %vm295, %v282, 0.0
      %v333 = vadd.f32 %v281, %v332
      %334 = vadd.xlane.f32.xlu0 %v333
      %v335 = vpop.xlane.xlu0 %334
      %v336 = vsel %vm295, %v284, 0.0
      %v337 = vadd.f32 %v283, %v336
      %338 = vadd.xlane.f32.xlu0 %v337
      %v339 = vpop.xlane.xlu0 %338
      %v340 = vsel %vm295, %v286, 0.0
      %v341 = vadd.f32 %v285, %v340
      %342 = vadd.xlane.f32.xlu0 %v341
      %v343 = vpop.xlane.xlu0 %342
      %v344 = vsel %vm295, %v288, 0.0
      %v345 = vadd.f32 %v287, %v344
      %346 = vadd.xlane.f32.xlu0 %v345
      %v347 = vpop.xlane.xlu0 %346
      %v348 = vsel %vm295, %v290, 0.0
      %v349 = vadd.f32 %v289, %v348
      %350 = vadd.xlane.f32.xlu0 %v349
      %v351 = vpop.xlane.xlu0 %350
      %v352 = vsel %vm295, %v292, 0.0
      %v353 = vadd.f32 %v291, %v352
      %354 = vadd.xlane.f32.xlu0 %v353
      %v355 = vpop.xlane.xlu0 %354
      %v356 = vsel %vm295, %v294, 0.0
      %v357 = vadd.f32 %v293, %v356
      %358 = vadd.xlane.f32.xlu0 %v357
      %v359 = vpop.xlane.xlu0 %358
      %v376 = vlaneseq
      %v377 = vand.u32 %v376, 127
      %v378 = vperm.slane %v299, %v377
      %v379 = vperm.slane %v303, %v377
      %v380 = vperm.slane %v307, %v377
      %v381 = vperm.slane %v311, %v377
      %v382 = vperm.slane %v315, %v377
      %v383 = vperm.slane %v319, %v377
      %v384 = vperm.slane %v323, %v377
      %v385 = vperm.slane %v327, %v377
      %v386 = vperm.slane %v331, %v377
      %v387 = vperm.slane %v335, %v377
      %v388 = vperm.slane %v339, %v377
      %v389 = vperm.slane %v343, %v377
      %v390 = vperm.slane %v347, %v377
      %v391 = vperm.slane %v351, %v377
      %v392 = vperm.slane %v355, %v377
      %v393 = vperm.slane %v359, %v377
      %vm394 = vcmask 1041409
      %v395 = vsel %vm394, %v379, %v378
      %vm396 = vcmask 1042434
      %v397 = vsel %vm396, %v380, %v395
      %vm398 = vcmask 1043459
      %v399 = vsel %vm398, %v381, %v397
      %vm400 = vcmask 1044484
      %v401 = vsel %vm400, %v382, %v399
      %vm402 = vcmask 1045509
      %v403 = vsel %vm402, %v383, %v401
      %vm404 = vcmask 1046534
      %v405 = vsel %vm404, %v384, %v403
      %vm406 = vcmask 1047559
      %v407 = vsel %vm406, %v385, %v405
      %v408 = vsel %vm394, %v387, %v386
      %v409 = vsel %vm396, %v388, %v408
      %v410 = vsel %vm398, %v389, %v409
      %v411 = vsel %vm400, %v390, %v410
      %v412 = vsel %vm402, %v391, %v411
      %v413 = vsel %vm404, %v392, %v412
      %v414 = vsel %vm406, %v393, %v413
      %vm417 = vcmask 64512
      %418 = vst.msk [vmem:[%s211] sm:$0xff] %vm417, %v407
      %419 = vst.msk [vmem:[%s211 + $0x8] sm:$0xff] %vm417, %v414
      %s420 = scalar_lea.vmem %s203, 128
      %v421 = vld [vmem:[%s420] sm:$0xff]
      %v422 = vld [vmem:[%s420 + $0x8] sm:$0xff]
      %v423 = vld [vmem:[%s420 + $0x10] sm:$0xff]
      %v424 = vld [vmem:[%s420 + $0x18] sm:$0xff]
      %v425 = vld [vmem:[%s420 + $0x20] sm:$0xff]
      %v426 = vld [vmem:[%s420 + $0x28] sm:$0xff]
      %v427 = vld [vmem:[%s420 + $0x30] sm:$0xff]
      %v428 = vld [vmem:[%s420 + $0x38] sm:$0xff]
      %v429 = vld [vmem:[%s420 + $0x40] sm:$0xff]
      %v430 = vld [vmem:[%s420 + $0x48] sm:$0xff]
      %v431 = vld [vmem:[%s420 + $0x50] sm:$0xff]
      %v432 = vld [vmem:[%s420 + $0x58] sm:$0xff]
      %v433 = vld [vmem:[%s420 + $0x60] sm:$0xff]
      %v434 = vld [vmem:[%s420 + $0x68] sm:$0xff]
      %v435 = vld [vmem:[%s420 + $0x70] sm:$0xff]
      %v436 = vld [vmem:[%s420 + $0x78] sm:$0xff]
      %v437 = vunpack.c.l.bf16 %v421
      %v438 = vunpack.c.h.bf16 %v421
      %v439 = vunpack.c.l.bf16 %v422
      %v440 = vunpack.c.h.bf16 %v422
      %v441 = vunpack.c.l.bf16 %v423
      %v442 = vunpack.c.h.bf16 %v423
      %v443 = vunpack.c.l.bf16 %v424
      %v444 = vunpack.c.h.bf16 %v424
      %v445 = vunpack.c.l.bf16 %v425
      %v446 = vunpack.c.h.bf16 %v425
      %v447 = vunpack.c.l.bf16 %v426
      %v448 = vunpack.c.h.bf16 %v426
      %v449 = vunpack.c.l.bf16 %v427
      %v450 = vunpack.c.h.bf16 %v427
      %v451 = vunpack.c.l.bf16 %v428
      %v452 = vunpack.c.h.bf16 %v428
      %v453 = vunpack.c.l.bf16 %v429
      %v454 = vunpack.c.h.bf16 %v429
      %v455 = vunpack.c.l.bf16 %v430
      %v456 = vunpack.c.h.bf16 %v430
      %v457 = vunpack.c.l.bf16 %v431
      %v458 = vunpack.c.h.bf16 %v431
      %v459 = vunpack.c.l.bf16 %v432
      %v460 = vunpack.c.h.bf16 %v432
      %v461 = vunpack.c.l.bf16 %v433
      %v462 = vunpack.c.h.bf16 %v433
      %v463 = vunpack.c.l.bf16 %v434
      %v464 = vunpack.c.h.bf16 %v434
      %v465 = vunpack.c.l.bf16 %v435
      %v466 = vunpack.c.h.bf16 %v435
      %v467 = vunpack.c.l.bf16 %v436
      %v468 = vunpack.c.h.bf16 %v436
      %v469 = vmul.f32 %v437, %v213
      %v470 = vmul.f32 %v438, %v214
      %v471 = vmul.f32 %v439, %v213
      %v472 = vmul.f32 %v440, %v214
      %v473 = vmul.f32 %v441, %v213
      %v474 = vmul.f32 %v442, %v214
      %v475 = vmul.f32 %v443, %v213
      %v476 = vmul.f32 %v444, %v214
      %v477 = vmul.f32 %v445, %v213
      %v478 = vmul.f32 %v446, %v214
      %v479 = vmul.f32 %v447, %v213
      %v480 = vmul.f32 %v448, %v214
      %v481 = vmul.f32 %v449, %v213
      %v482 = vmul.f32 %v450, %v214
      %v483 = vmul.f32 %v451, %v213
      %v484 = vmul.f32 %v452, %v214
      %v485 = vmul.f32 %v453, %v213
      %v486 = vmul.f32 %v454, %v214
      %v487 = vmul.f32 %v455, %v213
      %v488 = vmul.f32 %v456, %v214
      %v489 = vmul.f32 %v457, %v213
      %v490 = vmul.f32 %v458, %v214
      %v491 = vmul.f32 %v459, %v213
      %v492 = vmul.f32 %v460, %v214
      %v493 = vmul.f32 %v461, %v213
      %v494 = vmul.f32 %v462, %v214
      %v495 = vmul.f32 %v463, %v213
      %v496 = vmul.f32 %v464, %v214
      %v497 = vmul.f32 %v465, %v213
      %v498 = vmul.f32 %v466, %v214
      %v499 = vmul.f32 %v467, %v213
      %v500 = vmul.f32 %v468, %v214
      %v501 = vsel %vm295, %v470, 0.0
      %v502 = vadd.f32 %v469, %v501
      %503 = vadd.xlane.f32.xlu0 %v502
      %v504 = vpop.xlane.xlu0 %503
      %v505 = vsel %vm295, %v472, 0.0
      %v506 = vadd.f32 %v471, %v505
      %507 = vadd.xlane.f32.xlu0 %v506
      %v508 = vpop.xlane.xlu0 %507
      %v509 = vsel %vm295, %v474, 0.0
      %v510 = vadd.f32 %v473, %v509
      %511 = vadd.xlane.f32.xlu0 %v510
      %v512 = vpop.xlane.xlu0 %511
      %v513 = vsel %vm295, %v476, 0.0
      %v514 = vadd.f32 %v475, %v513
      %515 = vadd.xlane.f32.xlu0 %v514
      %v516 = vpop.xlane.xlu0 %515
      %v517 = vsel %vm295, %v478, 0.0
      %v518 = vadd.f32 %v477, %v517
      %519 = vadd.xlane.f32.xlu0 %v518
      %v520 = vpop.xlane.xlu0 %519
      %v521 = vsel %vm295, %v480, 0.0
      %v522 = vadd.f32 %v479, %v521
      %523 = vadd.xlane.f32.xlu0 %v522
      %v524 = vpop.xlane.xlu0 %523
      %v525 = vsel %vm295, %v482, 0.0
      %v526 = vadd.f32 %v481, %v525
      %527 = vadd.xlane.f32.xlu0 %v526
      %v528 = vpop.xlane.xlu0 %527
      %v529 = vsel %vm295, %v484, 0.0
      %v530 = vadd.f32 %v483, %v529
      %531 = vadd.xlane.f32.xlu0 %v530
      %v532 = vpop.xlane.xlu0 %531
      %v533 = vsel %vm295, %v486, 0.0
      %v534 = vadd.f32 %v485, %v533
      %535 = vadd.xlane.f32.xlu0 %v534
      %v536 = vpop.xlane.xlu0 %535
      %v537 = vsel %vm295, %v488, 0.0
      %v538 = vadd.f32 %v487, %v537
      %539 = vadd.xlane.f32.xlu0 %v538
      %v540 = vpop.xlane.xlu0 %539
      %v541 = vsel %vm295, %v490, 0.0
      %v542 = vadd.f32 %v489, %v541
      %543 = vadd.xlane.f32.xlu0 %v542
      %v544 = vpop.xlane.xlu0 %543
      %v545 = vsel %vm295, %v492, 0.0
      %v546 = vadd.f32 %v491, %v545
      %547 = vadd.xlane.f32.xlu0 %v546
      %v548 = vpop.xlane.xlu0 %547
      %v549 = vsel %vm295, %v494, 0.0
      %v550 = vadd.f32 %v493, %v549
      %551 = vadd.xlane.f32.xlu0 %v550
      %v552 = vpop.xlane.xlu0 %551
      %v553 = vsel %vm295, %v496, 0.0
      %v554 = vadd.f32 %v495, %v553
      %555 = vadd.xlane.f32.xlu0 %v554
      %v556 = vpop.xlane.xlu0 %555
      %v557 = vsel %vm295, %v498, 0.0
      %v558 = vadd.f32 %v497, %v557
      %559 = vadd.xlane.f32.xlu0 %v558
      %v560 = vpop.xlane.xlu0 %559
      %v561 = vsel %vm295, %v500, 0.0
      %v562 = vadd.f32 %v499, %v561
      %563 = vadd.xlane.f32.xlu0 %v562
      %v564 = vpop.xlane.xlu0 %563
      %v581 = vperm.slane %v504, %v377
      %v582 = vperm.slane %v508, %v377
      %v583 = vperm.slane %v512, %v377
      %v584 = vperm.slane %v516, %v377
      %v585 = vperm.slane %v520, %v377
      %v586 = vperm.slane %v524, %v377
      %v587 = vperm.slane %v528, %v377
      %v588 = vperm.slane %v532, %v377
      %v589 = vperm.slane %v536, %v377
      %v590 = vperm.slane %v540, %v377
      %v591 = vperm.slane %v544, %v377
      %v592 = vperm.slane %v548, %v377
      %v593 = vperm.slane %v552, %v377
      %v594 = vperm.slane %v556, %v377
      %v595 = vperm.slane %v560, %v377
      %v596 = vperm.slane %v564, %v377
      %v597 = vsel %vm394, %v582, %v581
      %v598 = vsel %vm396, %v583, %v597
      %v599 = vsel %vm398, %v584, %v598
      %v600 = vsel %vm400, %v585, %v599
      %v601 = vsel %vm402, %v586, %v600
      %v602 = vsel %vm404, %v587, %v601
      %v603 = vsel %vm406, %v588, %v602
      %v604 = vsel %vm394, %v590, %v589
      %v605 = vsel %vm396, %v591, %v604
      %v606 = vsel %vm398, %v592, %v605
      %v607 = vsel %vm400, %v593, %v606
      %v608 = vsel %vm402, %v594, %v607
      %v609 = vsel %vm404, %v595, %v608
      %v610 = vsel %vm406, %v596, %v609
      %613 = vst.msk [vmem:[%s211 + $0x10] sm:$0xff] %vm417, %v603
      %614 = vst.msk [vmem:[%s211 + $0x18] sm:$0xff] %vm417, %v610
      %s615 = scalar_lea.vmem %s203, 256
      %v616 = vld [vmem:[%s615] sm:$0xff]
      %v617 = vld [vmem:[%s615 + $0x8] sm:$0xff]
      %v618 = vld [vmem:[%s615 + $0x10] sm:$0xff]
      %v619 = vld [vmem:[%s615 + $0x18] sm:$0xff]
      %v620 = vld [vmem:[%s615 + $0x20] sm:$0xff]
      %v621 = vld [vmem:[%s615 + $0x28] sm:$0xff]
      %v622 = vld [vmem:[%s615 + $0x30] sm:$0xff]
      %v623 = vld [vmem:[%s615 + $0x38] sm:$0xff]
      %v624 = vld [vmem:[%s615 + $0x40] sm:$0xff]
      %v625 = vld [vmem:[%s615 + $0x48] sm:$0xff]
      %v626 = vld [vmem:[%s615 + $0x50] sm:$0xff]
      %v627 = vld [vmem:[%s615 + $0x58] sm:$0xff]
      %v628 = vld [vmem:[%s615 + $0x60] sm:$0xff]
      %v629 = vld [vmem:[%s615 + $0x68] sm:$0xff]
      %v630 = vld [vmem:[%s615 + $0x70] sm:$0xff]
      %v631 = vld [vmem:[%s615 + $0x78] sm:$0xff]
      %v632 = vunpack.c.l.bf16 %v616
      %v633 = vunpack.c.h.bf16 %v616
      %v634 = vunpack.c.l.bf16 %v617
      %v635 = vunpack.c.h.bf16 %v617
      %v636 = vunpack.c.l.bf16 %v618
      %v637 = vunpack.c.h.bf16 %v618
      %v638 = vunpack.c.l.bf16 %v619
      %v639 = vunpack.c.h.bf16 %v619
      %v640 = vunpack.c.l.bf16 %v620
      %v641 = vunpack.c.h.bf16 %v620
      %v642 = vunpack.c.l.bf16 %v621
      %v643 = vunpack.c.h.bf16 %v621
      %v644 = vunpack.c.l.bf16 %v622
      %v645 = vunpack.c.h.bf16 %v622
      %v646 = vunpack.c.l.bf16 %v623
      %v647 = vunpack.c.h.bf16 %v623
      %v648 = vunpack.c.l.bf16 %v624
      %v649 = vunpack.c.h.bf16 %v624
      %v650 = vunpack.c.l.bf16 %v625
      %v651 = vunpack.c.h.bf16 %v625
      %v652 = vunpack.c.l.bf16 %v626
      %v653 = vunpack.c.h.bf16 %v626
      %v654 = vunpack.c.l.bf16 %v627
      %v655 = vunpack.c.h.bf16 %v627
      %v656 = vunpack.c.l.bf16 %v628
      %v657 = vunpack.c.h.bf16 %v628
      %v658 = vunpack.c.l.bf16 %v629
      %v659 = vunpack.c.h.bf16 %v629
      %v660 = vunpack.c.l.bf16 %v630
      %v661 = vunpack.c.h.bf16 %v630
      %v662 = vunpack.c.l.bf16 %v631
      %v663 = vunpack.c.h.bf16 %v631
      %v664 = vmul.f32 %v632, %v213
      %v665 = vmul.f32 %v633, %v214
      %v666 = vmul.f32 %v634, %v213
      %v667 = vmul.f32 %v635, %v214
      %v668 = vmul.f32 %v636, %v213
      %v669 = vmul.f32 %v637, %v214
      %v670 = vmul.f32 %v638, %v213
      %v671 = vmul.f32 %v639, %v214
      %v672 = vmul.f32 %v640, %v213
      %v673 = vmul.f32 %v641, %v214
      %v674 = vmul.f32 %v642, %v213
      %v675 = vmul.f32 %v643, %v214
      %v676 = vmul.f32 %v644, %v213
      %v677 = vmul.f32 %v645, %v214
      %v678 = vmul.f32 %v646, %v213
      %v679 = vmul.f32 %v647, %v214
      %v680 = vmul.f32 %v648, %v213
      %v681 = vmul.f32 %v649, %v214
      %v682 = vmul.f32 %v650, %v213
      %v683 = vmul.f32 %v651, %v214
      %v684 = vmul.f32 %v652, %v213
      %v685 = vmul.f32 %v653, %v214
      %v686 = vmul.f32 %v654, %v213
      %v687 = vmul.f32 %v655, %v214
      %v688 = vmul.f32 %v656, %v213
      %v689 = vmul.f32 %v657, %v214
      %v690 = vmul.f32 %v658, %v213
      %v691 = vmul.f32 %v659, %v214
      %v692 = vmul.f32 %v660, %v213
      %v693 = vmul.f32 %v661, %v214
      %v694 = vmul.f32 %v662, %v213
      %v695 = vmul.f32 %v663, %v214
      %v696 = vsel %vm295, %v665, 0.0
      %v697 = vadd.f32 %v664, %v696
      %698 = vadd.xlane.f32.xlu0 %v697
      %v699 = vpop.xlane.xlu0 %698
      %v700 = vsel %vm295, %v667, 0.0
      %v701 = vadd.f32 %v666, %v700
      %702 = vadd.xlane.f32.xlu0 %v701
      %v703 = vpop.xlane.xlu0 %702
      %v704 = vsel %vm295, %v669, 0.0
      %v705 = vadd.f32 %v668, %v704
      %706 = vadd.xlane.f32.xlu0 %v705
      %v707 = vpop.xlane.xlu0 %706
      %v708 = vsel %vm295, %v671, 0.0
      %v709 = vadd.f32 %v670, %v708
      %710 = vadd.xlane.f32.xlu0 %v709
      %v711 = vpop.xlane.xlu0 %710
      %v712 = vsel %vm295, %v673, 0.0
      %v713 = vadd.f32 %v672, %v712
      %714 = vadd.xlane.f32.xlu0 %v713
      %v715 = vpop.xlane.xlu0 %714
      %v716 = vsel %vm295, %v675, 0.0
      %v717 = vadd.f32 %v674, %v716
      %718 = vadd.xlane.f32.xlu0 %v717
      %v719 = vpop.xlane.xlu0 %718
      %v720 = vsel %vm295, %v677, 0.0
      %v721 = vadd.f32 %v676, %v720
      %722 = vadd.xlane.f32.xlu0 %v721
      %v723 = vpop.xlane.xlu0 %722
      %v724 = vsel %vm295, %v679, 0.0
      %v725 = vadd.f32 %v678, %v724
      %726 = vadd.xlane.f32.xlu0 %v725
      %v727 = vpop.xlane.xlu0 %726
      %v728 = vsel %vm295, %v681, 0.0
      %v729 = vadd.f32 %v680, %v728
      %730 = vadd.xlane.f32.xlu0 %v729
      %v731 = vpop.xlane.xlu0 %730
      %v732 = vsel %vm295, %v683, 0.0
      %v733 = vadd.f32 %v682, %v732
      %734 = vadd.xlane.f32.xlu0 %v733
      %v735 = vpop.xlane.xlu0 %734
      %v736 = vsel %vm295, %v685, 0.0
      %v737 = vadd.f32 %v684, %v736
      %738 = vadd.xlane.f32.xlu0 %v737
      %v739 = vpop.xlane.xlu0 %738
      %v740 = vsel %vm295, %v687, 0.0
      %v741 = vadd.f32 %v686, %v740
      %742 = vadd.xlane.f32.xlu0 %v741
      %v743 = vpop.xlane.xlu0 %742
      %v744 = vsel %vm295, %v689, 0.0
      %v745 = vadd.f32 %v688, %v744
      %746 = vadd.xlane.f32.xlu0 %v745
      %v747 = vpop.xlane.xlu0 %746
      %v748 = vsel %vm295, %v691, 0.0
      %v749 = vadd.f32 %v690, %v748
      %750 = vadd.xlane.f32.xlu0 %v749
      %v751 = vpop.xlane.xlu0 %750
      %v752 = vsel %vm295, %v693, 0.0
      %v753 = vadd.f32 %v692, %v752
      %754 = vadd.xlane.f32.xlu0 %v753
      %v755 = vpop.xlane.xlu0 %754
      %v756 = vsel %vm295, %v695, 0.0
      %v757 = vadd.f32 %v694, %v756
      %758 = vadd.xlane.f32.xlu0 %v757
      %v759 = vpop.xlane.xlu0 %758
      %v776 = vperm.slane %v699, %v377
      %v777 = vperm.slane %v703, %v377
      %v778 = vperm.slane %v707, %v377
      %v779 = vperm.slane %v711, %v377
      %v780 = vperm.slane %v715, %v377
      %v781 = vperm.slane %v719, %v377
      %v782 = vperm.slane %v723, %v377
      %v783 = vperm.slane %v727, %v377
      %v784 = vperm.slane %v731, %v377
      %v785 = vperm.slane %v735, %v377
      %v786 = vperm.slane %v739, %v377
      %v787 = vperm.slane %v743, %v377
      %v788 = vperm.slane %v747, %v377
      %v789 = vperm.slane %v751, %v377
      %v790 = vperm.slane %v755, %v377
      %v791 = vperm.slane %v759, %v377
      %v792 = vsel %vm394, %v777, %v776
      %v793 = vsel %vm396, %v778, %v792
      %v794 = vsel %vm398, %v779, %v793
      %v795 = vsel %vm400, %v780, %v794
      %v796 = vsel %vm402, %v781, %v795
      %v797 = vsel %vm404, %v782, %v796
      %v798 = vsel %vm406, %v783, %v797
      %v799 = vsel %vm394, %v785, %v784
      %v800 = vsel %vm396, %v786, %v799
      %v801 = vsel %vm398, %v787, %v800
      %v802 = vsel %vm400, %v788, %v801
      %v803 = vsel %vm402, %v789, %v802
      %v804 = vsel %vm404, %v790, %v803
      %v805 = vsel %vm406, %v791, %v804
      %808 = vst.msk [vmem:[%s211 + $0x20] sm:$0xff] %vm417, %v798
      %809 = vst.msk [vmem:[%s211 + $0x28] sm:$0xff] %vm417, %v805
      %s810 = scalar_lea.vmem %s203, 384
      %v811 = vld [vmem:[%s810] sm:$0xff]
      %v812 = vld [vmem:[%s810 + $0x8] sm:$0xff]
      %v813 = vld [vmem:[%s810 + $0x10] sm:$0xff]
      %v814 = vld [vmem:[%s810 + $0x18] sm:$0xff]
      %v815 = vld [vmem:[%s810 + $0x20] sm:$0xff]
      %v816 = vld [vmem:[%s810 + $0x28] sm:$0xff]
      %v817 = vld [vmem:[%s810 + $0x30] sm:$0xff]
      %v818 = vld [vmem:[%s810 + $0x38] sm:$0xff]
      %v819 = vld [vmem:[%s810 + $0x40] sm:$0xff]
      %v820 = vld [vmem:[%s810 + $0x48] sm:$0xff]
      %v821 = vld [vmem:[%s810 + $0x50] sm:$0xff]
      %v822 = vld [vmem:[%s810 + $0x58] sm:$0xff]
      %v823 = vld [vmem:[%s810 + $0x60] sm:$0xff]
      %v824 = vld [vmem:[%s810 + $0x68] sm:$0xff]
      %v825 = vld [vmem:[%s810 + $0x70] sm:$0xff]
      %v826 = vld [vmem:[%s810 + $0x78] sm:$0xff]
      %v827 = vunpack.c.l.bf16 %v811
      %v828 = vunpack.c.h.bf16 %v811
      %v829 = vunpack.c.l.bf16 %v812
      %v830 = vunpack.c.h.bf16 %v812
      %v831 = vunpack.c.l.bf16 %v813
      %v832 = vunpack.c.h.bf16 %v813
      %v833 = vunpack.c.l.bf16 %v814
      %v834 = vunpack.c.h.bf16 %v814
      %v835 = vunpack.c.l.bf16 %v815
      %v836 = vunpack.c.h.bf16 %v815
      %v837 = vunpack.c.l.bf16 %v816
      %v838 = vunpack.c.h.bf16 %v816
      %v839 = vunpack.c.l.bf16 %v817
      %v840 = vunpack.c.h.bf16 %v817
      %v841 = vunpack.c.l.bf16 %v818
      %v842 = vunpack.c.h.bf16 %v818
      %v843 = vunpack.c.l.bf16 %v819
      %v844 = vunpack.c.h.bf16 %v819
      %v845 = vunpack.c.l.bf16 %v820
      %v846 = vunpack.c.h.bf16 %v820
      %v847 = vunpack.c.l.bf16 %v821
      %v848 = vunpack.c.h.bf16 %v821
      %v849 = vunpack.c.l.bf16 %v822
      %v850 = vunpack.c.h.bf16 %v822
      %v851 = vunpack.c.l.bf16 %v823
      %v852 = vunpack.c.h.bf16 %v823
      %v853 = vunpack.c.l.bf16 %v824
      %v854 = vunpack.c.h.bf16 %v824
      %v855 = vunpack.c.l.bf16 %v825
      %v856 = vunpack.c.h.bf16 %v825
      %v857 = vunpack.c.l.bf16 %v826
      %v858 = vunpack.c.h.bf16 %v826
      %v859 = vmul.f32 %v827, %v213
      %v860 = vmul.f32 %v828, %v214
      %v861 = vmul.f32 %v829, %v213
      %v862 = vmul.f32 %v830, %v214
      %v863 = vmul.f32 %v831, %v213
      %v864 = vmul.f32 %v832, %v214
      %v865 = vmul.f32 %v833, %v213
      %v866 = vmul.f32 %v834, %v214
      %v867 = vmul.f32 %v835, %v213
      %v868 = vmul.f32 %v836, %v214
      %v869 = vmul.f32 %v837, %v213
      %v870 = vmul.f32 %v838, %v214
      %v871 = vmul.f32 %v839, %v213
      %v872 = vmul.f32 %v840, %v214
      %v873 = vmul.f32 %v841, %v213
      %v874 = vmul.f32 %v842, %v214
      %v875 = vmul.f32 %v843, %v213
      %v876 = vmul.f32 %v844, %v214
      %v877 = vmul.f32 %v845, %v213
      %v878 = vmul.f32 %v846, %v214
      %v879 = vmul.f32 %v847, %v213
      %v880 = vmul.f32 %v848, %v214
      %v881 = vmul.f32 %v849, %v213
      %v882 = vmul.f32 %v850, %v214
      %v883 = vmul.f32 %v851, %v213
      %v884 = vmul.f32 %v852, %v214
      %v885 = vmul.f32 %v853, %v213
      %v886 = vmul.f32 %v854, %v214
      %v887 = vmul.f32 %v855, %v213
      %v888 = vmul.f32 %v856, %v214
      %v889 = vmul.f32 %v857, %v213
      %v890 = vmul.f32 %v858, %v214
      %v891 = vsel %vm295, %v860, 0.0
      %v892 = vadd.f32 %v859, %v891
      %893 = vadd.xlane.f32.xlu0 %v892
      %v894 = vpop.xlane.xlu0 %893
      %v895 = vsel %vm295, %v862, 0.0
      %v896 = vadd.f32 %v861, %v895
      %897 = vadd.xlane.f32.xlu0 %v896
      %v898 = vpop.xlane.xlu0 %897
      %v899 = vsel %vm295, %v864, 0.0
      %v900 = vadd.f32 %v863, %v899
      %901 = vadd.xlane.f32.xlu0 %v900
      %v902 = vpop.xlane.xlu0 %901
      %v903 = vsel %vm295, %v866, 0.0
      %v904 = vadd.f32 %v865, %v903
      %905 = vadd.xlane.f32.xlu0 %v904
      %v906 = vpop.xlane.xlu0 %905
      %v907 = vsel %vm295, %v868, 0.0
      %v908 = vadd.f32 %v867, %v907
      %909 = vadd.xlane.f32.xlu0 %v908
      %v910 = vpop.xlane.xlu0 %909
      %v911 = vsel %vm295, %v870, 0.0
      %v912 = vadd.f32 %v869, %v911
      %913 = vadd.xlane.f32.xlu0 %v912
      %v914 = vpop.xlane.xlu0 %913
      %v915 = vsel %vm295, %v872, 0.0
      %v916 = vadd.f32 %v871, %v915
      %917 = vadd.xlane.f32.xlu0 %v916
      %v918 = vpop.xlane.xlu0 %917
      %v919 = vsel %vm295, %v874, 0.0
      %v920 = vadd.f32 %v873, %v919
      %921 = vadd.xlane.f32.xlu0 %v920
      %v922 = vpop.xlane.xlu0 %921
      %v923 = vsel %vm295, %v876, 0.0
      %v924 = vadd.f32 %v875, %v923
      %925 = vadd.xlane.f32.xlu0 %v924
      %v926 = vpop.xlane.xlu0 %925
      %v927 = vsel %vm295, %v878, 0.0
      %v928 = vadd.f32 %v877, %v927
      %929 = vadd.xlane.f32.xlu0 %v928
      %v930 = vpop.xlane.xlu0 %929
      %v931 = vsel %vm295, %v880, 0.0
      %v932 = vadd.f32 %v879, %v931
      %933 = vadd.xlane.f32.xlu0 %v932
      %v934 = vpop.xlane.xlu0 %933
      %v935 = vsel %vm295, %v882, 0.0
      %v936 = vadd.f32 %v881, %v935
      %937 = vadd.xlane.f32.xlu0 %v936
      %v938 = vpop.xlane.xlu0 %937
      %v939 = vsel %vm295, %v884, 0.0
      %v940 = vadd.f32 %v883, %v939
      %941 = vadd.xlane.f32.xlu0 %v940
      %v942 = vpop.xlane.xlu0 %941
      %v943 = vsel %vm295, %v886, 0.0
      %v944 = vadd.f32 %v885, %v943
      %945 = vadd.xlane.f32.xlu0 %v944
      %v946 = vpop.xlane.xlu0 %945
      %v947 = vsel %vm295, %v888, 0.0
      %v948 = vadd.f32 %v887, %v947
      %949 = vadd.xlane.f32.xlu0 %v948
      %v950 = vpop.xlane.xlu0 %949
      %v951 = vsel %vm295, %v890, 0.0
      %v952 = vadd.f32 %v889, %v951
      %953 = vadd.xlane.f32.xlu0 %v952
      %v954 = vpop.xlane.xlu0 %953
      %v971 = vperm.slane %v894, %v377
      %v972 = vperm.slane %v898, %v377
      %v973 = vperm.slane %v902, %v377
      %v974 = vperm.slane %v906, %v377
      %v975 = vperm.slane %v910, %v377
      %v976 = vperm.slane %v914, %v377
      %v977 = vperm.slane %v918, %v377
      %v978 = vperm.slane %v922, %v377
      %v979 = vperm.slane %v926, %v377
      %v980 = vperm.slane %v930, %v377
      %v981 = vperm.slane %v934, %v377
      %v982 = vperm.slane %v938, %v377
      %v983 = vperm.slane %v942, %v377
      %v984 = vperm.slane %v946, %v377
      %v985 = vperm.slane %v950, %v377
      %v986 = vperm.slane %v954, %v377
      %v987 = vsel %vm394, %v972, %v971
      %v988 = vsel %vm396, %v973, %v987
      %v989 = vsel %vm398, %v974, %v988
      %v990 = vsel %vm400, %v975, %v989
      %v991 = vsel %vm402, %v976, %v990
      %v992 = vsel %vm404, %v977, %v991
      %v993 = vsel %vm406, %v978, %v992
      %v994 = vsel %vm394, %v980, %v979
      %v995 = vsel %vm396, %v981, %v994
      %v996 = vsel %vm398, %v982, %v995
      %v997 = vsel %vm400, %v983, %v996
      %v998 = vsel %vm402, %v984, %v997
      %v999 = vsel %vm404, %v985, %v998
      %v1000 = vsel %vm406, %v986, %v999
      %1003 = vst.msk [vmem:[%s211 + $0x30] sm:$0xff] %vm417, %v993
      %1004 = vst.msk [vmem:[%s211 + $0x38] sm:$0xff] %vm417, %v1000
      %s1005 = scalar_lea.vmem %s203, 512
      %v1006 = vld [vmem:[%s1005] sm:$0xff]
      %v1007 = vld [vmem:[%s1005 + $0x8] sm:$0xff]
      %v1008 = vld [vmem:[%s1005 + $0x10] sm:$0xff]
      %v1009 = vld [vmem:[%s1005 + $0x18] sm:$0xff]
      %v1010 = vld [vmem:[%s1005 + $0x20] sm:$0xff]
      %v1011 = vld [vmem:[%s1005 + $0x28] sm:$0xff]
      %v1012 = vld [vmem:[%s1005 + $0x30] sm:$0xff]
      %v1013 = vld [vmem:[%s1005 + $0x38] sm:$0xff]
      %v1014 = vld [vmem:[%s1005 + $0x40] sm:$0xff]
      %v1015 = vld [vmem:[%s1005 + $0x48] sm:$0xff]
      %v1016 = vld [vmem:[%s1005 + $0x50] sm:$0xff]
      %v1017 = vld [vmem:[%s1005 + $0x58] sm:$0xff]
      %v1018 = vld [vmem:[%s1005 + $0x60] sm:$0xff]
      %v1019 = vld [vmem:[%s1005 + $0x68] sm:$0xff]
      %v1020 = vld [vmem:[%s1005 + $0x70] sm:$0xff]
      %v1021 = vld [vmem:[%s1005 + $0x78] sm:$0xff]
      %v1022 = vunpack.c.l.bf16 %v1006
      %v1023 = vunpack.c.h.bf16 %v1006
      %v1024 = vunpack.c.l.bf16 %v1007
      %v1025 = vunpack.c.h.bf16 %v1007
      %v1026 = vunpack.c.l.bf16 %v1008
      %v1027 = vunpack.c.h.bf16 %v1008
      %v1028 = vunpack.c.l.bf16 %v1009
      %v1029 = vunpack.c.h.bf16 %v1009
      %v1030 = vunpack.c.l.bf16 %v1010
      %v1031 = vunpack.c.h.bf16 %v1010
      %v1032 = vunpack.c.l.bf16 %v1011
      %v1033 = vunpack.c.h.bf16 %v1011
      %v1034 = vunpack.c.l.bf16 %v1012
      %v1035 = vunpack.c.h.bf16 %v1012
      %v1036 = vunpack.c.l.bf16 %v1013
      %v1037 = vunpack.c.h.bf16 %v1013
      %v1038 = vunpack.c.l.bf16 %v1014
      %v1039 = vunpack.c.h.bf16 %v1014
      %v1040 = vunpack.c.l.bf16 %v1015
      %v1041 = vunpack.c.h.bf16 %v1015
      %v1042 = vunpack.c.l.bf16 %v1016
      %v1043 = vunpack.c.h.bf16 %v1016
      %v1044 = vunpack.c.l.bf16 %v1017
      %v1045 = vunpack.c.h.bf16 %v1017
      %v1046 = vunpack.c.l.bf16 %v1018
      %v1047 = vunpack.c.h.bf16 %v1018
      %v1048 = vunpack.c.l.bf16 %v1019
      %v1049 = vunpack.c.h.bf16 %v1019
      %v1050 = vunpack.c.l.bf16 %v1020
      %v1051 = vunpack.c.h.bf16 %v1020
      %v1052 = vunpack.c.l.bf16 %v1021
      %v1053 = vunpack.c.h.bf16 %v1021
      %v1054 = vmul.f32 %v1022, %v213
      %v1055 = vmul.f32 %v1023, %v214
      %v1056 = vmul.f32 %v1024, %v213
      %v1057 = vmul.f32 %v1025, %v214
      %v1058 = vmul.f32 %v1026, %v213
      %v1059 = vmul.f32 %v1027, %v214
      %v1060 = vmul.f32 %v1028, %v213
      %v1061 = vmul.f32 %v1029, %v214
      %v1062 = vmul.f32 %v1030, %v213
      %v1063 = vmul.f32 %v1031, %v214
      %v1064 = vmul.f32 %v1032, %v213
      %v1065 = vmul.f32 %v1033, %v214
      %v1066 = vmul.f32 %v1034, %v213
      %v1067 = vmul.f32 %v1035, %v214
      %v1068 = vmul.f32 %v1036, %v213
      %v1069 = vmul.f32 %v1037, %v214
      %v1070 = vmul.f32 %v1038, %v213
      %v1071 = vmul.f32 %v1039, %v214
      %v1072 = vmul.f32 %v1040, %v213
      %v1073 = vmul.f32 %v1041, %v214
      %v1074 = vmul.f32 %v1042, %v213
      %v1075 = vmul.f32 %v1043, %v214
      %v1076 = vmul.f32 %v1044, %v213
      %v1077 = vmul.f32 %v1045, %v214
      %v1078 = vmul.f32 %v1046, %v213
      %v1079 = vmul.f32 %v1047, %v214
      %v1080 = vmul.f32 %v1048, %v213
      %v1081 = vmul.f32 %v1049, %v214
      %v1082 = vmul.f32 %v1050, %v213
      %v1083 = vmul.f32 %v1051, %v214
      %v1084 = vmul.f32 %v1052, %v213
      %v1085 = vmul.f32 %v1053, %v214
      %v1086 = vsel %vm295, %v1055, 0.0
      %v1087 = vadd.f32 %v1054, %v1086
      %1088 = vadd.xlane.f32.xlu0 %v1087
      %v1089 = vpop.xlane.xlu0 %1088
      %v1090 = vsel %vm295, %v1057, 0.0
      %v1091 = vadd.f32 %v1056, %v1090
      %1092 = vadd.xlane.f32.xlu0 %v1091
      %v1093 = vpop.xlane.xlu0 %1092
      %v1094 = vsel %vm295, %v1059, 0.0
      %v1095 = vadd.f32 %v1058, %v1094
      %1096 = vadd.xlane.f32.xlu0 %v1095
      %v1097 = vpop.xlane.xlu0 %1096
      %v1098 = vsel %vm295, %v1061, 0.0
      %v1099 = vadd.f32 %v1060, %v1098
      %1100 = vadd.xlane.f32.xlu0 %v1099
      %v1101 = vpop.xlane.xlu0 %1100
      %v1102 = vsel %vm295, %v1063, 0.0
      %v1103 = vadd.f32 %v1062, %v1102
      %1104 = vadd.xlane.f32.xlu0 %v1103
      %v1105 = vpop.xlane.xlu0 %1104
      %v1106 = vsel %vm295, %v1065, 0.0
      %v1107 = vadd.f32 %v1064, %v1106
      %1108 = vadd.xlane.f32.xlu0 %v1107
      %v1109 = vpop.xlane.xlu0 %1108
      %v1110 = vsel %vm295, %v1067, 0.0
      %v1111 = vadd.f32 %v1066, %v1110
      %1112 = vadd.xlane.f32.xlu0 %v1111
      %v1113 = vpop.xlane.xlu0 %1112
      %v1114 = vsel %vm295, %v1069, 0.0
      %v1115 = vadd.f32 %v1068, %v1114
      %1116 = vadd.xlane.f32.xlu0 %v1115
      %v1117 = vpop.xlane.xlu0 %1116
      %v1118 = vsel %vm295, %v1071, 0.0
      %v1119 = vadd.f32 %v1070, %v1118
      %1120 = vadd.xlane.f32.xlu0 %v1119
      %v1121 = vpop.xlane.xlu0 %1120
      %v1122 = vsel %vm295, %v1073, 0.0
      %v1123 = vadd.f32 %v1072, %v1122
      %1124 = vadd.xlane.f32.xlu0 %v1123
      %v1125 = vpop.xlane.xlu0 %1124
      %v1126 = vsel %vm295, %v1075, 0.0
      %v1127 = vadd.f32 %v1074, %v1126
      %1128 = vadd.xlane.f32.xlu0 %v1127
      %v1129 = vpop.xlane.xlu0 %1128
      %v1130 = vsel %vm295, %v1077, 0.0
      %v1131 = vadd.f32 %v1076, %v1130
      %1132 = vadd.xlane.f32.xlu0 %v1131
      %v1133 = vpop.xlane.xlu0 %1132
      %v1134 = vsel %vm295, %v1079, 0.0
      %v1135 = vadd.f32 %v1078, %v1134
      %1136 = vadd.xlane.f32.xlu0 %v1135
      %v1137 = vpop.xlane.xlu0 %1136
      %v1138 = vsel %vm295, %v1081, 0.0
      %v1139 = vadd.f32 %v1080, %v1138
      %1140 = vadd.xlane.f32.xlu0 %v1139
      %v1141 = vpop.xlane.xlu0 %1140
      %v1142 = vsel %vm295, %v1083, 0.0
      %v1143 = vadd.f32 %v1082, %v1142
      %1144 = vadd.xlane.f32.xlu0 %v1143
      %v1145 = vpop.xlane.xlu0 %1144
      %v1146 = vsel %vm295, %v1085, 0.0
      %v1147 = vadd.f32 %v1084, %v1146
      %1148 = vadd.xlane.f32.xlu0 %v1147
      %v1149 = vpop.xlane.xlu0 %1148
      %v1166 = vperm.slane %v1089, %v377
      %v1167 = vperm.slane %v1093, %v377
      %v1168 = vperm.slane %v1097, %v377
      %v1169 = vperm.slane %v1101, %v377
      %v1170 = vperm.slane %v1105, %v377
      %v1171 = vperm.slane %v1109, %v377
      %v1172 = vperm.slane %v1113, %v377
      %v1173 = vperm.slane %v1117, %v377
      %v1174 = vperm.slane %v1121, %v377
      %v1175 = vperm.slane %v1125, %v377
      %v1176 = vperm.slane %v1129, %v377
      %v1177 = vperm.slane %v1133, %v377
      %v1178 = vperm.slane %v1137, %v377
      %v1179 = vperm.slane %v1141, %v377
      %v1180 = vperm.slane %v1145, %v377
      %v1181 = vperm.slane %v1149, %v377
      %v1182 = vsel %vm394, %v1167, %v1166
      %v1183 = vsel %vm396, %v1168, %v1182
      %v1184 = vsel %vm398, %v1169, %v1183
      %v1185 = vsel %vm400, %v1170, %v1184
      %v1186 = vsel %vm402, %v1171, %v1185
      %v1187 = vsel %vm404, %v1172, %v1186
      %v1188 = vsel %vm406, %v1173, %v1187
      %v1189 = vsel %vm394, %v1175, %v1174
      %v1190 = vsel %vm396, %v1176, %v1189
      %v1191 = vsel %vm398, %v1177, %v1190
      %v1192 = vsel %vm400, %v1178, %v1191
      %v1193 = vsel %vm402, %v1179, %v1192
      %v1194 = vsel %vm404, %v1180, %v1193
      %v1195 = vsel %vm406, %v1181, %v1194
      %1198 = vst.msk [vmem:[%s211 + $0x40] sm:$0xff] %vm417, %v1188
      %1199 = vst.msk [vmem:[%s211 + $0x48] sm:$0xff] %vm417, %v1195
      %s1200 = scalar_lea.vmem %s203, 640
      %v1201 = vld [vmem:[%s1200] sm:$0xff]
      %v1202 = vld [vmem:[%s1200 + $0x8] sm:$0xff]
      %v1203 = vld [vmem:[%s1200 + $0x10] sm:$0xff]
      %v1204 = vld [vmem:[%s1200 + $0x18] sm:$0xff]
      %v1205 = vld [vmem:[%s1200 + $0x20] sm:$0xff]
      %v1206 = vld [vmem:[%s1200 + $0x28] sm:$0xff]
      %v1207 = vld [vmem:[%s1200 + $0x30] sm:$0xff]
      %v1208 = vld [vmem:[%s1200 + $0x38] sm:$0xff]
      %v1209 = vld [vmem:[%s1200 + $0x40] sm:$0xff]
      %v1210 = vld [vmem:[%s1200 + $0x48] sm:$0xff]
      %v1211 = vld [vmem:[%s1200 + $0x50] sm:$0xff]
      %v1212 = vld [vmem:[%s1200 + $0x58] sm:$0xff]
      %v1213 = vld [vmem:[%s1200 + $0x60] sm:$0xff]
      %v1214 = vld [vmem:[%s1200 + $0x68] sm:$0xff]
      %v1215 = vld [vmem:[%s1200 + $0x70] sm:$0xff]
      %v1216 = vld [vmem:[%s1200 + $0x78] sm:$0xff]
      %v1217 = vunpack.c.l.bf16 %v1201
      %v1218 = vunpack.c.h.bf16 %v1201
      %v1219 = vunpack.c.l.bf16 %v1202
      %v1220 = vunpack.c.h.bf16 %v1202
      %v1221 = vunpack.c.l.bf16 %v1203
      %v1222 = vunpack.c.h.bf16 %v1203
      %v1223 = vunpack.c.l.bf16 %v1204
      %v1224 = vunpack.c.h.bf16 %v1204
      %v1225 = vunpack.c.l.bf16 %v1205
      %v1226 = vunpack.c.h.bf16 %v1205
      %v1227 = vunpack.c.l.bf16 %v1206
      %v1228 = vunpack.c.h.bf16 %v1206
      %v1229 = vunpack.c.l.bf16 %v1207
      %v1230 = vunpack.c.h.bf16 %v1207
      %v1231 = vunpack.c.l.bf16 %v1208
      %v1232 = vunpack.c.h.bf16 %v1208
      %v1233 = vunpack.c.l.bf16 %v1209
      %v1234 = vunpack.c.h.bf16 %v1209
      %v1235 = vunpack.c.l.bf16 %v1210
      %v1236 = vunpack.c.h.bf16 %v1210
      %v1237 = vunpack.c.l.bf16 %v1211
      %v1238 = vunpack.c.h.bf16 %v1211
      %v1239 = vunpack.c.l.bf16 %v1212
      %v1240 = vunpack.c.h.bf16 %v1212
      %v1241 = vunpack.c.l.bf16 %v1213
      %v1242 = vunpack.c.h.bf16 %v1213
      %v1243 = vunpack.c.l.bf16 %v1214
      %v1244 = vunpack.c.h.bf16 %v1214
      %v1245 = vunpack.c.l.bf16 %v1215
      %v1246 = vunpack.c.h.bf16 %v1215
      %v1247 = vunpack.c.l.bf16 %v1216
      %v1248 = vunpack.c.h.bf16 %v1216
      %v1249 = vmul.f32 %v1217, %v213
      %v1250 = vmul.f32 %v1218, %v214
      %v1251 = vmul.f32 %v1219, %v213
      %v1252 = vmul.f32 %v1220, %v214
      %v1253 = vmul.f32 %v1221, %v213
      %v1254 = vmul.f32 %v1222, %v214
      %v1255 = vmul.f32 %v1223, %v213
      %v1256 = vmul.f32 %v1224, %v214
      %v1257 = vmul.f32 %v1225, %v213
      %v1258 = vmul.f32 %v1226, %v214
      %v1259 = vmul.f32 %v1227, %v213
      %v1260 = vmul.f32 %v1228, %v214
      %v1261 = vmul.f32 %v1229, %v213
      %v1262 = vmul.f32 %v1230, %v214
      %v1263 = vmul.f32 %v1231, %v213
      %v1264 = vmul.f32 %v1232, %v214
      %v1265 = vmul.f32 %v1233, %v213
      %v1266 = vmul.f32 %v1234, %v214
      %v1267 = vmul.f32 %v1235, %v213
      %v1268 = vmul.f32 %v1236, %v214
      %v1269 = vmul.f32 %v1237, %v213
      %v1270 = vmul.f32 %v1238, %v214
      %v1271 = vmul.f32 %v1239, %v213
      %v1272 = vmul.f32 %v1240, %v214
      %v1273 = vmul.f32 %v1241, %v213
      %v1274 = vmul.f32 %v1242, %v214
      %v1275 = vmul.f32 %v1243, %v213
      %v1276 = vmul.f32 %v1244, %v214
      %v1277 = vmul.f32 %v1245, %v213
      %v1278 = vmul.f32 %v1246, %v214
      %v1279 = vmul.f32 %v1247, %v213
      %v1280 = vmul.f32 %v1248, %v214
      %v1281 = vsel %vm295, %v1250, 0.0
      %v1282 = vadd.f32 %v1249, %v1281
      %1283 = vadd.xlane.f32.xlu0 %v1282
      %v1284 = vpop.xlane.xlu0 %1283
      %v1285 = vsel %vm295, %v1252, 0.0
      %v1286 = vadd.f32 %v1251, %v1285
      %1287 = vadd.xlane.f32.xlu0 %v1286
      %v1288 = vpop.xlane.xlu0 %1287
      %v1289 = vsel %vm295, %v1254, 0.0
      %v1290 = vadd.f32 %v1253, %v1289
      %1291 = vadd.xlane.f32.xlu0 %v1290
      %v1292 = vpop.xlane.xlu0 %1291
      %v1293 = vsel %vm295, %v1256, 0.0
      %v1294 = vadd.f32 %v1255, %v1293
      %1295 = vadd.xlane.f32.xlu0 %v1294
      %v1296 = vpop.xlane.xlu0 %1295
      %v1297 = vsel %vm295, %v1258, 0.0
      %v1298 = vadd.f32 %v1257, %v1297
      %1299 = vadd.xlane.f32.xlu0 %v1298
      %v1300 = vpop.xlane.xlu0 %1299
      %v1301 = vsel %vm295, %v1260, 0.0
      %v1302 = vadd.f32 %v1259, %v1301
      %1303 = vadd.xlane.f32.xlu0 %v1302
      %v1304 = vpop.xlane.xlu0 %1303
      %v1305 = vsel %vm295, %v1262, 0.0
      %v1306 = vadd.f32 %v1261, %v1305
      %1307 = vadd.xlane.f32.xlu0 %v1306
      %v1308 = vpop.xlane.xlu0 %1307
      %v1309 = vsel %vm295, %v1264, 0.0
      %v1310 = vadd.f32 %v1263, %v1309
      %1311 = vadd.xlane.f32.xlu0 %v1310
      %v1312 = vpop.xlane.xlu0 %1311
      %v1313 = vsel %vm295, %v1266, 0.0
      %v1314 = vadd.f32 %v1265, %v1313
      %1315 = vadd.xlane.f32.xlu0 %v1314
      %v1316 = vpop.xlane.xlu0 %1315
      %v1317 = vsel %vm295, %v1268, 0.0
      %v1318 = vadd.f32 %v1267, %v1317
      %1319 = vadd.xlane.f32.xlu0 %v1318
      %v1320 = vpop.xlane.xlu0 %1319
      %v1321 = vsel %vm295, %v1270, 0.0
      %v1322 = vadd.f32 %v1269, %v1321
      %1323 = vadd.xlane.f32.xlu0 %v1322
      %v1324 = vpop.xlane.xlu0 %1323
      %v1325 = vsel %vm295, %v1272, 0.0
      %v1326 = vadd.f32 %v1271, %v1325
      %1327 = vadd.xlane.f32.xlu0 %v1326
      %v1328 = vpop.xlane.xlu0 %1327
      %v1329 = vsel %vm295, %v1274, 0.0
      %v1330 = vadd.f32 %v1273, %v1329
      %1331 = vadd.xlane.f32.xlu0 %v1330
      %v1332 = vpop.xlane.xlu0 %1331
      %v1333 = vsel %vm295, %v1276, 0.0
      %v1334 = vadd.f32 %v1275, %v1333
      %1335 = vadd.xlane.f32.xlu0 %v1334
      %v1336 = vpop.xlane.xlu0 %1335
      %v1337 = vsel %vm295, %v1278, 0.0
      %v1338 = vadd.f32 %v1277, %v1337
      %1339 = vadd.xlane.f32.xlu0 %v1338
      %v1340 = vpop.xlane.xlu0 %1339
      %v1341 = vsel %vm295, %v1280, 0.0
      %v1342 = vadd.f32 %v1279, %v1341
      %1343 = vadd.xlane.f32.xlu0 %v1342
      %v1344 = vpop.xlane.xlu0 %1343
      %v1361 = vperm.slane %v1284, %v377
      %v1362 = vperm.slane %v1288, %v377
      %v1363 = vperm.slane %v1292, %v377
      %v1364 = vperm.slane %v1296, %v377
      %v1365 = vperm.slane %v1300, %v377
      %v1366 = vperm.slane %v1304, %v377
      %v1367 = vperm.slane %v1308, %v377
      %v1368 = vperm.slane %v1312, %v377
      %v1369 = vperm.slane %v1316, %v377
      %v1370 = vperm.slane %v1320, %v377
      %v1371 = vperm.slane %v1324, %v377
      %v1372 = vperm.slane %v1328, %v377
      %v1373 = vperm.slane %v1332, %v377
      %v1374 = vperm.slane %v1336, %v377
      %v1375 = vperm.slane %v1340, %v377
      %v1376 = vperm.slane %v1344, %v377
      %v1377 = vsel %vm394, %v1362, %v1361
      %v1378 = vsel %vm396, %v1363, %v1377
      %v1379 = vsel %vm398, %v1364, %v1378
      %v1380 = vsel %vm400, %v1365, %v1379
      %v1381 = vsel %vm402, %v1366, %v1380
      %v1382 = vsel %vm404, %v1367, %v1381
      %v1383 = vsel %vm406, %v1368, %v1382
      %v1384 = vsel %vm394, %v1370, %v1369
      %v1385 = vsel %vm396, %v1371, %v1384
      %v1386 = vsel %vm398, %v1372, %v1385
      %v1387 = vsel %vm400, %v1373, %v1386
      %v1388 = vsel %vm402, %v1374, %v1387
      %v1389 = vsel %vm404, %v1375, %v1388
      %v1390 = vsel %vm406, %v1376, %v1389
      %1393 = vst.msk [vmem:[%s211 + $0x50] sm:$0xff] %vm417, %v1383
      %1394 = vst.msk [vmem:[%s211 + $0x58] sm:$0xff] %vm417, %v1390
      %s1395 = scalar_lea.vmem %s203, 768
      %v1396 = vld [vmem:[%s1395] sm:$0xff]
      %v1397 = vld [vmem:[%s1395 + $0x8] sm:$0xff]
      %v1398 = vld [vmem:[%s1395 + $0x10] sm:$0xff]
      %v1399 = vld [vmem:[%s1395 + $0x18] sm:$0xff]
      %v1400 = vld [vmem:[%s1395 + $0x20] sm:$0xff]
      %v1401 = vld [vmem:[%s1395 + $0x28] sm:$0xff]
      %v1402 = vld [vmem:[%s1395 + $0x30] sm:$0xff]
      %v1403 = vld [vmem:[%s1395 + $0x38] sm:$0xff]
      %v1404 = vld [vmem:[%s1395 + $0x40] sm:$0xff]
      %v1405 = vld [vmem:[%s1395 + $0x48] sm:$0xff]
      %v1406 = vld [vmem:[%s1395 + $0x50] sm:$0xff]
      %v1407 = vld [vmem:[%s1395 + $0x58] sm:$0xff]
      %v1408 = vld [vmem:[%s1395 + $0x60] sm:$0xff]
      %v1409 = vld [vmem:[%s1395 + $0x68] sm:$0xff]
      %v1410 = vld [vmem:[%s1395 + $0x70] sm:$0xff]
      %v1411 = vld [vmem:[%s1395 + $0x78] sm:$0xff]
      %v1412 = vunpack.c.l.bf16 %v1396
      %v1413 = vunpack.c.h.bf16 %v1396
      %v1414 = vunpack.c.l.bf16 %v1397
      %v1415 = vunpack.c.h.bf16 %v1397
      %v1416 = vunpack.c.l.bf16 %v1398
      %v1417 = vunpack.c.h.bf16 %v1398
      %v1418 = vunpack.c.l.bf16 %v1399
      %v1419 = vunpack.c.h.bf16 %v1399
      %v1420 = vunpack.c.l.bf16 %v1400
      %v1421 = vunpack.c.h.bf16 %v1400
      %v1422 = vunpack.c.l.bf16 %v1401
      %v1423 = vunpack.c.h.bf16 %v1401
      %v1424 = vunpack.c.l.bf16 %v1402
      %v1425 = vunpack.c.h.bf16 %v1402
      %v1426 = vunpack.c.l.bf16 %v1403
      %v1427 = vunpack.c.h.bf16 %v1403
      %v1428 = vunpack.c.l.bf16 %v1404
      %v1429 = vunpack.c.h.bf16 %v1404
      %v1430 = vunpack.c.l.bf16 %v1405
      %v1431 = vunpack.c.h.bf16 %v1405
      %v1432 = vunpack.c.l.bf16 %v1406
      %v1433 = vunpack.c.h.bf16 %v1406
      %v1434 = vunpack.c.l.bf16 %v1407
      %v1435 = vunpack.c.h.bf16 %v1407
      %v1436 = vunpack.c.l.bf16 %v1408
      %v1437 = vunpack.c.h.bf16 %v1408
      %v1438 = vunpack.c.l.bf16 %v1409
      %v1439 = vunpack.c.h.bf16 %v1409
      %v1440 = vunpack.c.l.bf16 %v1410
      %v1441 = vunpack.c.h.bf16 %v1410
      %v1442 = vunpack.c.l.bf16 %v1411
      %v1443 = vunpack.c.h.bf16 %v1411
      %v1444 = vmul.f32 %v1412, %v213
      %v1445 = vmul.f32 %v1413, %v214
      %v1446 = vmul.f32 %v1414, %v213
      %v1447 = vmul.f32 %v1415, %v214
      %v1448 = vmul.f32 %v1416, %v213
      %v1449 = vmul.f32 %v1417, %v214
      %v1450 = vmul.f32 %v1418, %v213
      %v1451 = vmul.f32 %v1419, %v214
      %v1452 = vmul.f32 %v1420, %v213
      %v1453 = vmul.f32 %v1421, %v214
      %v1454 = vmul.f32 %v1422, %v213
      %v1455 = vmul.f32 %v1423, %v214
      %v1456 = vmul.f32 %v1424, %v213
      %v1457 = vmul.f32 %v1425, %v214
      %v1458 = vmul.f32 %v1426, %v213
      %v1459 = vmul.f32 %v1427, %v214
      %v1460 = vmul.f32 %v1428, %v213
      %v1461 = vmul.f32 %v1429, %v214
      %v1462 = vmul.f32 %v1430, %v213
      %v1463 = vmul.f32 %v1431, %v214
      %v1464 = vmul.f32 %v1432, %v213
      %v1465 = vmul.f32 %v1433, %v214
      %v1466 = vmul.f32 %v1434, %v213
      %v1467 = vmul.f32 %v1435, %v214
      %v1468 = vmul.f32 %v1436, %v213
      %v1469 = vmul.f32 %v1437, %v214
      %v1470 = vmul.f32 %v1438, %v213
      %v1471 = vmul.f32 %v1439, %v214
      %v1472 = vmul.f32 %v1440, %v213
      %v1473 = vmul.f32 %v1441, %v214
      %v1474 = vmul.f32 %v1442, %v213
      %v1475 = vmul.f32 %v1443, %v214
      %v1476 = vsel %vm295, %v1445, 0.0
      %v1477 = vadd.f32 %v1444, %v1476
      %1478 = vadd.xlane.f32.xlu0 %v1477
      %v1479 = vpop.xlane.xlu0 %1478
      %v1480 = vsel %vm295, %v1447, 0.0
      %v1481 = vadd.f32 %v1446, %v1480
      %1482 = vadd.xlane.f32.xlu0 %v1481
      %v1483 = vpop.xlane.xlu0 %1482
      %v1484 = vsel %vm295, %v1449, 0.0
      %v1485 = vadd.f32 %v1448, %v1484
      %1486 = vadd.xlane.f32.xlu0 %v1485
      %v1487 = vpop.xlane.xlu0 %1486
      %v1488 = vsel %vm295, %v1451, 0.0
      %v1489 = vadd.f32 %v1450, %v1488
      %1490 = vadd.xlane.f32.xlu0 %v1489
      %v1491 = vpop.xlane.xlu0 %1490
      %v1492 = vsel %vm295, %v1453, 0.0
      %v1493 = vadd.f32 %v1452, %v1492
      %1494 = vadd.xlane.f32.xlu0 %v1493
      %v1495 = vpop.xlane.xlu0 %1494
      %v1496 = vsel %vm295, %v1455, 0.0
      %v1497 = vadd.f32 %v1454, %v1496
      %1498 = vadd.xlane.f32.xlu0 %v1497
      %v1499 = vpop.xlane.xlu0 %1498
      %v1500 = vsel %vm295, %v1457, 0.0
      %v1501 = vadd.f32 %v1456, %v1500
      %1502 = vadd.xlane.f32.xlu0 %v1501
      %v1503 = vpop.xlane.xlu0 %1502
      %v1504 = vsel %vm295, %v1459, 0.0
      %v1505 = vadd.f32 %v1458, %v1504
      %1506 = vadd.xlane.f32.xlu0 %v1505
      %v1507 = vpop.xlane.xlu0 %1506
      %v1508 = vsel %vm295, %v1461, 0.0
      %v1509 = vadd.f32 %v1460, %v1508
      %1510 = vadd.xlane.f32.xlu0 %v1509
      %v1511 = vpop.xlane.xlu0 %1510
      %v1512 = vsel %vm295, %v1463, 0.0
      %v1513 = vadd.f32 %v1462, %v1512
      %1514 = vadd.xlane.f32.xlu0 %v1513
      %v1515 = vpop.xlane.xlu0 %1514
      %v1516 = vsel %vm295, %v1465, 0.0
      %v1517 = vadd.f32 %v1464, %v1516
      %1518 = vadd.xlane.f32.xlu0 %v1517
      %v1519 = vpop.xlane.xlu0 %1518
      %v1520 = vsel %vm295, %v1467, 0.0
      %v1521 = vadd.f32 %v1466, %v1520
      %1522 = vadd.xlane.f32.xlu0 %v1521
      %v1523 = vpop.xlane.xlu0 %1522
      %v1524 = vsel %vm295, %v1469, 0.0
      %v1525 = vadd.f32 %v1468, %v1524
      %1526 = vadd.xlane.f32.xlu0 %v1525
      %v1527 = vpop.xlane.xlu0 %1526
      %v1528 = vsel %vm295, %v1471, 0.0
      %v1529 = vadd.f32 %v1470, %v1528
      %1530 = vadd.xlane.f32.xlu0 %v1529
      %v1531 = vpop.xlane.xlu0 %1530
      %v1532 = vsel %vm295, %v1473, 0.0
      %v1533 = vadd.f32 %v1472, %v1532
      %1534 = vadd.xlane.f32.xlu0 %v1533
      %v1535 = vpop.xlane.xlu0 %1534
      %v1536 = vsel %vm295, %v1475, 0.0
      %v1537 = vadd.f32 %v1474, %v1536
      %1538 = vadd.xlane.f32.xlu0 %v1537
      %v1539 = vpop.xlane.xlu0 %1538
      %v1556 = vperm.slane %v1479, %v377
      %v1557 = vperm.slane %v1483, %v377
      %v1558 = vperm.slane %v1487, %v377
      %v1559 = vperm.slane %v1491, %v377
      %v1560 = vperm.slane %v1495, %v377
      %v1561 = vperm.slane %v1499, %v377
      %v1562 = vperm.slane %v1503, %v377
      %v1563 = vperm.slane %v1507, %v377
      %v1564 = vperm.slane %v1511, %v377
      %v1565 = vperm.slane %v1515, %v377
      %v1566 = vperm.slane %v1519, %v377
      %v1567 = vperm.slane %v1523, %v377
      %v1568 = vperm.slane %v1527, %v377
      %v1569 = vperm.slane %v1531, %v377
      %v1570 = vperm.slane %v1535, %v377
      %v1571 = vperm.slane %v1539, %v377
      %v1572 = vsel %vm394, %v1557, %v1556
      %v1573 = vsel %vm396, %v1558, %v1572
      %v1574 = vsel %vm398, %v1559, %v1573
      %v1575 = vsel %vm400, %v1560, %v1574
      %v1576 = vsel %vm402, %v1561, %v1575
      %v1577 = vsel %vm404, %v1562, %v1576
      %v1578 = vsel %vm406, %v1563, %v1577
      %v1579 = vsel %vm394, %v1565, %v1564
      %v1580 = vsel %vm396, %v1566, %v1579
      %v1581 = vsel %vm398, %v1567, %v1580
      %v1582 = vsel %vm400, %v1568, %v1581
      %v1583 = vsel %vm402, %v1569, %v1582
      %v1584 = vsel %vm404, %v1570, %v1583
      %v1585 = vsel %vm406, %v1571, %v1584
      %1588 = vst.msk [vmem:[%s211 + $0x60] sm:$0xff] %vm417, %v1578
      %1589 = vst.msk [vmem:[%s211 + $0x68] sm:$0xff] %vm417, %v1585
      %s1590 = scalar_lea.vmem %s203, 896
      %v1591 = vld [vmem:[%s1590] sm:$0xff]
      %v1592 = vld [vmem:[%s1590 + $0x8] sm:$0xff]
      %v1593 = vld [vmem:[%s1590 + $0x10] sm:$0xff]
      %v1594 = vld [vmem:[%s1590 + $0x18] sm:$0xff]
      %v1595 = vld [vmem:[%s1590 + $0x20] sm:$0xff]
      %v1596 = vld [vmem:[%s1590 + $0x28] sm:$0xff]
      %v1597 = vld [vmem:[%s1590 + $0x30] sm:$0xff]
      %v1598 = vld [vmem:[%s1590 + $0x38] sm:$0xff]
      %v1599 = vld [vmem:[%s1590 + $0x40] sm:$0xff]
      %v1600 = vld [vmem:[%s1590 + $0x48] sm:$0xff]
      %v1601 = vld [vmem:[%s1590 + $0x50] sm:$0xff]
      %v1602 = vld [vmem:[%s1590 + $0x58] sm:$0xff]
      %v1603 = vld [vmem:[%s1590 + $0x60] sm:$0xff]
      %v1604 = vld [vmem:[%s1590 + $0x68] sm:$0xff]
      %v1605 = vld [vmem:[%s1590 + $0x70] sm:$0xff]
      %v1606 = vld [vmem:[%s1590 + $0x78] sm:$0xff]
      %v1607 = vunpack.c.l.bf16 %v1591
      %v1608 = vunpack.c.h.bf16 %v1591
      %v1609 = vunpack.c.l.bf16 %v1592
      %v1610 = vunpack.c.h.bf16 %v1592
      %v1611 = vunpack.c.l.bf16 %v1593
      %v1612 = vunpack.c.h.bf16 %v1593
      %v1613 = vunpack.c.l.bf16 %v1594
      %v1614 = vunpack.c.h.bf16 %v1594
      %v1615 = vunpack.c.l.bf16 %v1595
      %v1616 = vunpack.c.h.bf16 %v1595
      %v1617 = vunpack.c.l.bf16 %v1596
      %v1618 = vunpack.c.h.bf16 %v1596
      %v1619 = vunpack.c.l.bf16 %v1597
      %v1620 = vunpack.c.h.bf16 %v1597
      %v1621 = vunpack.c.l.bf16 %v1598
      %v1622 = vunpack.c.h.bf16 %v1598
      %v1623 = vunpack.c.l.bf16 %v1599
      %v1624 = vunpack.c.h.bf16 %v1599
      %v1625 = vunpack.c.l.bf16 %v1600
      %v1626 = vunpack.c.h.bf16 %v1600
      %v1627 = vunpack.c.l.bf16 %v1601
      %v1628 = vunpack.c.h.bf16 %v1601
      %v1629 = vunpack.c.l.bf16 %v1602
      %v1630 = vunpack.c.h.bf16 %v1602
      %v1631 = vunpack.c.l.bf16 %v1603
      %v1632 = vunpack.c.h.bf16 %v1603
      %v1633 = vunpack.c.l.bf16 %v1604
      %v1634 = vunpack.c.h.bf16 %v1604
      %v1635 = vunpack.c.l.bf16 %v1605
      %v1636 = vunpack.c.h.bf16 %v1605
      %v1637 = vunpack.c.l.bf16 %v1606
      %v1638 = vunpack.c.h.bf16 %v1606
      %v1639 = vmul.f32 %v1607, %v213
      %v1640 = vmul.f32 %v1608, %v214
      %v1641 = vmul.f32 %v1609, %v213
      %v1642 = vmul.f32 %v1610, %v214
      %v1643 = vmul.f32 %v1611, %v213
      %v1644 = vmul.f32 %v1612, %v214
      %v1645 = vmul.f32 %v1613, %v213
      %v1646 = vmul.f32 %v1614, %v214
      %v1647 = vmul.f32 %v1615, %v213
      %v1648 = vmul.f32 %v1616, %v214
      %v1649 = vmul.f32 %v1617, %v213
      %v1650 = vmul.f32 %v1618, %v214
      %v1651 = vmul.f32 %v1619, %v213
      %v1652 = vmul.f32 %v1620, %v214
      %v1653 = vmul.f32 %v1621, %v213
      %v1654 = vmul.f32 %v1622, %v214
      %v1655 = vmul.f32 %v1623, %v213
      %v1656 = vmul.f32 %v1624, %v214
      %v1657 = vmul.f32 %v1625, %v213
      %v1658 = vmul.f32 %v1626, %v214
      %v1659 = vmul.f32 %v1627, %v213
      %v1660 = vmul.f32 %v1628, %v214
      %v1661 = vmul.f32 %v1629, %v213
      %v1662 = vmul.f32 %v1630, %v214
      %v1663 = vmul.f32 %v1631, %v213
      %v1664 = vmul.f32 %v1632, %v214
      %v1665 = vmul.f32 %v1633, %v213
      %v1666 = vmul.f32 %v1634, %v214
      %v1667 = vmul.f32 %v1635, %v213
      %v1668 = vmul.f32 %v1636, %v214
      %v1669 = vmul.f32 %v1637, %v213
      %v1670 = vmul.f32 %v1638, %v214
      %v1671 = vsel %vm295, %v1640, 0.0
      %v1672 = vadd.f32 %v1639, %v1671
      %1673 = vadd.xlane.f32.xlu0 %v1672
      %v1674 = vpop.xlane.xlu0 %1673
      %v1675 = vsel %vm295, %v1642, 0.0
      %v1676 = vadd.f32 %v1641, %v1675
      %1677 = vadd.xlane.f32.xlu0 %v1676
      %v1678 = vpop.xlane.xlu0 %1677
      %v1679 = vsel %vm295, %v1644, 0.0
      %v1680 = vadd.f32 %v1643, %v1679
      %1681 = vadd.xlane.f32.xlu0 %v1680
      %v1682 = vpop.xlane.xlu0 %1681
      %v1683 = vsel %vm295, %v1646, 0.0
      %v1684 = vadd.f32 %v1645, %v1683
      %1685 = vadd.xlane.f32.xlu0 %v1684
      %v1686 = vpop.xlane.xlu0 %1685
      %v1687 = vsel %vm295, %v1648, 0.0
      %v1688 = vadd.f32 %v1647, %v1687
      %1689 = vadd.xlane.f32.xlu0 %v1688
      %v1690 = vpop.xlane.xlu0 %1689
      %v1691 = vsel %vm295, %v1650, 0.0
      %v1692 = vadd.f32 %v1649, %v1691
      %1693 = vadd.xlane.f32.xlu0 %v1692
      %v1694 = vpop.xlane.xlu0 %1693
      %v1695 = vsel %vm295, %v1652, 0.0
      %v1696 = vadd.f32 %v1651, %v1695
      %1697 = vadd.xlane.f32.xlu0 %v1696
      %v1698 = vpop.xlane.xlu0 %1697
      %v1699 = vsel %vm295, %v1654, 0.0
      %v1700 = vadd.f32 %v1653, %v1699
      %1701 = vadd.xlane.f32.xlu0 %v1700
      %v1702 = vpop.xlane.xlu0 %1701
      %v1703 = vsel %vm295, %v1656, 0.0
      %v1704 = vadd.f32 %v1655, %v1703
      %1705 = vadd.xlane.f32.xlu0 %v1704
      %v1706 = vpop.xlane.xlu0 %1705
      %v1707 = vsel %vm295, %v1658, 0.0
      %v1708 = vadd.f32 %v1657, %v1707
      %1709 = vadd.xlane.f32.xlu0 %v1708
      %v1710 = vpop.xlane.xlu0 %1709
      %v1711 = vsel %vm295, %v1660, 0.0
      %v1712 = vadd.f32 %v1659, %v1711
      %1713 = vadd.xlane.f32.xlu0 %v1712
      %v1714 = vpop.xlane.xlu0 %1713
      %v1715 = vsel %vm295, %v1662, 0.0
      %v1716 = vadd.f32 %v1661, %v1715
      %1717 = vadd.xlane.f32.xlu0 %v1716
      %v1718 = vpop.xlane.xlu0 %1717
      %v1719 = vsel %vm295, %v1664, 0.0
      %v1720 = vadd.f32 %v1663, %v1719
      %1721 = vadd.xlane.f32.xlu0 %v1720
      %v1722 = vpop.xlane.xlu0 %1721
      %v1723 = vsel %vm295, %v1666, 0.0
      %v1724 = vadd.f32 %v1665, %v1723
      %1725 = vadd.xlane.f32.xlu0 %v1724
      %v1726 = vpop.xlane.xlu0 %1725
      %v1727 = vsel %vm295, %v1668, 0.0
      %v1728 = vadd.f32 %v1667, %v1727
      %1729 = vadd.xlane.f32.xlu0 %v1728
      %v1730 = vpop.xlane.xlu0 %1729
      %v1731 = vsel %vm295, %v1670, 0.0
      %v1732 = vadd.f32 %v1669, %v1731
      %1733 = vadd.xlane.f32.xlu0 %v1732
      %v1734 = vpop.xlane.xlu0 %1733
      %v1751 = vperm.slane %v1674, %v377
      %v1752 = vperm.slane %v1678, %v377
      %v1753 = vperm.slane %v1682, %v377
      %v1754 = vperm.slane %v1686, %v377
      %v1755 = vperm.slane %v1690, %v377
      %v1756 = vperm.slane %v1694, %v377
      %v1757 = vperm.slane %v1698, %v377
      %v1758 = vperm.slane %v1702, %v377
      %v1759 = vperm.slane %v1706, %v377
      %v1760 = vperm.slane %v1710, %v377
      %v1761 = vperm.slane %v1714, %v377
      %v1762 = vperm.slane %v1718, %v377
      %v1763 = vperm.slane %v1722, %v377
      %v1764 = vperm.slane %v1726, %v377
      %v1765 = vperm.slane %v1730, %v377
      %v1766 = vperm.slane %v1734, %v377
      %v1767 = vsel %vm394, %v1752, %v1751
      %v1768 = vsel %vm396, %v1753, %v1767
      %v1769 = vsel %vm398, %v1754, %v1768
      %v1770 = vsel %vm400, %v1755, %v1769
      %v1771 = vsel %vm402, %v1756, %v1770
      %v1772 = vsel %vm404, %v1757, %v1771
      %v1773 = vsel %vm406, %v1758, %v1772
      %v1774 = vsel %vm394, %v1760, %v1759
      %v1775 = vsel %vm396, %v1761, %v1774
      %v1776 = vsel %vm398, %v1762, %v1775
      %v1777 = vsel %vm400, %v1763, %v1776
      %v1778 = vsel %vm402, %v1764, %v1777
      %v1779 = vsel %vm404, %v1765, %v1778
      %v1780 = vsel %vm406, %v1766, %v1779
      %1783 = vst.msk [vmem:[%s211 + $0x70] sm:$0xff] %vm417, %v1773
      %1784 = vst.msk [vmem:[%s211 + $0x78] sm:$0xff] %vm417, %v1780
      %s1785 = scalar_lea.vmem %s203, 1024
      %v1786 = vld [vmem:[%s1785] sm:$0xff]
      %v1787 = vld [vmem:[%s1785 + $0x8] sm:$0xff]
      %v1788 = vld [vmem:[%s1785 + $0x10] sm:$0xff]
      %v1789 = vld [vmem:[%s1785 + $0x18] sm:$0xff]
      %v1790 = vld [vmem:[%s1785 + $0x20] sm:$0xff]
      %v1791 = vld [vmem:[%s1785 + $0x28] sm:$0xff]
      %v1792 = vld [vmem:[%s1785 + $0x30] sm:$0xff]
      %v1793 = vld [vmem:[%s1785 + $0x38] sm:$0xff]
      %v1794 = vld [vmem:[%s1785 + $0x40] sm:$0xff]
      %v1795 = vld [vmem:[%s1785 + $0x48] sm:$0xff]
      %v1796 = vld [vmem:[%s1785 + $0x50] sm:$0xff]
      %v1797 = vld [vmem:[%s1785 + $0x58] sm:$0xff]
      %v1798 = vld [vmem:[%s1785 + $0x60] sm:$0xff]
      %v1799 = vld [vmem:[%s1785 + $0x68] sm:$0xff]
      %v1800 = vld [vmem:[%s1785 + $0x70] sm:$0xff]
      %v1801 = vld [vmem:[%s1785 + $0x78] sm:$0xff]
      %v1802 = vunpack.c.l.bf16 %v1786
      %v1803 = vunpack.c.h.bf16 %v1786
      %v1804 = vunpack.c.l.bf16 %v1787
      %v1805 = vunpack.c.h.bf16 %v1787
      %v1806 = vunpack.c.l.bf16 %v1788
      %v1807 = vunpack.c.h.bf16 %v1788
      %v1808 = vunpack.c.l.bf16 %v1789
      %v1809 = vunpack.c.h.bf16 %v1789
      %v1810 = vunpack.c.l.bf16 %v1790
      %v1811 = vunpack.c.h.bf16 %v1790
      %v1812 = vunpack.c.l.bf16 %v1791
      %v1813 = vunpack.c.h.bf16 %v1791
      %v1814 = vunpack.c.l.bf16 %v1792
      %v1815 = vunpack.c.h.bf16 %v1792
      %v1816 = vunpack.c.l.bf16 %v1793
      %v1817 = vunpack.c.h.bf16 %v1793
      %v1818 = vunpack.c.l.bf16 %v1794
      %v1819 = vunpack.c.h.bf16 %v1794
      %v1820 = vunpack.c.l.bf16 %v1795
      %v1821 = vunpack.c.h.bf16 %v1795
      %v1822 = vunpack.c.l.bf16 %v1796
      %v1823 = vunpack.c.h.bf16 %v1796
      %v1824 = vunpack.c.l.bf16 %v1797
      %v1825 = vunpack.c.h.bf16 %v1797
      %v1826 = vunpack.c.l.bf16 %v1798
      %v1827 = vunpack.c.h.bf16 %v1798
      %v1828 = vunpack.c.l.bf16 %v1799
      %v1829 = vunpack.c.h.bf16 %v1799
      %v1830 = vunpack.c.l.bf16 %v1800
      %v1831 = vunpack.c.h.bf16 %v1800
      %v1832 = vunpack.c.l.bf16 %v1801
      %v1833 = vunpack.c.h.bf16 %v1801
      %v1834 = vmul.f32 %v1802, %v213
      %v1835 = vmul.f32 %v1803, %v214
      %v1836 = vmul.f32 %v1804, %v213
      %v1837 = vmul.f32 %v1805, %v214
      %v1838 = vmul.f32 %v1806, %v213
      %v1839 = vmul.f32 %v1807, %v214
      %v1840 = vmul.f32 %v1808, %v213
      %v1841 = vmul.f32 %v1809, %v214
      %v1842 = vmul.f32 %v1810, %v213
      %v1843 = vmul.f32 %v1811, %v214
      %v1844 = vmul.f32 %v1812, %v213
      %v1845 = vmul.f32 %v1813, %v214
      %v1846 = vmul.f32 %v1814, %v213
      %v1847 = vmul.f32 %v1815, %v214
      %v1848 = vmul.f32 %v1816, %v213
      %v1849 = vmul.f32 %v1817, %v214
      %v1850 = vmul.f32 %v1818, %v213
      %v1851 = vmul.f32 %v1819, %v214
      %v1852 = vmul.f32 %v1820, %v213
      %v1853 = vmul.f32 %v1821, %v214
      %v1854 = vmul.f32 %v1822, %v213
      %v1855 = vmul.f32 %v1823, %v214
      %v1856 = vmul.f32 %v1824, %v213
      %v1857 = vmul.f32 %v1825, %v214
      %v1858 = vmul.f32 %v1826, %v213
      %v1859 = vmul.f32 %v1827, %v214
      %v1860 = vmul.f32 %v1828, %v213
      %v1861 = vmul.f32 %v1829, %v214
      %v1862 = vmul.f32 %v1830, %v213
      %v1863 = vmul.f32 %v1831, %v214
      %v1864 = vmul.f32 %v1832, %v213
      %v1865 = vmul.f32 %v1833, %v214
      %v1866 = vsel %vm295, %v1835, 0.0
      %v1867 = vadd.f32 %v1834, %v1866
      %1868 = vadd.xlane.f32.xlu0 %v1867
      %v1869 = vpop.xlane.xlu0 %1868
      %v1870 = vsel %vm295, %v1837, 0.0
      %v1871 = vadd.f32 %v1836, %v1870
      %1872 = vadd.xlane.f32.xlu0 %v1871
      %v1873 = vpop.xlane.xlu0 %1872
      %v1874 = vsel %vm295, %v1839, 0.0
      %v1875 = vadd.f32 %v1838, %v1874
      %1876 = vadd.xlane.f32.xlu0 %v1875
      %v1877 = vpop.xlane.xlu0 %1876
      %v1878 = vsel %vm295, %v1841, 0.0
      %v1879 = vadd.f32 %v1840, %v1878
      %1880 = vadd.xlane.f32.xlu0 %v1879
      %v1881 = vpop.xlane.xlu0 %1880
      %v1882 = vsel %vm295, %v1843, 0.0
      %v1883 = vadd.f32 %v1842, %v1882
      %1884 = vadd.xlane.f32.xlu0 %v1883
      %v1885 = vpop.xlane.xlu0 %1884
      %v1886 = vsel %vm295, %v1845, 0.0
      %v1887 = vadd.f32 %v1844, %v1886
      %1888 = vadd.xlane.f32.xlu0 %v1887
      %v1889 = vpop.xlane.xlu0 %1888
      %v1890 = vsel %vm295, %v1847, 0.0
      %v1891 = vadd.f32 %v1846, %v1890
      %1892 = vadd.xlane.f32.xlu0 %v1891
      %v1893 = vpop.xlane.xlu0 %1892
      %v1894 = vsel %vm295, %v1849, 0.0
      %v1895 = vadd.f32 %v1848, %v1894
      %1896 = vadd.xlane.f32.xlu0 %v1895
      %v1897 = vpop.xlane.xlu0 %1896
      %v1898 = vsel %vm295, %v1851, 0.0
      %v1899 = vadd.f32 %v1850, %v1898
      %1900 = vadd.xlane.f32.xlu0 %v1899
      %v1901 = vpop.xlane.xlu0 %1900
      %v1902 = vsel %vm295, %v1853, 0.0
      %v1903 = vadd.f32 %v1852, %v1902
      %1904 = vadd.xlane.f32.xlu0 %v1903
      %v1905 = vpop.xlane.xlu0 %1904
      %v1906 = vsel %vm295, %v1855, 0.0
      %v1907 = vadd.f32 %v1854, %v1906
      %1908 = vadd.xlane.f32.xlu0 %v1907
      %v1909 = vpop.xlane.xlu0 %1908
      %v1910 = vsel %vm295, %v1857, 0.0
      %v1911 = vadd.f32 %v1856, %v1910
      %1912 = vadd.xlane.f32.xlu0 %v1911
      %v1913 = vpop.xlane.xlu0 %1912
      %v1914 = vsel %vm295, %v1859, 0.0
      %v1915 = vadd.f32 %v1858, %v1914
      %1916 = vadd.xlane.f32.xlu0 %v1915
      %v1917 = vpop.xlane.xlu0 %1916
      %v1918 = vsel %vm295, %v1861, 0.0
      %v1919 = vadd.f32 %v1860, %v1918
      %1920 = vadd.xlane.f32.xlu0 %v1919
      %v1921 = vpop.xlane.xlu0 %1920
      %v1922 = vsel %vm295, %v1863, 0.0
      %v1923 = vadd.f32 %v1862, %v1922
      %1924 = vadd.xlane.f32.xlu0 %v1923
      %v1925 = vpop.xlane.xlu0 %1924
      %v1926 = vsel %vm295, %v1865, 0.0
      %v1927 = vadd.f32 %v1864, %v1926
      %1928 = vadd.xlane.f32.xlu0 %v1927
      %v1929 = vpop.xlane.xlu0 %1928
      %v1946 = vperm.slane %v1869, %v377
      %v1947 = vperm.slane %v1873, %v377
      %v1948 = vperm.slane %v1877, %v377
      %v1949 = vperm.slane %v1881, %v377
      %v1950 = vperm.slane %v1885, %v377
      %v1951 = vperm.slane %v1889, %v377
      %v1952 = vperm.slane %v1893, %v377
      %v1953 = vperm.slane %v1897, %v377
      %v1954 = vperm.slane %v1901, %v377
      %v1955 = vperm.slane %v1905, %v377
      %v1956 = vperm.slane %v1909, %v377
      %v1957 = vperm.slane %v1913, %v377
      %v1958 = vperm.slane %v1917, %v377
      %v1959 = vperm.slane %v1921, %v377
      %v1960 = vperm.slane %v1925, %v377
      %v1961 = vperm.slane %v1929, %v377
      %v1962 = vsel %vm394, %v1947, %v1946
      %v1963 = vsel %vm396, %v1948, %v1962
      %v1964 = vsel %vm398, %v1949, %v1963
      %v1965 = vsel %vm400, %v1950, %v1964
      %v1966 = vsel %vm402, %v1951, %v1965
      %v1967 = vsel %vm404, %v1952, %v1966
      %v1968 = vsel %vm406, %v1953, %v1967
      %v1969 = vsel %vm394, %v1955, %v1954
      %v1970 = vsel %vm396, %v1956, %v1969
      %v1971 = vsel %vm398, %v1957, %v1970
      %v1972 = vsel %vm400, %v1958, %v1971
      %v1973 = vsel %vm402, %v1959, %v1972
      %v1974 = vsel %vm404, %v1960, %v1973
      %v1975 = vsel %vm406, %v1961, %v1974
      %1978 = vst.msk [vmem:[%s211 + $0x80] sm:$0xff] %vm417, %v1968
      %1979 = vst.msk [vmem:[%s211 + $0x88] sm:$0xff] %vm417, %v1975
      %s1980 = scalar_lea.vmem %s203, 1152
      %v1981 = vld [vmem:[%s1980] sm:$0xff]
      %v1982 = vld [vmem:[%s1980 + $0x8] sm:$0xff]
      %v1983 = vld [vmem:[%s1980 + $0x10] sm:$0xff]
      %v1984 = vld [vmem:[%s1980 + $0x18] sm:$0xff]
      %v1985 = vld [vmem:[%s1980 + $0x20] sm:$0xff]
      %v1986 = vld [vmem:[%s1980 + $0x28] sm:$0xff]
      %v1987 = vld [vmem:[%s1980 + $0x30] sm:$0xff]
      %v1988 = vld [vmem:[%s1980 + $0x38] sm:$0xff]
      %v1989 = vld [vmem:[%s1980 + $0x40] sm:$0xff]
      %v1990 = vld [vmem:[%s1980 + $0x48] sm:$0xff]
      %v1991 = vld [vmem:[%s1980 + $0x50] sm:$0xff]
      %v1992 = vld [vmem:[%s1980 + $0x58] sm:$0xff]
      %v1993 = vld [vmem:[%s1980 + $0x60] sm:$0xff]
      %v1994 = vld [vmem:[%s1980 + $0x68] sm:$0xff]
      %v1995 = vld [vmem:[%s1980 + $0x70] sm:$0xff]
      %v1996 = vld [vmem:[%s1980 + $0x78] sm:$0xff]
      %v1997 = vunpack.c.l.bf16 %v1981
      %v1998 = vunpack.c.h.bf16 %v1981
      %v1999 = vunpack.c.l.bf16 %v1982
      %v2000 = vunpack.c.h.bf16 %v1982
      %v2001 = vunpack.c.l.bf16 %v1983
      %v2002 = vunpack.c.h.bf16 %v1983
      %v2003 = vunpack.c.l.bf16 %v1984
      %v2004 = vunpack.c.h.bf16 %v1984
      %v2005 = vunpack.c.l.bf16 %v1985
      %v2006 = vunpack.c.h.bf16 %v1985
      %v2007 = vunpack.c.l.bf16 %v1986
      %v2008 = vunpack.c.h.bf16 %v1986
      %v2009 = vunpack.c.l.bf16 %v1987
      %v2010 = vunpack.c.h.bf16 %v1987
      %v2011 = vunpack.c.l.bf16 %v1988
      %v2012 = vunpack.c.h.bf16 %v1988
      %v2013 = vunpack.c.l.bf16 %v1989
      %v2014 = vunpack.c.h.bf16 %v1989
      %v2015 = vunpack.c.l.bf16 %v1990
      %v2016 = vunpack.c.h.bf16 %v1990
      %v2017 = vunpack.c.l.bf16 %v1991
      %v2018 = vunpack.c.h.bf16 %v1991
      %v2019 = vunpack.c.l.bf16 %v1992
      %v2020 = vunpack.c.h.bf16 %v1992
      %v2021 = vunpack.c.l.bf16 %v1993
      %v2022 = vunpack.c.h.bf16 %v1993
      %v2023 = vunpack.c.l.bf16 %v1994
      %v2024 = vunpack.c.h.bf16 %v1994
      %v2025 = vunpack.c.l.bf16 %v1995
      %v2026 = vunpack.c.h.bf16 %v1995
      %v2027 = vunpack.c.l.bf16 %v1996
      %v2028 = vunpack.c.h.bf16 %v1996
      %v2029 = vmul.f32 %v1997, %v213
      %v2030 = vmul.f32 %v1998, %v214
      %v2031 = vmul.f32 %v1999, %v213
      %v2032 = vmul.f32 %v2000, %v214
      %v2033 = vmul.f32 %v2001, %v213
      %v2034 = vmul.f32 %v2002, %v214
      %v2035 = vmul.f32 %v2003, %v213
      %v2036 = vmul.f32 %v2004, %v214
      %v2037 = vmul.f32 %v2005, %v213
      %v2038 = vmul.f32 %v2006, %v214
      %v2039 = vmul.f32 %v2007, %v213
      %v2040 = vmul.f32 %v2008, %v214
      %v2041 = vmul.f32 %v2009, %v213
      %v2042 = vmul.f32 %v2010, %v214
      %v2043 = vmul.f32 %v2011, %v213
      %v2044 = vmul.f32 %v2012, %v214
      %v2045 = vmul.f32 %v2013, %v213
      %v2046 = vmul.f32 %v2014, %v214
      %v2047 = vmul.f32 %v2015, %v213
      %v2048 = vmul.f32 %v2016, %v214
      %v2049 = vmul.f32 %v2017, %v213
      %v2050 = vmul.f32 %v2018, %v214
      %v2051 = vmul.f32 %v2019, %v213
      %v2052 = vmul.f32 %v2020, %v214
      %v2053 = vmul.f32 %v2021, %v213
      %v2054 = vmul.f32 %v2022, %v214
      %v2055 = vmul.f32 %v2023, %v213
      %v2056 = vmul.f32 %v2024, %v214
      %v2057 = vmul.f32 %v2025, %v213
      %v2058 = vmul.f32 %v2026, %v214
      %v2059 = vmul.f32 %v2027, %v213
      %v2060 = vmul.f32 %v2028, %v214
      %v2061 = vsel %vm295, %v2030, 0.0
      %v2062 = vadd.f32 %v2029, %v2061
      %2063 = vadd.xlane.f32.xlu0 %v2062
      %v2064 = vpop.xlane.xlu0 %2063
      %v2065 = vsel %vm295, %v2032, 0.0
      %v2066 = vadd.f32 %v2031, %v2065
      %2067 = vadd.xlane.f32.xlu0 %v2066
      %v2068 = vpop.xlane.xlu0 %2067
      %v2069 = vsel %vm295, %v2034, 0.0
      %v2070 = vadd.f32 %v2033, %v2069
      %2071 = vadd.xlane.f32.xlu0 %v2070
      %v2072 = vpop.xlane.xlu0 %2071
      %v2073 = vsel %vm295, %v2036, 0.0
      %v2074 = vadd.f32 %v2035, %v2073
      %2075 = vadd.xlane.f32.xlu0 %v2074
      %v2076 = vpop.xlane.xlu0 %2075
      %v2077 = vsel %vm295, %v2038, 0.0
      %v2078 = vadd.f32 %v2037, %v2077
      %2079 = vadd.xlane.f32.xlu0 %v2078
      %v2080 = vpop.xlane.xlu0 %2079
      %v2081 = vsel %vm295, %v2040, 0.0
      %v2082 = vadd.f32 %v2039, %v2081
      %2083 = vadd.xlane.f32.xlu0 %v2082
      %v2084 = vpop.xlane.xlu0 %2083
      %v2085 = vsel %vm295, %v2042, 0.0
      %v2086 = vadd.f32 %v2041, %v2085
      %2087 = vadd.xlane.f32.xlu0 %v2086
      %v2088 = vpop.xlane.xlu0 %2087
      %v2089 = vsel %vm295, %v2044, 0.0
      %v2090 = vadd.f32 %v2043, %v2089
      %2091 = vadd.xlane.f32.xlu0 %v2090
      %v2092 = vpop.xlane.xlu0 %2091
      %v2093 = vsel %vm295, %v2046, 0.0
      %v2094 = vadd.f32 %v2045, %v2093
      %2095 = vadd.xlane.f32.xlu0 %v2094
      %v2096 = vpop.xlane.xlu0 %2095
      %v2097 = vsel %vm295, %v2048, 0.0
      %v2098 = vadd.f32 %v2047, %v2097
      %2099 = vadd.xlane.f32.xlu0 %v2098
      %v2100 = vpop.xlane.xlu0 %2099
      %v2101 = vsel %vm295, %v2050, 0.0
      %v2102 = vadd.f32 %v2049, %v2101
      %2103 = vadd.xlane.f32.xlu0 %v2102
      %v2104 = vpop.xlane.xlu0 %2103
      %v2105 = vsel %vm295, %v2052, 0.0
      %v2106 = vadd.f32 %v2051, %v2105
      %2107 = vadd.xlane.f32.xlu0 %v2106
      %v2108 = vpop.xlane.xlu0 %2107
      %v2109 = vsel %vm295, %v2054, 0.0
      %v2110 = vadd.f32 %v2053, %v2109
      %2111 = vadd.xlane.f32.xlu0 %v2110
      %v2112 = vpop.xlane.xlu0 %2111
      %v2113 = vsel %vm295, %v2056, 0.0
      %v2114 = vadd.f32 %v2055, %v2113
      %2115 = vadd.xlane.f32.xlu0 %v2114
      %v2116 = vpop.xlane.xlu0 %2115
      %v2117 = vsel %vm295, %v2058, 0.0
      %v2118 = vadd.f32 %v2057, %v2117
      %2119 = vadd.xlane.f32.xlu0 %v2118
      %v2120 = vpop.xlane.xlu0 %2119
      %v2121 = vsel %vm295, %v2060, 0.0
      %v2122 = vadd.f32 %v2059, %v2121
      %2123 = vadd.xlane.f32.xlu0 %v2122
      %v2124 = vpop.xlane.xlu0 %2123
      %v2141 = vperm.slane %v2064, %v377
      %v2142 = vperm.slane %v2068, %v377
      %v2143 = vperm.slane %v2072, %v377
      %v2144 = vperm.slane %v2076, %v377
      %v2145 = vperm.slane %v2080, %v377
      %v2146 = vperm.slane %v2084, %v377
      %v2147 = vperm.slane %v2088, %v377
      %v2148 = vperm.slane %v2092, %v377
      %v2149 = vperm.slane %v2096, %v377
      %v2150 = vperm.slane %v2100, %v377
      %v2151 = vperm.slane %v2104, %v377
      %v2152 = vperm.slane %v2108, %v377
      %v2153 = vperm.slane %v2112, %v377
      %v2154 = vperm.slane %v2116, %v377
      %v2155 = vperm.slane %v2120, %v377
      %v2156 = vperm.slane %v2124, %v377
      %v2157 = vsel %vm394, %v2142, %v2141
      %v2158 = vsel %vm396, %v2143, %v2157
      %v2159 = vsel %vm398, %v2144, %v2158
      %v2160 = vsel %vm400, %v2145, %v2159
      %v2161 = vsel %vm402, %v2146, %v2160
      %v2162 = vsel %vm404, %v2147, %v2161
      %v2163 = vsel %vm406, %v2148, %v2162
      %v2164 = vsel %vm394, %v2150, %v2149
      %v2165 = vsel %vm396, %v2151, %v2164
      %v2166 = vsel %vm398, %v2152, %v2165
      %v2167 = vsel %vm400, %v2153, %v2166
      %v2168 = vsel %vm402, %v2154, %v2167
      %v2169 = vsel %vm404, %v2155, %v2168
      %v2170 = vsel %vm406, %v2156, %v2169
      %2173 = vst.msk [vmem:[%s211 + $0x90] sm:$0xff] %vm417, %v2163
      %2174 = vst.msk [vmem:[%s211 + $0x98] sm:$0xff] %vm417, %v2170
      %s2175 = scalar_lea.vmem %s203, 1280
      %v2176 = vld [vmem:[%s2175] sm:$0xff]
      %v2177 = vld [vmem:[%s2175 + $0x8] sm:$0xff]
      %v2178 = vld [vmem:[%s2175 + $0x10] sm:$0xff]
      %v2179 = vld [vmem:[%s2175 + $0x18] sm:$0xff]
      %v2180 = vld [vmem:[%s2175 + $0x20] sm:$0xff]
      %v2181 = vld [vmem:[%s2175 + $0x28] sm:$0xff]
      %v2182 = vld [vmem:[%s2175 + $0x30] sm:$0xff]
      %v2183 = vld [vmem:[%s2175 + $0x38] sm:$0xff]
      %v2184 = vld [vmem:[%s2175 + $0x40] sm:$0xff]
      %v2185 = vld [vmem:[%s2175 + $0x48] sm:$0xff]
      %v2186 = vld [vmem:[%s2175 + $0x50] sm:$0xff]
      %v2187 = vld [vmem:[%s2175 + $0x58] sm:$0xff]
      %v2188 = vld [vmem:[%s2175 + $0x60] sm:$0xff]
      %v2189 = vld [vmem:[%s2175 + $0x68] sm:$0xff]
      %v2190 = vld [vmem:[%s2175 + $0x70] sm:$0xff]
      %v2191 = vld [vmem:[%s2175 + $0x78] sm:$0xff]
      %v2192 = vunpack.c.l.bf16 %v2176
      %v2193 = vunpack.c.h.bf16 %v2176
      %v2194 = vunpack.c.l.bf16 %v2177
      %v2195 = vunpack.c.h.bf16 %v2177
      %v2196 = vunpack.c.l.bf16 %v2178
      %v2197 = vunpack.c.h.bf16 %v2178
      %v2198 = vunpack.c.l.bf16 %v2179
      %v2199 = vunpack.c.h.bf16 %v2179
      %v2200 = vunpack.c.l.bf16 %v2180
      %v2201 = vunpack.c.h.bf16 %v2180
      %v2202 = vunpack.c.l.bf16 %v2181
      %v2203 = vunpack.c.h.bf16 %v2181
      %v2204 = vunpack.c.l.bf16 %v2182
      %v2205 = vunpack.c.h.bf16 %v2182
      %v2206 = vunpack.c.l.bf16 %v2183
      %v2207 = vunpack.c.h.bf16 %v2183
      %v2208 = vunpack.c.l.bf16 %v2184
      %v2209 = vunpack.c.h.bf16 %v2184
      %v2210 = vunpack.c.l.bf16 %v2185
      %v2211 = vunpack.c.h.bf16 %v2185
      %v2212 = vunpack.c.l.bf16 %v2186
      %v2213 = vunpack.c.h.bf16 %v2186
      %v2214 = vunpack.c.l.bf16 %v2187
      %v2215 = vunpack.c.h.bf16 %v2187
      %v2216 = vunpack.c.l.bf16 %v2188
      %v2217 = vunpack.c.h.bf16 %v2188
      %v2218 = vunpack.c.l.bf16 %v2189
      %v2219 = vunpack.c.h.bf16 %v2189
      %v2220 = vunpack.c.l.bf16 %v2190
      %v2221 = vunpack.c.h.bf16 %v2190
      %v2222 = vunpack.c.l.bf16 %v2191
      %v2223 = vunpack.c.h.bf16 %v2191
      %v2224 = vmul.f32 %v2192, %v213
      %v2225 = vmul.f32 %v2193, %v214
      %v2226 = vmul.f32 %v2194, %v213
      %v2227 = vmul.f32 %v2195, %v214
      %v2228 = vmul.f32 %v2196, %v213
      %v2229 = vmul.f32 %v2197, %v214
      %v2230 = vmul.f32 %v2198, %v213
      %v2231 = vmul.f32 %v2199, %v214
      %v2232 = vmul.f32 %v2200, %v213
      %v2233 = vmul.f32 %v2201, %v214
      %v2234 = vmul.f32 %v2202, %v213
      %v2235 = vmul.f32 %v2203, %v214
      %v2236 = vmul.f32 %v2204, %v213
      %v2237 = vmul.f32 %v2205, %v214
      %v2238 = vmul.f32 %v2206, %v213
      %v2239 = vmul.f32 %v2207, %v214
      %v2240 = vmul.f32 %v2208, %v213
      %v2241 = vmul.f32 %v2209, %v214
      %v2242 = vmul.f32 %v2210, %v213
      %v2243 = vmul.f32 %v2211, %v214
      %v2244 = vmul.f32 %v2212, %v213
      %v2245 = vmul.f32 %v2213, %v214
      %v2246 = vmul.f32 %v2214, %v213
      %v2247 = vmul.f32 %v2215, %v214
      %v2248 = vmul.f32 %v2216, %v213
      %v2249 = vmul.f32 %v2217, %v214
      %v2250 = vmul.f32 %v2218, %v213
      %v2251 = vmul.f32 %v2219, %v214
      %v2252 = vmul.f32 %v2220, %v213
      %v2253 = vmul.f32 %v2221, %v214
      %v2254 = vmul.f32 %v2222, %v213
      %v2255 = vmul.f32 %v2223, %v214
      %v2256 = vsel %vm295, %v2225, 0.0
      %v2257 = vadd.f32 %v2224, %v2256
      %2258 = vadd.xlane.f32.xlu0 %v2257
      %v2259 = vpop.xlane.xlu0 %2258
      %v2260 = vsel %vm295, %v2227, 0.0
      %v2261 = vadd.f32 %v2226, %v2260
      %2262 = vadd.xlane.f32.xlu0 %v2261
      %v2263 = vpop.xlane.xlu0 %2262
      %v2264 = vsel %vm295, %v2229, 0.0
      %v2265 = vadd.f32 %v2228, %v2264
      %2266 = vadd.xlane.f32.xlu0 %v2265
      %v2267 = vpop.xlane.xlu0 %2266
      %v2268 = vsel %vm295, %v2231, 0.0
      %v2269 = vadd.f32 %v2230, %v2268
      %2270 = vadd.xlane.f32.xlu0 %v2269
      %v2271 = vpop.xlane.xlu0 %2270
      %v2272 = vsel %vm295, %v2233, 0.0
      %v2273 = vadd.f32 %v2232, %v2272
      %2274 = vadd.xlane.f32.xlu0 %v2273
      %v2275 = vpop.xlane.xlu0 %2274
      %v2276 = vsel %vm295, %v2235, 0.0
      %v2277 = vadd.f32 %v2234, %v2276
      %2278 = vadd.xlane.f32.xlu0 %v2277
      %v2279 = vpop.xlane.xlu0 %2278
      %v2280 = vsel %vm295, %v2237, 0.0
      %v2281 = vadd.f32 %v2236, %v2280
      %2282 = vadd.xlane.f32.xlu0 %v2281
      %v2283 = vpop.xlane.xlu0 %2282
      %v2284 = vsel %vm295, %v2239, 0.0
      %v2285 = vadd.f32 %v2238, %v2284
      %2286 = vadd.xlane.f32.xlu0 %v2285
      %v2287 = vpop.xlane.xlu0 %2286
      %v2288 = vsel %vm295, %v2241, 0.0
      %v2289 = vadd.f32 %v2240, %v2288
      %2290 = vadd.xlane.f32.xlu0 %v2289
      %v2291 = vpop.xlane.xlu0 %2290
      %v2292 = vsel %vm295, %v2243, 0.0
      %v2293 = vadd.f32 %v2242, %v2292
      %2294 = vadd.xlane.f32.xlu0 %v2293
      %v2295 = vpop.xlane.xlu0 %2294
      %v2296 = vsel %vm295, %v2245, 0.0
      %v2297 = vadd.f32 %v2244, %v2296
      %2298 = vadd.xlane.f32.xlu0 %v2297
      %v2299 = vpop.xlane.xlu0 %2298
      %v2300 = vsel %vm295, %v2247, 0.0
      %v2301 = vadd.f32 %v2246, %v2300
      %2302 = vadd.xlane.f32.xlu0 %v2301
      %v2303 = vpop.xlane.xlu0 %2302
      %v2304 = vsel %vm295, %v2249, 0.0
      %v2305 = vadd.f32 %v2248, %v2304
      %2306 = vadd.xlane.f32.xlu0 %v2305
      %v2307 = vpop.xlane.xlu0 %2306
      %v2308 = vsel %vm295, %v2251, 0.0
      %v2309 = vadd.f32 %v2250, %v2308
      %2310 = vadd.xlane.f32.xlu0 %v2309
      %v2311 = vpop.xlane.xlu0 %2310
      %v2312 = vsel %vm295, %v2253, 0.0
      %v2313 = vadd.f32 %v2252, %v2312
      %2314 = vadd.xlane.f32.xlu0 %v2313
      %v2315 = vpop.xlane.xlu0 %2314
      %v2316 = vsel %vm295, %v2255, 0.0
      %v2317 = vadd.f32 %v2254, %v2316
      %2318 = vadd.xlane.f32.xlu0 %v2317
      %v2319 = vpop.xlane.xlu0 %2318
      %v2336 = vperm.slane %v2259, %v377
      %v2337 = vperm.slane %v2263, %v377
      %v2338 = vperm.slane %v2267, %v377
      %v2339 = vperm.slane %v2271, %v377
      %v2340 = vperm.slane %v2275, %v377
      %v2341 = vperm.slane %v2279, %v377
      %v2342 = vperm.slane %v2283, %v377
      %v2343 = vperm.slane %v2287, %v377
      %v2344 = vperm.slane %v2291, %v377
      %v2345 = vperm.slane %v2295, %v377
      %v2346 = vperm.slane %v2299, %v377
      %v2347 = vperm.slane %v2303, %v377
      %v2348 = vperm.slane %v2307, %v377
      %v2349 = vperm.slane %v2311, %v377
      %v2350 = vperm.slane %v2315, %v377
      %v2351 = vperm.slane %v2319, %v377
      %v2352 = vsel %vm394, %v2337, %v2336
      %v2353 = vsel %vm396, %v2338, %v2352
      %v2354 = vsel %vm398, %v2339, %v2353
      %v2355 = vsel %vm400, %v2340, %v2354
      %v2356 = vsel %vm402, %v2341, %v2355
      %v2357 = vsel %vm404, %v2342, %v2356
      %v2358 = vsel %vm406, %v2343, %v2357
      %v2359 = vsel %vm394, %v2345, %v2344
      %v2360 = vsel %vm396, %v2346, %v2359
      %v2361 = vsel %vm398, %v2347, %v2360
      %v2362 = vsel %vm400, %v2348, %v2361
      %v2363 = vsel %vm402, %v2349, %v2362
      %v2364 = vsel %vm404, %v2350, %v2363
      %v2365 = vsel %vm406, %v2351, %v2364
      %2368 = vst.msk [vmem:[%s211 + $0xa0] sm:$0xff] %vm417, %v2358
      %2369 = vst.msk [vmem:[%s211 + $0xa8] sm:$0xff] %vm417, %v2365
      %s2370 = scalar_lea.vmem %s203, 1408
      %v2371 = vld [vmem:[%s2370] sm:$0xff]
      %v2372 = vld [vmem:[%s2370 + $0x8] sm:$0xff]
      %v2373 = vld [vmem:[%s2370 + $0x10] sm:$0xff]
      %v2374 = vld [vmem:[%s2370 + $0x18] sm:$0xff]
      %v2375 = vld [vmem:[%s2370 + $0x20] sm:$0xff]
      %v2376 = vld [vmem:[%s2370 + $0x28] sm:$0xff]
      %v2377 = vld [vmem:[%s2370 + $0x30] sm:$0xff]
      %v2378 = vld [vmem:[%s2370 + $0x38] sm:$0xff]
      %v2379 = vld [vmem:[%s2370 + $0x40] sm:$0xff]
      %v2380 = vld [vmem:[%s2370 + $0x48] sm:$0xff]
      %v2381 = vld [vmem:[%s2370 + $0x50] sm:$0xff]
      %v2382 = vld [vmem:[%s2370 + $0x58] sm:$0xff]
      %v2383 = vld [vmem:[%s2370 + $0x60] sm:$0xff]
      %v2384 = vld [vmem:[%s2370 + $0x68] sm:$0xff]
      %v2385 = vld [vmem:[%s2370 + $0x70] sm:$0xff]
      %v2386 = vld [vmem:[%s2370 + $0x78] sm:$0xff]
      %v2387 = vunpack.c.l.bf16 %v2371
      %v2388 = vunpack.c.h.bf16 %v2371
      %v2389 = vunpack.c.l.bf16 %v2372
      %v2390 = vunpack.c.h.bf16 %v2372
      %v2391 = vunpack.c.l.bf16 %v2373
      %v2392 = vunpack.c.h.bf16 %v2373
      %v2393 = vunpack.c.l.bf16 %v2374
      %v2394 = vunpack.c.h.bf16 %v2374
      %v2395 = vunpack.c.l.bf16 %v2375
      %v2396 = vunpack.c.h.bf16 %v2375
      %v2397 = vunpack.c.l.bf16 %v2376
      %v2398 = vunpack.c.h.bf16 %v2376
      %v2399 = vunpack.c.l.bf16 %v2377
      %v2400 = vunpack.c.h.bf16 %v2377
      %v2401 = vunpack.c.l.bf16 %v2378
      %v2402 = vunpack.c.h.bf16 %v2378
      %v2403 = vunpack.c.l.bf16 %v2379
      %v2404 = vunpack.c.h.bf16 %v2379
      %v2405 = vunpack.c.l.bf16 %v2380
      %v2406 = vunpack.c.h.bf16 %v2380
      %v2407 = vunpack.c.l.bf16 %v2381
      %v2408 = vunpack.c.h.bf16 %v2381
      %v2409 = vunpack.c.l.bf16 %v2382
      %v2410 = vunpack.c.h.bf16 %v2382
      %v2411 = vunpack.c.l.bf16 %v2383
      %v2412 = vunpack.c.h.bf16 %v2383
      %v2413 = vunpack.c.l.bf16 %v2384
      %v2414 = vunpack.c.h.bf16 %v2384
      %v2415 = vunpack.c.l.bf16 %v2385
      %v2416 = vunpack.c.h.bf16 %v2385
      %v2417 = vunpack.c.l.bf16 %v2386
      %v2418 = vunpack.c.h.bf16 %v2386
      %v2419 = vmul.f32 %v2387, %v213
      %v2420 = vmul.f32 %v2388, %v214
      %v2421 = vmul.f32 %v2389, %v213
      %v2422 = vmul.f32 %v2390, %v214
      %v2423 = vmul.f32 %v2391, %v213
      %v2424 = vmul.f32 %v2392, %v214
      %v2425 = vmul.f32 %v2393, %v213
      %v2426 = vmul.f32 %v2394, %v214
      %v2427 = vmul.f32 %v2395, %v213
      %v2428 = vmul.f32 %v2396, %v214
      %v2429 = vmul.f32 %v2397, %v213
      %v2430 = vmul.f32 %v2398, %v214
      %v2431 = vmul.f32 %v2399, %v213
      %v2432 = vmul.f32 %v2400, %v214
      %v2433 = vmul.f32 %v2401, %v213
      %v2434 = vmul.f32 %v2402, %v214
      %v2435 = vmul.f32 %v2403, %v213
      %v2436 = vmul.f32 %v2404, %v214
      %v2437 = vmul.f32 %v2405, %v213
      %v2438 = vmul.f32 %v2406, %v214
      %v2439 = vmul.f32 %v2407, %v213
      %v2440 = vmul.f32 %v2408, %v214
      %v2441 = vmul.f32 %v2409, %v213
      %v2442 = vmul.f32 %v2410, %v214
      %v2443 = vmul.f32 %v2411, %v213
      %v2444 = vmul.f32 %v2412, %v214
      %v2445 = vmul.f32 %v2413, %v213
      %v2446 = vmul.f32 %v2414, %v214
      %v2447 = vmul.f32 %v2415, %v213
      %v2448 = vmul.f32 %v2416, %v214
      %v2449 = vmul.f32 %v2417, %v213
      %v2450 = vmul.f32 %v2418, %v214
      %v2451 = vsel %vm295, %v2420, 0.0
      %v2452 = vadd.f32 %v2419, %v2451
      %2453 = vadd.xlane.f32.xlu0 %v2452
      %v2454 = vpop.xlane.xlu0 %2453
      %v2455 = vsel %vm295, %v2422, 0.0
      %v2456 = vadd.f32 %v2421, %v2455
      %2457 = vadd.xlane.f32.xlu0 %v2456
      %v2458 = vpop.xlane.xlu0 %2457
      %v2459 = vsel %vm295, %v2424, 0.0
      %v2460 = vadd.f32 %v2423, %v2459
      %2461 = vadd.xlane.f32.xlu0 %v2460
      %v2462 = vpop.xlane.xlu0 %2461
      %v2463 = vsel %vm295, %v2426, 0.0
      %v2464 = vadd.f32 %v2425, %v2463
      %2465 = vadd.xlane.f32.xlu0 %v2464
      %v2466 = vpop.xlane.xlu0 %2465
      %v2467 = vsel %vm295, %v2428, 0.0
      %v2468 = vadd.f32 %v2427, %v2467
      %2469 = vadd.xlane.f32.xlu0 %v2468
      %v2470 = vpop.xlane.xlu0 %2469
      %v2471 = vsel %vm295, %v2430, 0.0
      %v2472 = vadd.f32 %v2429, %v2471
      %2473 = vadd.xlane.f32.xlu0 %v2472
      %v2474 = vpop.xlane.xlu0 %2473
      %v2475 = vsel %vm295, %v2432, 0.0
      %v2476 = vadd.f32 %v2431, %v2475
      %2477 = vadd.xlane.f32.xlu0 %v2476
      %v2478 = vpop.xlane.xlu0 %2477
      %v2479 = vsel %vm295, %v2434, 0.0
      %v2480 = vadd.f32 %v2433, %v2479
      %2481 = vadd.xlane.f32.xlu0 %v2480
      %v2482 = vpop.xlane.xlu0 %2481
      %v2483 = vsel %vm295, %v2436, 0.0
      %v2484 = vadd.f32 %v2435, %v2483
      %2485 = vadd.xlane.f32.xlu0 %v2484
      %v2486 = vpop.xlane.xlu0 %2485
      %v2487 = vsel %vm295, %v2438, 0.0
      %v2488 = vadd.f32 %v2437, %v2487
      %2489 = vadd.xlane.f32.xlu0 %v2488
      %v2490 = vpop.xlane.xlu0 %2489
      %v2491 = vsel %vm295, %v2440, 0.0
      %v2492 = vadd.f32 %v2439, %v2491
      %2493 = vadd.xlane.f32.xlu0 %v2492
      %v2494 = vpop.xlane.xlu0 %2493
      %v2495 = vsel %vm295, %v2442, 0.0
      %v2496 = vadd.f32 %v2441, %v2495
      %2497 = vadd.xlane.f32.xlu0 %v2496
      %v2498 = vpop.xlane.xlu0 %2497
      %v2499 = vsel %vm295, %v2444, 0.0
      %v2500 = vadd.f32 %v2443, %v2499
      %2501 = vadd.xlane.f32.xlu0 %v2500
      %v2502 = vpop.xlane.xlu0 %2501
      %v2503 = vsel %vm295, %v2446, 0.0
      %v2504 = vadd.f32 %v2445, %v2503
      %2505 = vadd.xlane.f32.xlu0 %v2504
      %v2506 = vpop.xlane.xlu0 %2505
      %v2507 = vsel %vm295, %v2448, 0.0
      %v2508 = vadd.f32 %v2447, %v2507
      %2509 = vadd.xlane.f32.xlu0 %v2508
      %v2510 = vpop.xlane.xlu0 %2509
      %v2511 = vsel %vm295, %v2450, 0.0
      %v2512 = vadd.f32 %v2449, %v2511
      %2513 = vadd.xlane.f32.xlu0 %v2512
      %v2514 = vpop.xlane.xlu0 %2513
      %v2531 = vperm.slane %v2454, %v377
      %v2532 = vperm.slane %v2458, %v377
      %v2533 = vperm.slane %v2462, %v377
      %v2534 = vperm.slane %v2466, %v377
      %v2535 = vperm.slane %v2470, %v377
      %v2536 = vperm.slane %v2474, %v377
      %v2537 = vperm.slane %v2478, %v377
      %v2538 = vperm.slane %v2482, %v377
      %v2539 = vperm.slane %v2486, %v377
      %v2540 = vperm.slane %v2490, %v377
      %v2541 = vperm.slane %v2494, %v377
      %v2542 = vperm.slane %v2498, %v377
      %v2543 = vperm.slane %v2502, %v377
      %v2544 = vperm.slane %v2506, %v377
      %v2545 = vperm.slane %v2510, %v377
      %v2546 = vperm.slane %v2514, %v377
      %v2547 = vsel %vm394, %v2532, %v2531
      %v2548 = vsel %vm396, %v2533, %v2547
      %v2549 = vsel %vm398, %v2534, %v2548
      %v2550 = vsel %vm400, %v2535, %v2549
      %v2551 = vsel %vm402, %v2536, %v2550
      %v2552 = vsel %vm404, %v2537, %v2551
      %v2553 = vsel %vm406, %v2538, %v2552
      %v2554 = vsel %vm394, %v2540, %v2539
      %v2555 = vsel %vm396, %v2541, %v2554
      %v2556 = vsel %vm398, %v2542, %v2555
      %v2557 = vsel %vm400, %v2543, %v2556
      %v2558 = vsel %vm402, %v2544, %v2557
      %v2559 = vsel %vm404, %v2545, %v2558
      %v2560 = vsel %vm406, %v2546, %v2559
      %2563 = vst.msk [vmem:[%s211 + $0xb0] sm:$0xff] %vm417, %v2553
      %2564 = vst.msk [vmem:[%s211 + $0xb8] sm:$0xff] %vm417, %v2560
      %p2565 = scmp.lt.s32.totalorder %s17, 1
      %s2566 = scalar_select %p2565, %s17, 1
      %p2567 = scmp.lt.s32.totalorder %s18, 0
      %s2568 = scalar_select %p2567, %s18, 0
      %s2569 = smul.addr %s2566, 24
      %s2570 = sadd.s32 %s2568, %s2569
      %s2571 = smul.addr %s2570, 8
      %s2572 = scalar_lea.vmem %s2, %s2571
      // Predicated region
      $region29: #{_lambda_.2} parent=27 // pred_check
        %p2573 = pneg %p101
      $region30: #{_lambda_.2} parent=27 // pred_check_branch
        %2575 = sbr.rel (%p2573) target = $region32
      $region31: #{_lambda_.2} parent=27 // pred_region
        _
      $region32: #{_lambda_.2} parent=27 // pred_fallthru
        _
    $region28: #{_lambda_.2} parent=5 // pred_fallthru
      _
    %p2576 = scmp.le.s32.totalorder 2, %s8
    // Predicated region
    $region33: #{_lambda_.2} parent=5 // pred_check
      %p2577 = pneg %p2576
    $region34: #{_lambda_.2} parent=5 // pred_check_branch
      %2579 = sbr.rel (%p2577) target = $region36
    $region35: #{_lambda_.2} parent=5 // pred_region
      %s2580 = ssub.s32 %s8, 2
      // Predicated region
      $region37: #{_lambda_.2} parent=35 // pred_check
        %p2581 = pneg %p107
      $region38: #{_lambda_.2} parent=35 // pred_check_branch
        %2583 = sbr.rel (%p2581) target = $region40
      $region39: #{_lambda_.2} parent=35 // pred_region
        %p2584 = scmp.lt.s32.totalorder %s19, 1
        %s2585 = scalar_select %p2584, %s19, 1
        %p2586 = scmp.lt.s32.totalorder %s20, 0
        %s2587 = scalar_select %p2586, %s20, 0
        %s2588 = smul.addr %s2585, 24
        %s2589 = sadd.s32 %s2587, %s2588
        %s2590 = smul.addr %s2589, 8
        %s2591 = scalar_lea.vmem %s2, %s2590
      $region40: #{_lambda_.2} parent=35 // pred_fallthru
        _
    $region36: #{_lambda_.2} parent=5 // pred_fallthru
      _
  $region6: #{_lambda_.2} parent=0 // loop_footer
    %s12 = sadd.s32 1, %s8
  $region7: #{_lambda_.2} parent=0 // loop_footer_branch
    %7 = sbr.rel target = $region3
  $region8: #{_lambda_.2} parent=0 // loop_exit
    _

// kernel: _lambda_.3
$region0: #{_lambda_.3}
  #allocation0 [shape = 'u32[]', space=smem, size = 0x4, offset = 0x4, fixed_abs, tag = 'smem constant byte address 0x4 - core index']
  #allocation1 [shape = 'u32[72,128]{1,0:T(1,128)}', space=vmem, size = 0x9000, scoped, tag = 'internal scratch']
  %s0 = inlined_call_operand.vmem [shape: bf16[2,32,196], index: 0, kind: input, shape index: {}]
  %s1 = inlined_call_operand.vmem [shape: bf16[2,7,32,196], index: 1, kind: input, shape index: {}]
  %s2 = inlined_call_operand.vmem [shape: f32[2,7,32], index: 2, kind: output, shape index: {}]
  %s3 = sld [smem:[#allocation0]]
  $region41: #{_lambda_.3} parent=0
    _
  %s5 = ssub.s32 1, %s3
  %s6 = scalar_select 0, %s5, %s3
  loop: start=0, step=1, limit=4
  $region2: #{_lambda_.3} parent=0 // loop_pre_header
    _
  $region3: #{_lambda_.3} parent=0 // loop_header
    %s8 = sphi 0, %s12
    %p9 = scmp.ge.s32.totalorder %s8, 4
    %s15 = sphi 0, %s27
    %s16 = sphi 0, %s23
    %s17 = sphi 0, %s15
    %s18 = sphi 0, %s16
    %s19 = sphi 0, %s17
    %s20 = sphi 0, %s18
    %s32 = sphi 0, %s34
    %s35 = sphi 0, %s32
    %s36 = sphi 0, %s35
    %s52 = sphi 0, %s36
    %s60 = sphi 0, %s62
    %s63 = sphi 0, %s60
    %s64 = sphi 0, %s63
    %s80 = sphi 0, %s64
    %s88 = sphi 0, %s90
    %s91 = sphi 0, %s88
    %s92 = sphi 0, %s91
    %s108 = sphi 0, %s92
  $region4: #{_lambda_.3} parent=0 // loop_header_branch
    %11 = sbr.rel (%p9) target = $region8
  $region5: #{_lambda_.3} parent=0 // loop_body
    %s13 = ssub.s32 %s8, 1
    %s14 = ssub.s32 %s8, 2
    %s21 = sadd.s32 1, %s16
    %p22 = scmp.ge.s32.totalorder %s21, 1
    %s23 = scalar_select %p22, 0, %s21
    %s24 = sadd.s32 1, %s15
    %s25 = scalar_select %p22, %s24, %s15
    %p26 = scmp.ge.s32.totalorder %s25, 2
    %s27 = scalar_select %p26, 0, %s25
    %s28 = ssub.s32 %s15, %s27
    %s29 = ssub.s32 %s16, %s23
    %s30 = sor.u32 %s28, %s29
    %p31 = scmp.eq.s32.totalorder %s30, 0
    %s33 = sadd.s32 %s32, 1
    %s34 = scalar_select %p31, %s32, %s33
    %p37 = pneg %p31
    %p38 = scmp.eq.s32.totalorder %s8, 1
    %p39 = por %p37, %p38
    %p40 = scmp.ne.s32.totalorder %s32, %s35
    %p41 = scmp.eq.s32.totalorder %s8, 0
    %p42 = por %p40, %p41
    %p43 = scmp.ne.s32.totalorder %s32, %s35
    %p44 = scmp.eq.s32.totalorder %s13, 1
    %p45 = por %p43, %p44
    %p46 = scmp.ne.s32.totalorder %s35, %s36
    %p47 = scmp.eq.s32.totalorder %s13, 0
    %p48 = por %p46, %p47
    %p49 = scmp.ne.s32.totalorder %s35, %s36
    %p50 = scmp.eq.s32.totalorder %s14, 1
    %p51 = por %p49, %p50
    %p53 = scmp.ne.s32.totalorder %s36, %s52
    %p54 = scmp.eq.s32.totalorder %s14, 0
    %p55 = por %p53, %p54
    %s56 = ssub.s32 %s15, %s27
    %s57 = ssub.s32 %s16, %s23
    %s58 = sor.u32 %s56, %s57
    %p59 = scmp.eq.s32.totalorder %s58, 0
    %s61 = sadd.s32 %s60, 1
    %s62 = scalar_select %p59, %s60, %s61
    %p65 = pneg %p59
    %p66 = scmp.eq.s32.totalorder %s8, 1
    %p67 = por %p65, %p66
    %p68 = scmp.ne.s32.totalorder %s60, %s63
    %p69 = scmp.eq.s32.totalorder %s8, 0
    %p70 = por %p68, %p69
    %p71 = scmp.ne.s32.totalorder %s60, %s63
    %p72 = scmp.eq.s32.totalorder %s13, 1
    %p73 = por %p71, %p72
    %p74 = scmp.ne.s32.totalorder %s63, %s64
    %p75 = scmp.eq.s32.totalorder %s13, 0
    %p76 = por %p74, %p75
    %p77 = scmp.ne.s32.totalorder %s63, %s64
    %p78 = scmp.eq.s32.totalorder %s14, 1
    %p79 = por %p77, %p78
    %p81 = scmp.ne.s32.totalorder %s64, %s80
    %p82 = scmp.eq.s32.totalorder %s14, 0
    %p83 = por %p81, %p82
    %s84 = ssub.s32 %s15, %s27
    %s85 = ssub.s32 %s16, %s23
    %s86 = sor.u32 %s84, %s85
    %p87 = scmp.eq.s32.totalorder %s86, 0
    %s89 = sadd.s32 %s88, 1
    %s90 = scalar_select %p87, %s88, %s89
    %p93 = pneg %p87
    %p94 = scmp.eq.s32.totalorder %s8, 1
    %p95 = por %p93, %p94
    %p96 = scmp.ne.s32.totalorder %s88, %s91
    %p97 = scmp.eq.s32.totalorder %s8, 0
    %p98 = por %p96, %p97
    %p99 = scmp.ne.s32.totalorder %s88, %s91
    %p100 = scmp.eq.s32.totalorder %s13, 1
    %p101 = por %p99, %p100
    %p102 = scmp.ne.s32.totalorder %s91, %s92
    %p103 = scmp.eq.s32.totalorder %s13, 0
    %p104 = por %p102, %p103
    %p105 = scmp.ne.s32.totalorder %s91, %s92
    %p106 = scmp.eq.s32.totalorder %s14, 1
    %p107 = por %p105, %p106
    %p109 = scmp.ne.s32.totalorder %s92, %s108
    %p110 = scmp.eq.s32.totalorder %s14, 0
    %p111 = por %p109, %p110
    %p112 = scmp.le.s32.totalorder 1, %s8
    %p113 = scmp.lt.s32.totalorder %s8, 3
    %p114 = pnand %p112, %p113
    %p115 = pneg %p114
    // Predicated region
    $region9: #{_lambda_.3} parent=5 // pred_check
      _
    $region10: #{_lambda_.3} parent=5 // pred_check_branch
      %117 = sbr.rel (%p114) target = $region12
    $region11: #{_lambda_.3} parent=5 // pred_region
      %s118 = ssub.s32 %s8, 1
    $region12: #{_lambda_.3} parent=5 // pred_fallthru
      _
    %p119 = scmp.lt.s32.totalorder %s8, 2
    // Predicated region
    $region13: #{_lambda_.3} parent=5 // pred_check
      %p120 = pneg %p119
    $region14: #{_lambda_.3} parent=5 // pred_check_branch
      %122 = sbr.rel (%p120) target = $region16
    $region15: #{_lambda_.3} parent=5 // pred_region
      // Predicated region
      $region17: #{_lambda_.3} parent=15 // pred_check
        %p123 = pneg %p42
      $region18: #{_lambda_.3} parent=15 // pred_check_branch
        %125 = sbr.rel (%p123) target = $region20
      $region19: #{_lambda_.3} parent=15 // pred_region
        %s126 = smul.u32 4, %s16
        %p127 = scmp.lt.s32.totalorder %s15, 1
        %s128 = scalar_select %p127, %s15, 1
        %p129 = scmp.lt.s32.totalorder %s126, 3
        %s130 = scalar_select %p129, %s126, 3
        %s131 = smul.addr %s130, 2
        %s132 = smul.addr %s128, 8
        %s133 = sadd.s32 %s131, %s132
        %s134 = smul.addr %s133, 4
        %s135 = scalar_lea.vmem %s0, %s134
        %s136 = smul.u32 4, %s16
      $region20: #{_lambda_.3} parent=15 // pred_fallthru
        _
      // Predicated region
      $region21: #{_lambda_.3} parent=15 // pred_check
        %p137 = pneg %p70
      $region22: #{_lambda_.3} parent=15 // pred_check_branch
        %139 = sbr.rel (%p137) target = $region24
      $region23: #{_lambda_.3} parent=15 // pred_region
        %s140 = smul.u32 4, %s16
        %p141 = scmp.lt.s32.totalorder %s15, 1
        %s142 = scalar_select %p141, %s15, 1
        %p143 = scmp.lt.s32.totalorder %s140, 3
        %s144 = scalar_select %p143, %s140, 3
        %s145 = smul.addr %s144, 2
        %s146 = smul.addr %s142, 56
        %s147 = sadd.s32 %s145, %s146
        %s148 = smul.addr %s147, 4
        %s149 = scalar_lea.vmem %s1, %s148
        %s150 = smul.u32 4, %s16
      $region24: #{_lambda_.3} parent=15 // pred_fallthru
        _
    $region16: #{_lambda_.3} parent=5 // pred_fallthru
      _
    %p151 = scmp.le.s32.totalorder 1, %s8
    %p152 = scmp.lt.s32.totalorder %s8, 3
    %p153 = pnand %p151, %p152
    %p154 = pneg %p153
    // Predicated region
    $region25: #{_lambda_.3} parent=5 // pred_check
      _
    $region26: #{_lambda_.3} parent=5 // pred_check_branch
      %156 = sbr.rel (%p153) target = $region28
    $region27: #{_lambda_.3} parent=5 // pred_region
      %s157 = ssub.s32 %s8, 1
      %s158 = smul.u32 4, %s18
      %p159 = scmp.lt.s32.totalorder %s17, 1
      %s160 = scalar_select %p159, %s17, 1
      %p161 = scmp.lt.s32.totalorder %s158, 3
      %s162 = scalar_select %p161, %s158, 3
      %s163 = smul.addr %s162, 2
      %s164 = smul.addr %s160, 8
      %s165 = sadd.s32 %s163, %s164
      %s166 = smul.addr %s165, 4
      %s167 = scalar_lea.vmem %s0, %s166
      %p168 = pneg %p48
      %p169 = pneg %p45
      %s170 = smul.u32 4, %s18
      %p171 = scmp.lt.s32.totalorder %s17, 1
      %s172 = scalar_select %p171, %s17, 1
      %p173 = scmp.lt.s32.totalorder %s170, 3
      %s174 = scalar_select %p173, %s170, 3
      %s175 = smul.addr %s174, 2
      %s176 = smul.addr %s172, 56
      %s177 = sadd.s32 %s175, %s176
      %s178 = smul.addr %s177, 4
      %s179 = scalar_lea.vmem %s1, %s178
      %p180 = pneg %p76
      %p181 = pneg %p73
      %p182 = pneg %p104
      %p183 = pneg %p101
      %p184 = scmp.lt.s32.totalorder %s17, 1
      %s185 = scalar_select %p184, %s17, 1
      %p186 = scmp.lt.s32.totalorder %s18, 0
      %s187 = scalar_select %p186, %s18, 0
      %s188 = sadd.s32 %s187, %s185
      %s189 = smul.addr %s188, 8
      %s190 = scalar_lea.vmem %s2, %s189
      %s191 = smul.u32 4, %s18
      %p192 = scmp.lt.s32.totalorder %s17, 1
      %s193 = scalar_select %p192, %s17, 1
      %p194 = scmp.lt.s32.totalorder %s191, 3
      %s195 = scalar_select %p194, %s191, 3
      %s196 = smul.addr %s195, 2
      %s197 = smul.addr %s193, 8
      %s198 = sadd.s32 %s196, %s197
      %s199 = smul.addr %s198, 4
      %s200 = scalar_lea.vmem %s0, %s199
      %s201 = smul.u32 4, %s18
      %s202 = smul.u32 4, %s18
      %p203 = scmp.lt.s32.totalorder %s17, 1
      %s204 = scalar_select %p203, %s17, 1
      %p205 = scmp.lt.s32.totalorder %s202, 3
      %s206 = scalar_select %p205, %s202, 3
      %s207 = smul.addr %s206, 2
      %s208 = smul.addr %s204, 56
      %s209 = sadd.s32 %s207, %s208
      %s210 = smul.addr %s209, 4
      %s211 = scalar_lea.vmem %s1, %s210
      %s212 = smul.u32 4, %s18
      %p213 = scmp.lt.s32.totalorder %s17, 1
      %s214 = scalar_select %p213, %s17, 1
      %p215 = scmp.lt.s32.totalorder %s18, 0
      %s216 = scalar_select %p215, %s18, 0
      %s217 = sadd.s32 %s216, %s214
      %s218 = smul.addr %s217, 8
      %s219 = scalar_lea.vmem %s2, %s218
      %v220 = vld [vmem:[%s200] sm:$0xff]
      %v221 = vld [vmem:[%s200 + $0x8] sm:$0xff]
      %v222 = vld [vmem:[%s200 + $0x10] sm:$0xff]
      %v223 = vld [vmem:[%s200 + $0x18] sm:$0xff]
      %v224 = vunpack.c.l.bf16 %v220
      %v225 = vunpack.c.h.bf16 %v220
      %v226 = vunpack.c.l.bf16 %v221
      %v227 = vunpack.c.h.bf16 %v221
      %v228 = vunpack.c.l.bf16 %v222
      %v229 = vunpack.c.h.bf16 %v222
      %v230 = vunpack.c.l.bf16 %v223
      %v231 = vunpack.c.h.bf16 %v223
      %v232 = vld [vmem:[%s211] sm:$0xff]
      %v233 = vld [vmem:[%s211 + $0x8] sm:$0xff]
      %v234 = vld [vmem:[%s211 + $0x10] sm:$0xff]
      %v235 = vld [vmem:[%s211 + $0x18] sm:$0xff]
      %v236 = vld [vmem:[%s211 + $0x20] sm:$0xff]
      %v237 = vld [vmem:[%s211 + $0x28] sm:$0xff]
      %v238 = vld [vmem:[%s211 + $0x30] sm:$0xff]
      %v239 = vld [vmem:[%s211 + $0x38] sm:$0xff]
      %v240 = vld [vmem:[%s211 + $0x40] sm:$0xff]
      %v241 = vld [vmem:[%s211 + $0x48] sm:$0xff]
      %v242 = vld [vmem:[%s211 + $0x50] sm:$0xff]
      %v243 = vld [vmem:[%s211 + $0x58] sm:$0xff]
      %v244 = vld [vmem:[%s211 + $0x60] sm:$0xff]
      %v245 = vld [vmem:[%s211 + $0x68] sm:$0xff]
      %v246 = vld [vmem:[%s211 + $0x70] sm:$0xff]
      %v247 = vld [vmem:[%s211 + $0x78] sm:$0xff]
      %v248 = vld [vmem:[%s211 + $0x80] sm:$0xff]
      %v249 = vld [vmem:[%s211 + $0x88] sm:$0xff]
      %v250 = vld [vmem:[%s211 + $0x90] sm:$0xff]
      %v251 = vld [vmem:[%s211 + $0x98] sm:$0xff]
      %v252 = vld [vmem:[%s211 + $0xa0] sm:$0xff]
      %v253 = vld [vmem:[%s211 + $0xa8] sm:$0xff]
      %v254 = vld [vmem:[%s211 + $0xb0] sm:$0xff]
      %v255 = vld [vmem:[%s211 + $0xb8] sm:$0xff]
      %v256 = vld [vmem:[%s211 + $0xc0] sm:$0xff]
      %v257 = vld [vmem:[%s211 + $0xc8] sm:$0xff]
      %v258 = vld [vmem:[%s211 + $0xd0] sm:$0xff]
      %v259 = vld [vmem:[%s211 + $0xd8] sm:$0xff]
      %v260 = vunpack.c.l.bf16 %v232
      %v261 = vunpack.c.h.bf16 %v232
      %v262 = vunpack.c.l.bf16 %v233
      %v263 = vunpack.c.h.bf16 %v233
      %v264 = vunpack.c.l.bf16 %v234
      %v265 = vunpack.c.h.bf16 %v234
      %v266 = vunpack.c.l.bf16 %v235
      %v267 = vunpack.c.h.bf16 %v235
      %v268 = vunpack.c.l.bf16 %v236
      %v269 = vunpack.c.h.bf16 %v236
      %v270 = vunpack.c.l.bf16 %v237
      %v271 = vunpack.c.h.bf16 %v237
      %v272 = vunpack.c.l.bf16 %v238
      %v273 = vunpack.c.h.bf16 %v238
      %v274 = vunpack.c.l.bf16 %v239
      %v275 = vunpack.c.h.bf16 %v239
      %v276 = vunpack.c.l.bf16 %v240
      %v277 = vunpack.c.h.bf16 %v240
      %v278 = vunpack.c.l.bf16 %v241
      %v279 = vunpack.c.h.bf16 %v241
      %v280 = vunpack.c.l.bf16 %v242
      %v281 = vunpack.c.h.bf16 %v242
      %v282 = vunpack.c.l.bf16 %v243
      %v283 = vunpack.c.h.bf16 %v243
      %v284 = vunpack.c.l.bf16 %v244
      %v285 = vunpack.c.h.bf16 %v244
      %v286 = vunpack.c.l.bf16 %v245
      %v287 = vunpack.c.h.bf16 %v245
      %v288 = vunpack.c.l.bf16 %v246
      %v289 = vunpack.c.h.bf16 %v246
      %v290 = vunpack.c.l.bf16 %v247
      %v291 = vunpack.c.h.bf16 %v247
      %v292 = vunpack.c.l.bf16 %v248
      %v293 = vunpack.c.h.bf16 %v248
      %v294 = vunpack.c.l.bf16 %v249
      %v295 = vunpack.c.h.bf16 %v249
      %v296 = vunpack.c.l.bf16 %v250
      %v297 = vunpack.c.h.bf16 %v250
      %v298 = vunpack.c.l.bf16 %v251
      %v299 = vunpack.c.h.bf16 %v251
      %v300 = vunpack.c.l.bf16 %v252
      %v301 = vunpack.c.h.bf16 %v252
      %v302 = vunpack.c.l.bf16 %v253
      %v303 = vunpack.c.h.bf16 %v253
      %v304 = vunpack.c.l.bf16 %v254
      %v305 = vunpack.c.h.bf16 %v254
      %v306 = vunpack.c.l.bf16 %v255
      %v307 = vunpack.c.h.bf16 %v255
      %v308 = vunpack.c.l.bf16 %v256
      %v309 = vunpack.c.h.bf16 %v256
      %v310 = vunpack.c.l.bf16 %v257
      %v311 = vunpack.c.h.bf16 %v257
      %v312 = vunpack.c.l.bf16 %v258
      %v313 = vunpack.c.h.bf16 %v258
      %v314 = vunpack.c.l.bf16 %v259
      %v315 = vunpack.c.h.bf16 %v259
      %v316 = vmul.f32 %v260, %v224
      %v317 = vmul.f32 %v261, %v225
      %v318 = vmul.f32 %v262, %v226
      %v319 = vmul.f32 %v263, %v227
      %v320 = vmul.f32 %v264, %v228
      %v321 = vmul.f32 %v265, %v229
      %v322 = vmul.f32 %v266, %v230
      %v323 = vmul.f32 %v267, %v231
      %v324 = vmul.f32 %v268, %v224
      %v325 = vmul.f32 %v269, %v225
      %v326 = vmul.f32 %v270, %v226
      %v327 = vmul.f32 %v271, %v227
      %v328 = vmul.f32 %v272, %v228
      %v329 = vmul.f32 %v273, %v229
      %v330 = vmul.f32 %v274, %v230
      %v331 = vmul.f32 %v275, %v231
      %v332 = vmul.f32 %v276, %v224
      %v333 = vmul.f32 %v277, %v225
      %v334 = vmul.f32 %v278, %v226
      %v335 = vmul.f32 %v279, %v227
      %v336 = vmul.f32 %v280, %v228
      %v337 = vmul.f32 %v281, %v229
      %v338 = vmul.f32 %v282, %v230
      %v339 = vmul.f32 %v283, %v231
      %v340 = vmul.f32 %v284, %v224
      %v341 = vmul.f32 %v285, %v225
      %v342 = vmul.f32 %v286, %v226
      %v343 = vmul.f32 %v287, %v227
      %v344 = vmul.f32 %v288, %v228
      %v345 = vmul.f32 %v289, %v229
      %v346 = vmul.f32 %v290, %v230
      %v347 = vmul.f32 %v291, %v231
      %v348 = vmul.f32 %v292, %v224
      %v349 = vmul.f32 %v293, %v225
      %v350 = vmul.f32 %v294, %v226
      %v351 = vmul.f32 %v295, %v227
      %v352 = vmul.f32 %v296, %v228
      %v353 = vmul.f32 %v297, %v229
      %v354 = vmul.f32 %v298, %v230
      %v355 = vmul.f32 %v299, %v231
      %v356 = vmul.f32 %v300, %v224
      %v357 = vmul.f32 %v301, %v225
      %v358 = vmul.f32 %v302, %v226
      %v359 = vmul.f32 %v303, %v227
      %v360 = vmul.f32 %v304, %v228
      %v361 = vmul.f32 %v305, %v229
      %v362 = vmul.f32 %v306, %v230
      %v363 = vmul.f32 %v307, %v231
      %v364 = vmul.f32 %v308, %v224
      %v365 = vmul.f32 %v309, %v225
      %v366 = vmul.f32 %v310, %v226
      %v367 = vmul.f32 %v311, %v227
      %v368 = vmul.f32 %v312, %v228
      %v369 = vmul.f32 %v313, %v229
      %v370 = vmul.f32 %v314, %v230
      %v371 = vmul.f32 %v315, %v231
      %vm372 = vcmask 556032
      %v373 = vsel %vm372, %v317, 0.0
      %v374 = vadd.f32 %v316, %v373
      %375 = vadd.xlane.f32.xlu0 %v374
      %v376 = vpop.xlane.xlu0 %375
      %v377 = vsel %vm372, %v319, 0.0
      %v378 = vadd.f32 %v318, %v377
      %379 = vadd.xlane.f32.xlu0 %v378
      %v380 = vpop.xlane.xlu0 %379
      %v381 = vsel %vm372, %v321, 0.0
      %v382 = vadd.f32 %v320, %v381
      %383 = vadd.xlane.f32.xlu0 %v382
      %v384 = vpop.xlane.xlu0 %383
      %v385 = vsel %vm372, %v323, 0.0
      %v386 = vadd.f32 %v322, %v385
      %387 = vadd.xlane.f32.xlu0 %v386
      %v388 = vpop.xlane.xlu0 %387
      %v389 = vsel %vm372, %v325, 0.0
      %v390 = vadd.f32 %v324, %v389
      %391 = vadd.xlane.f32.xlu0 %v390
      %v392 = vpop.xlane.xlu0 %391
      %v393 = vsel %vm372, %v327, 0.0
      %v394 = vadd.f32 %v326, %v393
      %395 = vadd.xlane.f32.xlu0 %v394
      %v396 = vpop.xlane.xlu0 %395
      %v397 = vsel %vm372, %v329, 0.0
      %v398 = vadd.f32 %v328, %v397
      %399 = vadd.xlane.f32.xlu0 %v398
      %v400 = vpop.xlane.xlu0 %399
      %v401 = vsel %vm372, %v331, 0.0
      %v402 = vadd.f32 %v330, %v401
      %403 = vadd.xlane.f32.xlu0 %v402
      %v404 = vpop.xlane.xlu0 %403
      %v405 = vsel %vm372, %v333, 0.0
      %v406 = vadd.f32 %v332, %v405
      %407 = vadd.xlane.f32.xlu0 %v406
      %v408 = vpop.xlane.xlu0 %407
      %v409 = vsel %vm372, %v335, 0.0
      %v410 = vadd.f32 %v334, %v409
      %411 = vadd.xlane.f32.xlu0 %v410
      %v412 = vpop.xlane.xlu0 %411
      %v413 = vsel %vm372, %v337, 0.0
      %v414 = vadd.f32 %v336, %v413
      %415 = vadd.xlane.f32.xlu0 %v414
      %v416 = vpop.xlane.xlu0 %415
      %v417 = vsel %vm372, %v339, 0.0
      %v418 = vadd.f32 %v338, %v417
      %419 = vadd.xlane.f32.xlu0 %v418
      %v420 = vpop.xlane.xlu0 %419
      %v421 = vsel %vm372, %v341, 0.0
      %v422 = vadd.f32 %v340, %v421
      %423 = vadd.xlane.f32.xlu0 %v422
      %v424 = vpop.xlane.xlu0 %423
      %v425 = vsel %vm372, %v343, 0.0
      %v426 = vadd.f32 %v342, %v425
      %427 = vadd.xlane.f32.xlu0 %v426
      %v428 = vpop.xlane.xlu0 %427
      %v429 = vsel %vm372, %v345, 0.0
      %v430 = vadd.f32 %v344, %v429
      %431 = vadd.xlane.f32.xlu0 %v430
      %v432 = vpop.xlane.xlu0 %431
      %v433 = vsel %vm372, %v347, 0.0
      %v434 = vadd.f32 %v346, %v433
      %435 = vadd.xlane.f32.xlu0 %v434
      %v436 = vpop.xlane.xlu0 %435
      %v437 = vsel %vm372, %v349, 0.0
      %v438 = vadd.f32 %v348, %v437
      %439 = vadd.xlane.f32.xlu0 %v438
      %v440 = vpop.xlane.xlu0 %439
      %v441 = vsel %vm372, %v351, 0.0
      %v442 = vadd.f32 %v350, %v441
      %443 = vadd.xlane.f32.xlu0 %v442
      %v444 = vpop.xlane.xlu0 %443
      %v445 = vsel %vm372, %v353, 0.0
      %v446 = vadd.f32 %v352, %v445
      %447 = vadd.xlane.f32.xlu0 %v446
      %v448 = vpop.xlane.xlu0 %447
      %v449 = vsel %vm372, %v355, 0.0
      %v450 = vadd.f32 %v354, %v449
      %451 = vadd.xlane.f32.xlu0 %v450
      %v452 = vpop.xlane.xlu0 %451
      %v453 = vsel %vm372, %v357, 0.0
      %v454 = vadd.f32 %v356, %v453
      %455 = vadd.xlane.f32.xlu0 %v454
      %v456 = vpop.xlane.xlu0 %455
      %v457 = vsel %vm372, %v359, 0.0
      %v458 = vadd.f32 %v358, %v457
      %459 = vadd.xlane.f32.xlu0 %v458
      %v460 = vpop.xlane.xlu0 %459
      %v461 = vsel %vm372, %v361, 0.0
      %v462 = vadd.f32 %v360, %v461
      %463 = vadd.xlane.f32.xlu0 %v462
      %v464 = vpop.xlane.xlu0 %463
      %v465 = vsel %vm372, %v363, 0.0
      %v466 = vadd.f32 %v362, %v465
      %467 = vadd.xlane.f32.xlu0 %v466
      %v468 = vpop.xlane.xlu0 %467
      %v469 = vsel %vm372, %v365, 0.0
      %v470 = vadd.f32 %v364, %v469
      %471 = vadd.xlane.f32.xlu0 %v470
      %v472 = vpop.xlane.xlu0 %471
      %v473 = vsel %vm372, %v367, 0.0
      %v474 = vadd.f32 %v366, %v473
      %475 = vadd.xlane.f32.xlu0 %v474
      %v476 = vpop.xlane.xlu0 %475
      %v477 = vsel %vm372, %v369, 0.0
      %v478 = vadd.f32 %v368, %v477
      %479 = vadd.xlane.f32.xlu0 %v478
      %v480 = vpop.xlane.xlu0 %479
      %v481 = vsel %vm372, %v371, 0.0
      %v482 = vadd.f32 %v370, %v481
      %483 = vadd.xlane.f32.xlu0 %v482
      %v484 = vpop.xlane.xlu0 %483
      %v513 = vlaneseq
      %v514 = vand.u32 %v513, 127
      %v515 = vperm.slane %v376, %v514
      %v516 = vadd.s32 %v514, 4294967288
      %v517 = vperm.slane %v380, %v516
      %vm518 = vcmask 130112
      %v519 = vsel %vm518, %v517, %v515
      %v520 = vadd.s32 %v514, 4294967280
      %v521 = vperm.slane %v384, %v520
      %vm522 = vcmask 195712
      %v523 = vsel %vm522, %v521, %v519
      %v524 = vadd.s32 %v514, 4294967272
      %v525 = vperm.slane %v388, %v524
      %vm526 = vcmask 261312
      %v527 = vsel %vm526, %v525, %v523
      %v528 = vperm.slane %v392, %v514
      %v529 = vperm.slane %v396, %v516
      %v530 = vsel %vm518, %v529, %v528
      %v531 = vperm.slane %v400, %v520
      %v532 = vsel %vm522, %v531, %v530
      %v533 = vperm.slane %v404, %v524
      %v534 = vsel %vm526, %v533, %v532
      %v535 = vperm.slane %v408, %v514
      %v536 = vperm.slane %v412, %v516
      %v537 = vsel %vm518, %v536, %v535
      %v538 = vperm.slane %v416, %v520
      %v539 = vsel %vm522, %v538, %v537
      %v540 = vperm.slane %v420, %v524
      %v541 = vsel %vm526, %v540, %v539
      %v542 = vperm.slane %v424, %v514
      %v543 = vperm.slane %v428, %v516
      %v544 = vsel %vm518, %v543, %v542
      %v545 = vperm.slane %v432, %v520
      %v546 = vsel %vm522, %v545, %v544
      %v547 = vperm.slane %v436, %v524
      %v548 = vsel %vm526, %v547, %v546
      %v549 = vperm.slane %v440, %v514
      %v550 = vperm.slane %v444, %v516
      %v551 = vsel %vm518, %v550, %v549
      %v552 = vperm.slane %v448, %v520
      %v553 = vsel %vm522, %v552, %v551
      %v554 = vperm.slane %v452, %v524
      %v555 = vsel %vm526, %v554, %v553
      %v556 = vperm.slane %v456, %v514
      %v557 = vperm.slane %v460, %v516
      %v558 = vsel %vm518, %v557, %v556
      %v559 = vperm.slane %v464, %v520
      %v560 = vsel %vm522, %v559, %v558
      %v561 = vperm.slane %v468, %v524
      %v562 = vsel %vm526, %v561, %v560
      %v563 = vperm.slane %v472, %v514
      %v564 = vperm.slane %v476, %v516
      %v565 = vsel %vm518, %v564, %v563
      %v566 = vperm.slane %v480, %v520
      %v567 = vsel %vm522, %v566, %v565
      %v568 = vperm.slane %v484, %v524
      %v569 = vsel %vm526, %v568, %v567
      %vm570 = vcmask 1041409
      %v571 = vsel %vm570, %v534, %v527
      %vm572 = vcmask 1042434
      %v573 = vsel %vm572, %v541, %v571
      %vm574 = vcmask 1043459
      %v575 = vsel %vm574, %v548, %v573
      %vm576 = vcmask 1044484
      %v577 = vsel %vm576, %v555, %v575
      %vm578 = vcmask 1045509
      %v579 = vsel %vm578, %v562, %v577
      %vm580 = vcmask 1046534
      %v581 = vsel %vm580, %v569, %v579
      %vm583 = vcmask 260096
      %584 = vst.msk [vmem:[%s219] sm:$0x7f] %vm583, %v581
      %p585 = scmp.lt.s32.totalorder %s17, 1
      %s586 = scalar_select %p585, %s17, 1
      %p587 = scmp.lt.s32.totalorder %s18, 0
      %s588 = scalar_select %p587, %s18, 0
      %s589 = sadd.s32 %s588, %s586
      %s590 = smul.addr %s589, 8
      %s591 = scalar_lea.vmem %s2, %s590
      // Predicated region
      $region29: #{_lambda_.3} parent=27 // pred_check
        %p592 = pneg %p101
      $region30: #{_lambda_.3} parent=27 // pred_check_branch
        %594 = sbr.rel (%p592) target = $region32
      $region31: #{_lambda_.3} parent=27 // pred_region
        _
      $region32: #{_lambda_.3} parent=27 // pred_fallthru
        _
    $region28: #{_lambda_.3} parent=5 // pred_fallthru
      _
    %p595 = scmp.le.s32.totalorder 2, %s8
    // Predicated region
    $region33: #{_lambda_.3} parent=5 // pred_check
      %p596 = pneg %p595
    $region34: #{_lambda_.3} parent=5 // pred_check_branch
      %598 = sbr.rel (%p596) target = $region36
    $region35: #{_lambda_.3} parent=5 // pred_region
      %s599 = ssub.s32 %s8, 2
      // Predicated region
      $region37: #{_lambda_.3} parent=35 // pred_check
        %p600 = pneg %p107
      $region38: #{_lambda_.3} parent=35 // pred_check_branch
        %602 = sbr.rel (%p600) target = $region40
      $region39: #{_lambda_.3} parent=35 // pred_region
        %p603 = scmp.lt.s32.totalorder %s19, 1
        %s604 = scalar_select %p603, %s19, 1
        %p605 = scmp.lt.s32.totalorder %s20, 0
        %s606 = scalar_select %p605, %s20, 0
        %s607 = sadd.s32 %s606, %s604
        %s608 = smul.addr %s607, 8
        %s609 = scalar_lea.vmem %s2, %s608
      $region40: #{_lambda_.3} parent=35 // pred_fallthru
        _
    $region36: #{_lambda_.3} parent=5 // pred_fallthru
      _
  $region6: #{_lambda_.3} parent=0 // loop_footer
    %s12 = sadd.s32 1, %s8
  $region7: #{_lambda_.3} parent=0 // loop_footer_branch
    %7 = sbr.rel target = $region3
  $region8: #{_lambda_.3} parent=0 // loop_exit
    _

</llo_original>
